<compile_context>
chip_gen: v7x
topology: tpu7x:2x2x1
jax: 0.10.0
libtpu: 0.0.40
codegen_flags: <defaults>
</compile_context>

<pallas_src>
import jax
import jax.numpy as jnp
from jax.experimental import pallas as pl
from jax.experimental.pallas import tpu as pltpu

# ---- problem geometry (fixed by the Conv1d stack) ---------------------------
OBS = 168            # observation_space_size
FEAT_DIM = 64        # feature_dim
PI_DIM = 64          # last_layer_dim_pi
VF_DIM = 64          # last_layer_dim_vf
K = 6                # conv kernel size
L1 = (OBS - K) // 6 + 1        # 28  (conv1, stride 6)
L2 = L1 - K + 1                # 23  (conv2, stride 1)
L3 = L2 - K + 1                # 18  (conv3, stride 1)
C1, C2, C3 = 5, 10, 30
EPS = 1e-5

# ---- padded (MXU / lane aligned) dims ---------------------------------------
X_P = 256            # obs 168      -> 256 lanes
D1_P = 256           # conv1 out 140 -> 256
D2_P = 256           # conv2 out 230 -> 256
D3_P = 640           # conv3 out 540 -> 640
F_P = 128            # fc out 64     -> 128
OUT_P = PI_DIM + VF_DIM          # 128: lanes [0:64) latent_pi | [64:128) latent_vf

BT = 128             # samples per grid step (M axis).  Sweep 64/128/256.

# ---- weight/bias slab layout (shared by host packing and the kernel) --------
_W_SPEC = [          # (name, slab, N)   -- every K and N is a multiple of 128
    ("w1cat", "k256", 2 * D1_P),     # fused pi|vf conv1 (shares operand x)
    ("w2p",   "k256", D2_P),
    ("w2v",   "k256", D2_P),
    ("w3p",   "k256", D3_P),
    ("w3v",   "k256", D3_P),
    ("w0bp",  "k256", 2 * FEAT_DIM),  # 128
    ("w0bv",  "k256", 4 * FEAT_DIM),  # 256
    ("wv1",   "k256", 2 * FEAT_DIM),  # 128
    ("wmid",  "k256", OUT_P),         # block-diag penultimate (pi L1 | vf L2)
    ("wfcp",  "k640", F_P),
    ("wfcv",  "k640", F_P),
    ("w0ap",  "k128", 2 * FEAT_DIM),
    ("w0av",  "k128", 4 * FEAT_DIM),
    ("wlast", "k128", OUT_P),         # block-diag last (pi L2 | vf L3)
]
_SLAB_K = {"k128": 128, "k256": 256, "k640": 640}
_B_SPEC = [
    ("b1cat", 2 * D1_P), ("b2p", D2_P), ("b2v", D2_P), ("b3p", D3_P), ("b3v", D3_P),
    ("bfcp", F_P), ("bfcv", F_P), ("b0p", 128), ("b0v", 256),
    ("bv1", 128), ("bmid", OUT_P), ("blast", OUT_P),
]


def _build_layout():
    w_layout, pos = {}, {s: 0 for s in _SLAB_K}
    for name, slab, n in _W_SPEC:
        w_layout[name] = (slab, pos[slab], n)
        pos[slab] += n
    b_layout, off = {}, 0
    for name, n in _B_SPEC:
        b_layout[name] = (off, n)
        off += n
    return w_layout, dict(pos), b_layout, off


W_LAYOUT, SLAB_N, B_LAYOUT, B_TOTAL = _build_layout()


# ---- Pallas kernel ----------------------------------------------------------
def fused_kernel(x_ref, wk128_ref, wk256_ref, wk640_ref, b_ref, out_ref):
    slabs = {"k128": wk128_ref, "k256": wk256_ref, "k640": wk640_ref}

    def w(name):
        slab, off, n = W_LAYOUT[name]
        return slabs[slab][:, off:off + n]              # (Kp, n) bf16, 128-aligned

    def b(name):
        off, n = B_LAYOUT[name]
        return b_ref[:, off:off + n]                    # (1, n) f32, 128-aligned

    def dense(h, wname, bname):                         # matmul -> +bias -> ReLU
        y = jnp.dot(h, w(wname), preferred_element_type=jnp.float32) + b(bname)
        return jnp.maximum(y, 0.0).astype(jnp.bfloat16)

    x = x_ref[...]                                      # (BT, 256) bf16 (host-cast)

    # fused layer 1: both branches consume the same x -> one (256, 512) matmul
    h1 = dense(x, "w1cat", "b1cat")                     # (BT, 512)
    hp, hv = h1[:, :D1_P], h1[:, D1_P:]                 # 128-aligned lane slices

    # Toeplitz-lowered extractor (conv2, conv3, fc) per branch
    hp = dense(hp, "w2p", "b2p")                        # (BT, 256)
    hp = dense(hp, "w3p", "b3p")                        # (BT, 640)
    ep = dense(hp, "wfcp", "bfcp")                      # (BT, 128), extracted_pi in lanes 0:64
    hv = dense(hv, "w2v", "b2v")                        # (BT, 256)
    hv = dense(hv, "w3v", "b3v")                        # (BT, 640)
    ev = dense(hv, "wfcv", "bfcv")                      # (BT, 128)

    # head layer 0: cat([extracted, raw_features]) @ W  ==  e @ W_a + x @ W_b
    zp = (jnp.dot(ep, w("w0ap"), preferred_element_type=jnp.float32)
          + jnp.dot(x, w("w0bp"), preferred_element_type=jnp.float32) + b("b0p"))
    zp = jnp.maximum(zp, 0.0).astype(jnp.bfloat16)      # (BT, 128)
    zv = (jnp.dot(ev, w("w0av"), preferred_element_type=jnp.float32)
          + jnp.dot(x, w("w0bv"), preferred_element_type=jnp.float32) + b("b0v"))
    zv = jnp.maximum(zv, 0.0).astype(jnp.bfloat16)      # (BT, 256)
    zv = dense(zv, "wv1", "bv1")                        # (BT, 128)

    # packed tail: block-diagonal penultimate + block-diagonal last layer
    z = jnp.concatenate([zp, zv], axis=-1)              # (BT, 256), 128-aligned concat
    z = dense(z, "wmid", "bmid")                        # (BT, 128): [0:64) pi, [64:128) vf
    out = jnp.dot(z, w("wlast"), preferred_element_type=jnp.float32) + b("blast")
    out_ref[...] = jnp.maximum(out, 0.0).astype(out_ref.dtype)


def run_network(features, wk128, wk256, wk640, b_slab):
    """features: (B, OBS) f32 -> (latent_pi (B, 64), latent_vf (B, 64))."""
    B = features.shape[0]
    nt = pl.cdiv(B, BT)
    bp = nt * BT
    # host-side: cast to bf16 and pad to a lane-dense (bp, 256) slab
    x = jnp.zeros((bp, X_P), jnp.bfloat16).at[:B, :OBS].set(features.astype(jnp.bfloat16))

    out = pl.pallas_call(
        fused_kernel,
        out_shape=jax.ShapeDtypeStruct((bp, OUT_P), jnp.float32),
        grid=(nt,),
        in_specs=[
            pl.BlockSpec((BT, X_P), lambda i: (i, 0)),
            pl.BlockSpec(wk128.shape, lambda i: (0, 0)),   # grid-invariant weight slabs
            pl.BlockSpec(wk256.shape, lambda i: (0, 0)),
            pl.BlockSpec(wk640.shape, lambda i: (0, 0)),
            pl.BlockSpec(b_slab.shape, lambda i: (0, 0)),
        ],
        out_specs=pl.BlockSpec((BT, OUT_P), lambda i: (i, 0)),
        compiler_params=pltpu.CompilerParams(dimension_semantics=("parallel",)),
    )(x, wk128, wk256, wk640, b_slab)
    return out[:B, :PI_DIM], out[:B, PI_DIM:]


# ---- deterministic parameter construction (synthetic, PyTorch-shaped) -------
def make_branch_params(key, head_dims):
    keys = iter(jax.random.split(key, 64))

    def u(shape, fan_in):
        bound = 1.0 / (fan_in ** 0.5)
        return jax.random.uniform(next(keys), shape, jnp.float32, -bound, bound)

    def bn(c):
        return dict(
            g=jax.random.uniform(next(keys), (c,), jnp.float32, 0.5, 1.5),
            b=0.1 * jax.random.normal(next(keys), (c,), jnp.float32),
            m=0.1 * jax.random.normal(next(keys), (c,), jnp.float32),
            v=jax.random.uniform(next(keys), (c,), jnp.float32, 0.5, 1.5),
        )

    pt = {}
    pt['c1w'] = u((C1, 1, K), 1 * K);      pt['c1b'] = u((C1,), 1 * K);      pt['bn1'] = bn(C1)
    pt['c2w'] = u((C2, C1, K), C1 * K);    pt['c2b'] = u((C2,), C1 * K);     pt['bn2'] = bn(C2)
    pt['c3w'] = u((C3, C2, K), C2 * K);    pt['c3b'] = u((C3,), C2 * K);     pt['bn3'] = bn(C3)
    pt['fcw'] = u((FEAT_DIM, C3 * L3), C3 * L3)
    pt['fcb'] = u((FEAT_DIM,), C3 * L3)
    pt['head'] = []
    for din, dout in zip(head_dims[:-1], head_dims[1:]):
        pt['head'].append((u((dout, din), din), u((dout,), din)))
    return pt


# ---- host-side lowering: fold BN, Toeplitz-lower convs, pad, pack slabs -----
def lower_branch(pt):
    f32 = jnp.float32

    def fold_bn(cw, cb, bnp):
        inv = bnp['g'] / jnp.sqrt(bnp['v'] + EPS)
        return cw * inv[:, None, None], (cb - bnp['m']) * inv + bnp['b']

    def conv_dense(wc, bc, lin, cin, stride):
        # dense matrix of a Conv1d on a position-major-flattened input (identity trick)
        din = lin * cin
        eye = jnp.eye(din, dtype=f32).reshape(din, lin, cin).transpose(0, 2, 1)
        out = jax.lax.conv_general_dilated(
            eye, wc, (stride,), 'VALID', dimension_numbers=('NCH', 'OIH', 'NCH'))
        cout, lout = out.shape[1], out.shape[2]
        wd = out.transpose(0, 2, 1).reshape(din, lout * cout)
        bd = jnp.broadcast_to(bc[None, :], (lout, cout)).reshape(-1)
        return wd, bd

    w1, b1 = fold_bn(pt['c1w'], pt['c1b'], pt['bn1'])
    w2, b2 = fold_bn(pt['c2w'], pt['c2b'], pt['bn2'])
    w3, b3 = fold_bn(pt['c3w'], pt['c3b'], pt['bn3'])
    W1, B1 = conv_dense(w1, b1, OBS, 1, 6)          # (168, 140)
    W2, B2 = conv_dense(w2, b2, L1, C1, 1)          # (140, 230)
    W3, B3 = conv_dense(w3, b3, L2, C2, 1)          # (230, 540)
    # PyTorch Flatten of (C3, L3) is channel-major; kernel activations are position-major.
    Wfc = jnp.transpose(pt['fcw'].reshape(FEAT_DIM, C3, L3), (2, 1, 0)).reshape(C3 * L3, FEAT_DIM)
    Bfc = pt['fcb']
    w0, b0 = pt['head'][0]
    w0t = w0.T                                      # (FEAT+OBS, n0)
    rest = [(wl.T, bl) for wl, bl in pt['head'][1:]]
    return dict(W1=W1, B1=B1, W2=W2, B2=B2, W3=W3, B3=B3, Wfc=Wfc, Bfc=Bfc,
                W0a=w0t[:FEAT_DIM], W0b=w0t[FEAT_DIM:], B0=b0, rest=rest)


def pack_params(pt_pi, pt_vf):
    """PyTorch-shaped params -> (wk128, wk256, wk640 bf16 slabs, bias f32 slab)."""
    p, v = lower_branch(pt_pi), lower_branch(pt_vf)
    f32 = jnp.float32

    def pad_w(m, kp, np_):
        k, n = m.shape
        return jnp.pad(m.astype(f32), ((0, kp - k), (0, np_ - n)))

    def pad_b(bv, np_):
        return jnp.pad(bv.astype(f32), (0, np_ - bv.shape[0]))

    mats, bias = {}, {}
    mats["w1cat"] = jnp.concatenate([pad_w(p["W1"], X_P, D1_P), pad_w(v["W1"], X_P, D1_P)], axis=1)
    bias["b1cat"] = jnp.concatenate([pad_b(p["B1"], D1_P), pad_b(v["B1"], D1_P)])
    mats["w2p"], bias["b2p"] = pad_w(p["W2"], D1_P, D2_P), pad_b(p["B2"], D2_P)
    mats["w2v"], bias["b2v"] = pad_w(v["W2"], D1_P, D2_P), pad_b(v["B2"], D2_P)
    mats["w3p"], bias["b3p"] = pad_w(p["W3"], D2_P, D3_P), pad_b(p["B3"], D3_P)
    mats["w3v"], bias["b3v"] = pad_w(v["W3"], D2_P, D3_P), pad_b(v["B3"], D3_P)
    mats["wfcp"], bias["bfcp"] = pad_w(p["Wfc"], D3_P, F_P), pad_b(p["Bfc"], F_P)
    mats["wfcv"], bias["bfcv"] = pad_w(v["Wfc"], D3_P, F_P), pad_b(v["Bfc"], F_P)
    n0p, n0v = 2 * FEAT_DIM, 4 * FEAT_DIM
    mats["w0ap"], mats["w0bp"] = pad_w(p["W0a"], F_P, n0p), pad_w(p["W0b"], X_P, n0p)
    bias["b0p"] = pad_b(p["B0"], n0p)
    mats["w0av"], mats["w0bv"] = pad_w(v["W0a"], F_P, n0v), pad_w(v["W0b"], X_P, n0v)
    bias["b0v"] = pad_b(v["B0"], n0v)
    wv1, bv1 = v["rest"][0]                                   # vf Linear(256,128)
    mats["wv1"], bias["bv1"] = pad_w(wv1, 256, 128), pad_b(bv1, 128)
    # block-diag penultimate: pi Linear(128,64) | vf Linear(128,64)
    wp1, bp1 = p["rest"][0]
    wv2, bv2 = v["rest"][1]
    mats["wmid"] = jnp.zeros((256, OUT_P), f32).at[:128, :PI_DIM].set(wp1).at[128:, PI_DIM:].set(wv2)
    bias["bmid"] = jnp.concatenate([bp1, bv2]).astype(f32)
    # block-diag last: pi Linear(64,64) | vf Linear(64,64)
    wp2, bp2 = p["rest"][1]
    wv3, bv3 = v["rest"][2]
    mats["wlast"] = jnp.zeros((128, OUT_P), f32).at[:64, :PI_DIM].set(wp2).at[64:, PI_DIM:].set(wv3)
    bias["blast"] = jnp.concatenate([bp2, bv3]).astype(f32)

    slabs = {}
    for s, kk in _SLAB_K.items():
        cols = [mats[name] for name, slab, _ in _W_SPEC if slab == s]
        slab = jnp.concatenate(cols, axis=1).astype(jnp.bfloat16)
        assert slab.shape == (kk, SLAB_N[s]), (s, slab.shape)
        slabs[s] = slab
    b_slab = jnp.concatenate([bias[name] for name, _ in _B_SPEC])[None, :].astype(f32)
    assert b_slab.shape == (1, B_TOTAL)
    return slabs["k128"], slabs["k256"], slabs["k640"], b_slab


# ---- pure-JAX reference (mirrors the PyTorch forward, eval-mode BN) ---------
def ref_branch(features, pt):
    dn = ('NCH', 'OIH', 'NCH')

    def bn(h, p):
        return ((h - p['m'][None, :, None])
                * (p['g'][None, :, None] / jnp.sqrt(p['v'][None, :, None] + EPS))
                + p['b'][None, :, None])

    x = features[:, None, :]
    h = jax.lax.conv_general_dilated(x, pt['c1w'], (6,), 'VALID', dimension_numbers=dn)
    h = jnp.maximum(bn(h + pt['c1b'][None, :, None], pt['bn1']), 0.0)
    h = jax.lax.conv_general_dilated(h, pt['c2w'], (1,), 'VALID', dimension_numbers=dn)
    h = jnp.maximum(bn(h + pt['c2b'][None, :, None], pt['bn2']), 0.0)
    h = jax.lax.conv_general_dilated(h, pt['c3w'], (1,), 'VALID', dimension_numbers=dn)
    h = jnp.maximum(bn(h + pt['c3b'][None, :, None], pt['bn3']), 0.0)
    flat = h.reshape(features.shape[0], -1)                   # (B, 540), channel-major
    z = jnp.maximum(flat @ pt['fcw'].T + pt['fcb'], 0.0)
    z = jnp.concatenate([z, features], axis=1)
    for wl, bl in pt['head']:
        z = jnp.maximum(z @ wl.T + bl, 0.0)
    return z


# ---- main -------------------------------------------------------------------
if __name__ == "__main__":
    key = jax.random.PRNGKey(0)
    k_feat, k_pi, k_vf = jax.random.split(key, 3)

    BATCH = 4
    features = jax.random.uniform(k_feat, (BATCH, OBS), jnp.float32)

    dims_pi = [FEAT_DIM + OBS, 2 * FEAT_DIM, FEAT_DIM, PI_DIM]                 # policy_net
    dims_vf = [FEAT_DIM + OBS, 4 * FEAT_DIM, 2 * FEAT_DIM, FEAT_DIM, VF_DIM]   # value_net
    pt_pi = make_branch_params(k_pi, dims_pi)
    pt_vf = make_branch_params(k_vf, dims_vf)

    wk128, wk256, wk640, b_slab = pack_params(pt_pi, pt_vf)

    latent_pi, latent_vf = run_network(features, wk128, wk256, wk640, b_slab)
    latent_pi, latent_vf = jax.block_until_ready((latent_pi, latent_vf))

    assert latent_pi.shape == (BATCH, PI_DIM)
    assert latent_vf.shape == (BATCH, VF_DIM)

    ref_pi = ref_branch(features, pt_pi)
    ref_vf = ref_branch(features, pt_vf)
    err_pi = float(jnp.max(jnp.abs(latent_pi - ref_pi)))
    err_vf = float(jnp.max(jnp.abs(latent_vf - ref_vf)))
    # bf16 matmul operands across a ~10-layer chain with f32 accumulation
    assert bool(jnp.allclose(latent_pi, ref_pi, rtol=5e-2, atol=5e-2)), f"policy mismatch: {err_pi}"
    assert bool(jnp.allclose(latent_vf, ref_vf, rtol=5e-2, atol=5e-2)), f"value mismatch: {err_vf}"

    print("KERNEL_OK")
</pallas_src>

<mosaic_0001>
module attributes {stable_mosaic.version = 11 : i64} {
  func.func @fused_kernel(%arg0: i32, %arg1: memref<128x256xbf16, #tpu.memory_space<vmem>>, %arg2: memref<128x512xbf16, #tpu.memory_space<vmem>>, %arg3: memref<256x2944xbf16, #tpu.memory_space<vmem>>, %arg4: memref<640x256xbf16, #tpu.memory_space<vmem>>, %arg5: memref<1x3328xf32, #tpu.memory_space<vmem>>, %arg6: memref<128x128xf32, #tpu.memory_space<vmem>>) attributes {dimension_semantics = [#tpu.dimension_semantics<parallel>], iteration_bounds = array<i64: 1>, scalar_prefetch = 0 : i64, scratch_operands = 0 : i64, tpu.core_type = #tpu.core_type<tc>, window_params = [{transform_indices = @transform_0, window_bounds = array<i64: 128, 256>}, {pipeline_mode = #tpu.pipeline_mode<synchronous>, transform_indices = @transform_1, window_bounds = array<i64: 128, 512>}, {pipeline_mode = #tpu.pipeline_mode<synchronous>, transform_indices = @transform_2, window_bounds = array<i64: 256, 2944>}, {pipeline_mode = #tpu.pipeline_mode<synchronous>, transform_indices = @transform_3, window_bounds = array<i64: 640, 256>}, {pipeline_mode = #tpu.pipeline_mode<synchronous>, transform_indices = @transform_4, window_bounds = array<i64: 1, 3328>}, {transform_indices = @transform_5, window_bounds = array<i64: 128, 128>}]} {
    %c0 = arith.constant 0 : index
    %c0_0 = arith.constant 0 : index
    %0 = vector.load %arg1[%c0, %c0_0] : memref<128x256xbf16, #tpu.memory_space<vmem>>, vector<128x256xbf16>
    %c0_1 = arith.constant 0 : index
    %c0_2 = arith.constant 0 : index
    %1 = vector.load %arg3[%c0_1, %c0_2] : memref<256x2944xbf16, #tpu.memory_space<vmem>>, vector<256x512xbf16>
    %cst = arith.constant dense<0.000000e+00> : vector<128x512xf32>
    %2 = tpu.matmul %0, %1, %cst {dimension_numbers = #tpu.dot_dimension_numbers<[1], [0], [0], [1], [0, 0, 1, 1], [], []>} : vector<128x256xbf16>, vector<256x512xbf16>, vector<128x512xf32> -> vector<128x512xf32>
    %c0_3 = arith.constant 0 : index
    %c0_4 = arith.constant 0 : index
    %3 = vector.load %arg5[%c0_3, %c0_4] : memref<1x3328xf32, #tpu.memory_space<vmem>>, vector<1x512xf32>
    %4 = vector.broadcast %3 : vector<1x512xf32> to vector<128x512xf32>
    %5 = arith.addf %2, %4 : vector<128x512xf32>
    %cst_5 = arith.constant 0.000000e+00 : f32
    %6 = vector.broadcast %cst_5 : f32 to vector<128x512xf32>
    %7 = arith.maximumf %5, %6 : vector<128x512xf32>
    %8 = arith.truncf %7 : vector<128x512xf32> to vector<128x512xbf16>
    %9 = vector.extract_strided_slice %8 {offsets = [0, 0], sizes = [128, 256], strides = [1, 1]} : vector<128x512xbf16> to vector<128x256xbf16>
    %10 = vector.extract_strided_slice %8 {offsets = [0, 256], sizes = [128, 256], strides = [1, 1]} : vector<128x512xbf16> to vector<128x256xbf16>
    %c0_6 = arith.constant 0 : index
    %c512 = arith.constant 512 : index
    %11 = vector.load %arg3[%c0_6, %c512] : memref<256x2944xbf16, #tpu.memory_space<vmem>>, vector<256x256xbf16>
    %cst_7 = arith.constant dense<0.000000e+00> : vector<128x256xf32>
    %12 = tpu.matmul %9, %11, %cst_7 {dimension_numbers = #tpu.dot_dimension_numbers<[1], [0], [0], [1], [0, 0, 1, 1], [], []>} : vector<128x256xbf16>, vector<256x256xbf16>, vector<128x256xf32> -> vector<128x256xf32>
    %c0_8 = arith.constant 0 : index
    %c512_9 = arith.constant 512 : index
    %13 = vector.load %arg5[%c0_8, %c512_9] : memref<1x3328xf32, #tpu.memory_space<vmem>>, vector<1x256xf32>
    %14 = vector.broadcast %13 : vector<1x256xf32> to vector<128x256xf32>
    %15 = arith.addf %12, %14 : vector<128x256xf32>
    %cst_10 = arith.constant 0.000000e+00 : f32
    %16 = vector.broadcast %cst_10 : f32 to vector<128x256xf32>
    %17 = arith.maximumf %15, %16 : vector<128x256xf32>
    %18 = arith.truncf %17 : vector<128x256xf32> to vector<128x256xbf16>
    %c0_11 = arith.constant 0 : index
    %c1024 = arith.constant 1024 : index
    %19 = vector.load %arg3[%c0_11, %c1024] : memref<256x2944xbf16, #tpu.memory_space<vmem>>, vector<256x640xbf16>
    %cst_12 = arith.constant dense<0.000000e+00> : vector<128x640xf32>
    %20 = tpu.matmul %18, %19, %cst_12 {dimension_numbers = #tpu.dot_dimension_numbers<[1], [0], [0], [1], [0, 0, 1, 1], [], []>} : vector<128x256xbf16>, vector<256x640xbf16>, vector<128x640xf32> -> vector<128x640xf32>
    %c0_13 = arith.constant 0 : index
    %c1024_14 = arith.constant 1024 : index
    %21 = vector.load %arg5[%c0_13, %c1024_14] : memref<1x3328xf32, #tpu.memory_space<vmem>>, vector<1x640xf32>
    %22 = vector.broadcast %21 : vector<1x640xf32> to vector<128x640xf32>
    %23 = arith.addf %20, %22 : vector<128x640xf32>
    %cst_15 = arith.constant 0.000000e+00 : f32
    %24 = vector.broadcast %cst_15 : f32 to vector<128x640xf32>
    %25 = arith.maximumf %23, %24 : vector<128x640xf32>
    %26 = arith.truncf %25 : vector<128x640xf32> to vector<128x640xbf16>
    %c0_16 = arith.constant 0 : index
    %c0_17 = arith.constant 0 : index
    %27 = vector.load %arg4[%c0_16, %c0_17] : memref<640x256xbf16, #tpu.memory_space<vmem>>, vector<640x128xbf16>
    %cst_18 = arith.constant dense<0.000000e+00> : vector<128x128xf32>
    %28 = tpu.matmul %26, %27, %cst_18 {dimension_numbers = #tpu.dot_dimension_numbers<[1], [0], [0], [1], [0, 0, 1, 1], [], []>} : vector<128x640xbf16>, vector<640x128xbf16>, vector<128x128xf32> -> vector<128x128xf32>
    %c0_19 = arith.constant 0 : index
    %c2304 = arith.constant 2304 : index
    %29 = vector.load %arg5[%c0_19, %c2304] : memref<1x3328xf32, #tpu.memory_space<vmem>>, vector<1x128xf32>
    %30 = vector.broadcast %29 : vector<1x128xf32> to vector<128x128xf32>
    %31 = arith.addf %28, %30 : vector<128x128xf32>
    %cst_20 = arith.constant 0.000000e+00 : f32
    %32 = vector.broadcast %cst_20 : f32 to vector<128x128xf32>
    %33 = arith.maximumf %31, %32 : vector<128x128xf32>
    %34 = arith.truncf %33 : vector<128x128xf32> to vector<128x128xbf16>
    %c0_21 = arith.constant 0 : index
    %c768 = arith.constant 768 : index
    %35 = vector.load %arg3[%c0_21, %c768] : memref<256x2944xbf16, #tpu.memory_space<vmem>>, vector<256x256xbf16>
    %cst_22 = arith.constant dense<0.000000e+00> : vector<128x256xf32>
    %36 = tpu.matmul %10, %35, %cst_22 {dimension_numbers = #tpu.dot_dimension_numbers<[1], [0], [0], [1], [0, 0, 1, 1], [], []>} : vector<128x256xbf16>, vector<256x256xbf16>, vector<128x256xf32> -> vector<128x256xf32>
    %c0_23 = arith.constant 0 : index
    %c768_24 = arith.constant 768 : index
    %37 = vector.load %arg5[%c0_23, %c768_24] : memref<1x3328xf32, #tpu.memory_space<vmem>>, vector<1x256xf32>
    %38 = vector.broadcast %37 : vector<1x256xf32> to vector<128x256xf32>
    %39 = arith.addf %36, %38 : vector<128x256xf32>
    %cst_25 = arith.constant 0.000000e+00 : f32
    %40 = vector.broadcast %cst_25 : f32 to vector<128x256xf32>
    %41 = arith.maximumf %39, %40 : vector<128x256xf32>
    %42 = arith.truncf %41 : vector<128x256xf32> to vector<128x256xbf16>
    %c0_26 = arith.constant 0 : index
    %c1664 = arith.constant 1664 : index
    %43 = vector.load %arg3[%c0_26, %c1664] : memref<256x2944xbf16, #tpu.memory_space<vmem>>, vector<256x640xbf16>
    %cst_27 = arith.constant dense<0.000000e+00> : vector<128x640xf32>
    %44 = tpu.matmul %42, %43, %cst_27 {dimension_numbers = #tpu.dot_dimension_numbers<[1], [0], [0], [1], [0, 0, 1, 1], [], []>} : vector<128x256xbf16>, vector<256x640xbf16>, vector<128x640xf32> -> vector<128x640xf32>
    %c0_28 = arith.constant 0 : index
    %c1664_29 = arith.constant 1664 : index
    %45 = vector.load %arg5[%c0_28, %c1664_29] : memref<1x3328xf32, #tpu.memory_space<vmem>>, vector<1x640xf32>
    %46 = vector.broadcast %45 : vector<1x640xf32> to vector<128x640xf32>
    %47 = arith.addf %44, %46 : vector<128x640xf32>
    %cst_30 = arith.constant 0.000000e+00 : f32
    %48 = vector.broadcast %cst_30 : f32 to vector<128x640xf32>
    %49 = arith.maximumf %47, %48 : vector<128x640xf32>
    %50 = arith.truncf %49 : vector<128x640xf32> to vector<128x640xbf16>
    %c0_31 = arith.constant 0 : index
    %c128 = arith.constant 128 : index
    %51 = vector.load %arg4[%c0_31, %c128] : memref<640x256xbf16, #tpu.memory_space<vmem>>, vector<640x128xbf16>
    %cst_32 = arith.constant dense<0.000000e+00> : vector<128x128xf32>
    %52 = tpu.matmul %50, %51, %cst_32 {dimension_numbers = #tpu.dot_dimension_numbers<[1], [0], [0], [1], [0, 0, 1, 1], [], []>} : vector<128x640xbf16>, vector<640x128xbf16>, vector<128x128xf32> -> vector<128x128xf32>
    %c0_33 = arith.constant 0 : index
    %c2432 = arith.constant 2432 : index
    %53 = vector.load %arg5[%c0_33, %c2432] : memref<1x3328xf32, #tpu.memory_space<vmem>>, vector<1x128xf32>
    %54 = vector.broadcast %53 : vector<1x128xf32> to vector<128x128xf32>
    %55 = arith.addf %52, %54 : vector<128x128xf32>
    %cst_34 = arith.constant 0.000000e+00 : f32
    %56 = vector.broadcast %cst_34 : f32 to vector<128x128xf32>
    %57 = arith.maximumf %55, %56 : vector<128x128xf32>
    %58 = arith.truncf %57 : vector<128x128xf32> to vector<128x128xbf16>
    %c0_35 = arith.constant 0 : index
    %c0_36 = arith.constant 0 : index
    %59 = vector.load %arg2[%c0_35, %c0_36] : memref<128x512xbf16, #tpu.memory_space<vmem>>, vector<128x128xbf16>
    %cst_37 = arith.constant dense<0.000000e+00> : vector<128x128xf32>
    %60 = tpu.matmul %34, %59, %cst_37 {dimension_numbers = #tpu.dot_dimension_numbers<[1], [0], [0], [1], [0, 0, 1, 1], [], []>} : vector<128x128xbf16>, vector<128x128xbf16>, vector<128x128xf32> -> vector<128x128xf32>
    %c0_38 = arith.constant 0 : index
    %c2304_39 = arith.constant 2304 : index
    %61 = vector.load %arg3[%c0_38, %c2304_39] : memref<256x2944xbf16, #tpu.memory_space<vmem>>, vector<256x128xbf16>
    %cst_40 = arith.constant dense<0.000000e+00> : vector<128x128xf32>
    %62 = tpu.matmul %0, %61, %cst_40 {dimension_numbers = #tpu.dot_dimension_numbers<[1], [0], [0], [1], [0, 0, 1, 1], [], []>} : vector<128x256xbf16>, vector<256x128xbf16>, vector<128x128xf32> -> vector<128x128xf32>
    %63 = arith.addf %60, %62 : vector<128x128xf32>
    %c0_41 = arith.constant 0 : index
    %c2560 = arith.constant 2560 : index
    %64 = vector.load %arg5[%c0_41, %c2560] : memref<1x3328xf32, #tpu.memory_space<vmem>>, vector<1x128xf32>
    %65 = vector.broadcast %64 : vector<1x128xf32> to vector<128x128xf32>
    %66 = arith.addf %63, %65 : vector<128x128xf32>
    %cst_42 = arith.constant 0.000000e+00 : f32
    %67 = vector.broadcast %cst_42 : f32 to vector<128x128xf32>
    %68 = arith.maximumf %66, %67 : vector<128x128xf32>
    %69 = arith.truncf %68 : vector<128x128xf32> to vector<128x128xbf16>
    %c0_43 = arith.constant 0 : index
    %c128_44 = arith.constant 128 : index
    %70 = vector.load %arg2[%c0_43, %c128_44] : memref<128x512xbf16, #tpu.memory_space<vmem>>, vector<128x256xbf16>
    %cst_45 = arith.constant dense<0.000000e+00> : vector<128x256xf32>
    %71 = tpu.matmul %58, %70, %cst_45 {dimension_numbers = #tpu.dot_dimension_numbers<[1], [0], [0], [1], [0, 0, 1, 1], [], []>} : vector<128x128xbf16>, vector<128x256xbf16>, vector<128x256xf32> -> vector<128x256xf32>
    %c0_46 = arith.constant 0 : index
    %c2432_47 = arith.constant 2432 : index
    %72 = vector.load %arg3[%c0_46, %c2432_47] : memref<256x2944xbf16, #tpu.memory_space<vmem>>, vector<256x256xbf16>
    %cst_48 = arith.constant dense<0.000000e+00> : vector<128x256xf32>
    %73 = tpu.matmul %0, %72, %cst_48 {dimension_numbers = #tpu.dot_dimension_numbers<[1], [0], [0], [1], [0, 0, 1, 1], [], []>} : vector<128x256xbf16>, vector<256x256xbf16>, vector<128x256xf32> -> vector<128x256xf32>
    %74 = arith.addf %71, %73 : vector<128x256xf32>
    %c0_49 = arith.constant 0 : index
    %c2688 = arith.constant 2688 : index
    %75 = vector.load %arg5[%c0_49, %c2688] : memref<1x3328xf32, #tpu.memory_space<vmem>>, vector<1x256xf32>
    %76 = vector.broadcast %75 : vector<1x256xf32> to vector<128x256xf32>
    %77 = arith.addf %74, %76 : vector<128x256xf32>
    %cst_50 = arith.constant 0.000000e+00 : f32
    %78 = vector.broadcast %cst_50 : f32 to vector<128x256xf32>
    %79 = arith.maximumf %77, %78 : vector<128x256xf32>
    %80 = arith.truncf %79 : vector<128x256xf32> to vector<128x256xbf16>
    %c0_51 = arith.constant 0 : index
    %c2688_52 = arith.constant 2688 : index
    %81 = vector.load %arg3[%c0_51, %c2688_52] : memref<256x2944xbf16, #tpu.memory_space<vmem>>, vector<256x128xbf16>
    %cst_53 = arith.constant dense<0.000000e+00> : vector<128x128xf32>
    %82 = tpu.matmul %80, %81, %cst_53 {dimension_numbers = #tpu.dot_dimension_numbers<[1], [0], [0], [1], [0, 0, 1, 1], [], []>} : vector<128x256xbf16>, vector<256x128xbf16>, vector<128x128xf32> -> vector<128x128xf32>
    %c0_54 = arith.constant 0 : index
    %c2944 = arith.constant 2944 : index
    %83 = vector.load %arg5[%c0_54, %c2944] : memref<1x3328xf32, #tpu.memory_space<vmem>>, vector<1x128xf32>
    %84 = vector.broadcast %83 : vector<1x128xf32> to vector<128x128xf32>
    %85 = arith.addf %82, %84 : vector<128x128xf32>
    %cst_55 = arith.constant 0.000000e+00 : f32
    %86 = vector.broadcast %cst_55 : f32 to vector<128x128xf32>
    %87 = arith.maximumf %85, %86 : vector<128x128xf32>
    %88 = arith.truncf %87 : vector<128x128xf32> to vector<128x128xbf16>
    %89 = tpu.concatenate %69, %88 in 1 : vector<128x128xbf16>, vector<128x128xbf16> -> vector<128x256xbf16>
    %c0_56 = arith.constant 0 : index
    %c2816 = arith.constant 2816 : index
    %90 = vector.load %arg3[%c0_56, %c2816] : memref<256x2944xbf16, #tpu.memory_space<vmem>>, vector<256x128xbf16>
    %cst_57 = arith.constant dense<0.000000e+00> : vector<128x128xf32>
    %91 = tpu.matmul %89, %90, %cst_57 {dimension_numbers = #tpu.dot_dimension_numbers<[1], [0], [0], [1], [0, 0, 1, 1], [], []>} : vector<128x256xbf16>, vector<256x128xbf16>, vector<128x128xf32> -> vector<128x128xf32>
    %c0_58 = arith.constant 0 : index
    %c3072 = arith.constant 3072 : index
    %92 = vector.load %arg5[%c0_58, %c3072] : memref<1x3328xf32, #tpu.memory_space<vmem>>, vector<1x128xf32>
    %93 = vector.broadcast %92 : vector<1x128xf32> to vector<128x128xf32>
    %94 = arith.addf %91, %93 : vector<128x128xf32>
    %cst_59 = arith.constant 0.000000e+00 : f32
    %95 = vector.broadcast %cst_59 : f32 to vector<128x128xf32>
    %96 = arith.maximumf %94, %95 : vector<128x128xf32>
    %97 = arith.truncf %96 : vector<128x128xf32> to vector<128x128xbf16>
    %c0_60 = arith.constant 0 : index
    %c384 = arith.constant 384 : index
    %98 = vector.load %arg2[%c0_60, %c384] : memref<128x512xbf16, #tpu.memory_space<vmem>>, vector<128x128xbf16>
    %cst_61 = arith.constant dense<0.000000e+00> : vector<128x128xf32>
    %99 = tpu.matmul %97, %98, %cst_61 {dimension_numbers = #tpu.dot_dimension_numbers<[1], [0], [0], [1], [0, 0, 1, 1], [], []>} : vector<128x128xbf16>, vector<128x128xbf16>, vector<128x128xf32> -> vector<128x128xf32>
    %c0_62 = arith.constant 0 : index
    %c3200 = arith.constant 3200 : index
    %100 = vector.load %arg5[%c0_62, %c3200] : memref<1x3328xf32, #tpu.memory_space<vmem>>, vector<1x128xf32>
    %101 = vector.broadcast %100 : vector<1x128xf32> to vector<128x128xf32>
    %102 = arith.addf %99, %101 : vector<128x128xf32>
    %cst_63 = arith.constant 0.000000e+00 : f32
    %103 = vector.broadcast %cst_63 : f32 to vector<128x128xf32>
    %104 = arith.maximumf %102, %103 : vector<128x128xf32>
    %c0_64 = arith.constant 0 : index
    %c0_65 = arith.constant 0 : index
    %105 = vector.load %arg6[%c0_64, %c0_65] : memref<128x128xf32, #tpu.memory_space<vmem>>, vector<128x128xf32>
    tpu.vector_store %arg6[%c0_64, %c0_65], %104 {strides = array<i32>} : memref<128x128xf32, #tpu.memory_space<vmem>>, vector<128x128xf32>,
    return
  }
  func.func @transform_0(%arg0: i32) -> (i32, i32) {
    %c0_i32 = arith.constant 0 : i32
    %c0_i32_0 = arith.constant 0 : i32
    return %arg0, %c0_i32 : i32, i32
  }
  func.func @transform_1(%arg0: i32) -> (i32, i32) {
    %c0_i32 = arith.constant 0 : i32
    %c0_i32_0 = arith.constant 0 : i32
    %c0_i32_1 = arith.constant 0 : i32
    return %c0_i32, %c0_i32_0 : i32, i32
  }
  func.func @transform_2(%arg0: i32) -> (i32, i32) {
    %c0_i32 = arith.constant 0 : i32
    %c0_i32_0 = arith.constant 0 : i32
    %c0_i32_1 = arith.constant 0 : i32
    return %c0_i32, %c0_i32_0 : i32, i32
  }
  func.func @transform_3(%arg0: i32) -> (i32, i32) {
    %c0_i32 = arith.constant 0 : i32
    %c0_i32_0 = arith.constant 0 : i32
    %c0_i32_1 = arith.constant 0 : i32
    return %c0_i32, %c0_i32_0 : i32, i32
  }
  func.func @transform_4(%arg0: i32) -> (i32, i32) {
    %c0_i32 = arith.constant 0 : i32
    %c0_i32_0 = arith.constant 0 : i32
    %c0_i32_1 = arith.constant 0 : i32
    return %c0_i32, %c0_i32_0 : i32, i32
  }
  func.func @transform_5(%arg0: i32) -> (i32, i32) {
    %c0_i32 = arith.constant 0 : i32
    %c0_i32_0 = arith.constant 0 : i32
    return %arg0, %c0_i32 : i32, i32
  }
}

</mosaic_0001>

<llo_original>
// kernel: tpu_custom_call.1
$region0: #{tpu_custom_call.1}
  #allocation0 [shape = 'u32[]', space=smem, size = 0x4, offset = 0x4, fixed_abs, tag = 'smem constant byte address 0x4 - core index']
  #allocation1 [shape = 'u32[144,128]{1,0:T(1,128)}', space=vmem, size = 0x12000, scoped, tag = 'internal scratch']
  %s0 = inlined_call_operand.hbm [shape: bf16[128,256], index: 0, kind: input, shape index: {}]
  %s1 = inlined_call_operand.hbm [shape: bf16[128,512], index: 1, kind: input, shape index: {}]
  %s2 = inlined_call_operand.hbm [shape: bf16[256,2944], index: 2, kind: input, shape index: {}]
  %s3 = inlined_call_operand.hbm [shape: bf16[640,256], index: 3, kind: input, shape index: {}]
  %s4 = inlined_call_operand.hbm [shape: f32[1,3328], index: 4, kind: input, shape index: {}]
  %s5 = inlined_call_operand.hbm [shape: f32[128,128], index: 5, kind: output, shape index: {}]
  %s6 = sld [smem:[#allocation0]]
  $region50: #{tpu_custom_call.1} parent=0
    _
  %s8 = ssub.s32 1, %s6
  %s9 = scalar_select 0, %s8, %s6
  $region1: #{tpu_custom_call.1} parent=0
    #allocation2 [shape = 'u8[65536]{0}', space=vmem, size = 0x10000, scoped, tag = 'input window, operand 0, single buffered']
    #allocation3 [shape = 's32[1]{0}', space=sflag, size = 0x4, scoped, tag = 'scoped memory for tpu_custom_call.1']
    #allocation4 [shape = 's32[1]{0}', space=sflag, size = 0x4, scoped, tag = 'scoped memory for tpu_custom_call.1']
    #allocation5 [shape = 'u8[131072]{0}', space=vmem, size = 0x20000, scoped, tag = 'input window, operand 1, single buffered']
    #allocation6 [shape = 's32[1]{0}', space=sflag, size = 0x4, scoped, tag = 'scoped memory for tpu_custom_call.1']
    #allocation7 [shape = 'u8[1507328]{0}', space=vmem, size = 0x170000, scoped, tag = 'input window, operand 2, single buffered']
    #allocation8 [shape = 'u8[327680]{0}', space=vmem, size = 0x50000, scoped, tag = 'input window, operand 3, single buffered']
    #allocation9 [shape = 's32[1]{0}', space=sflag, size = 0x4, scoped, tag = 'scoped memory for tpu_custom_call.1']
    #allocation10 [shape = 'u8[13312]{0}', space=vmem, size = 0x3400, scoped, tag = 'input window, operand 4, single buffered']
    #allocation11 [shape = 'u8[65536]{0}', space=vmem, size = 0x10000, scoped, tag = 'output window, operand 0, single buffered']
    %10 = vsyncpa [#allocation3], 0
    %11 = vsyncpa [#allocation6], 0
    %12 = vsyncpa [#allocation9], 0
    %13 = vsyncpa [#allocation4], 0
    // Predicated region
    $region2: #{tpu_custom_call.1} parent=1 // pred_check
      _
    $region3: #{tpu_custom_call.1} parent=1 // pred_check_branch
      %15 = sbr.rel (0) target = $region5
    $region4: #{tpu_custom_call.1} parent=1 // pred_region
      %s17 = ssub.s32 2048, 2048
      %18 = vsyncadd [#allocation3], %s17
      %s19 = sshll.u32 [#allocation2], 4
      %s20 = int_to_ptr.vmem [resolvable:$true] %s19
      %25 = dma.hbm_to_vmem [thread:$0]  %s0, 2048, %s20, [#allocation3], 128, 128, 8
    $region5: #{tpu_custom_call.1} parent=1 // pred_fallthru
      _
    // Predicated region
    $region6: #{tpu_custom_call.1} parent=1 // pred_check
      _
    $region7: #{tpu_custom_call.1} parent=1 // pred_check_branch
      %27 = sbr.rel (0) target = $region9
    $region8: #{tpu_custom_call.1} parent=1 // pred_region
      %s29 = ssub.s32 4096, 4096
      %30 = vsyncadd [#allocation6], %s29
      %s31 = sshll.u32 [#allocation5], 4
      %s32 = int_to_ptr.vmem [resolvable:$true] %s31
      %37 = dma.hbm_to_vmem [thread:$0]  %s1, 4096, %s32, [#allocation6], 256, 256, 16
    $region9: #{tpu_custom_call.1} parent=1 // pred_fallthru
      _
    // Predicated region
    $region10: #{tpu_custom_call.1} parent=1 // pred_check
      _
    $region11: #{tpu_custom_call.1} parent=1 // pred_check_branch
      %39 = sbr.rel (0) target = $region13
    $region12: #{tpu_custom_call.1} parent=1 // pred_region
      %s41 = ssub.s32 47104, 47104
      %42 = vsyncadd [#allocation6], %s41
      %s43 = sshll.u32 [#allocation7], 4
      %s44 = int_to_ptr.vmem [resolvable:$true] %s43
      %49 = dma.hbm_to_vmem [thread:$0]  %s2, 47104, %s44, [#allocation6], 1472, 1472, 92
    $region13: #{tpu_custom_call.1} parent=1 // pred_fallthru
      _
    // Predicated region
    $region14: #{tpu_custom_call.1} parent=1 // pred_check
      _
    $region15: #{tpu_custom_call.1} parent=1 // pred_check_branch
      %51 = sbr.rel (0) target = $region17
    $region16: #{tpu_custom_call.1} parent=1 // pred_region
      %s53 = ssub.s32 10240, 10240
      %54 = vsyncadd [#allocation9], %s53
      %s55 = sshll.u32 [#allocation8], 4
      %s56 = int_to_ptr.vmem [resolvable:$true] %s55
      %61 = dma.hbm_to_vmem [thread:$0]  %s3, 10240, %s56, [#allocation9], 128, 128, 8
    $region17: #{tpu_custom_call.1} parent=1 // pred_fallthru
      _
    // Predicated region
    $region18: #{tpu_custom_call.1} parent=1 // pred_check
      _
    $region19: #{tpu_custom_call.1} parent=1 // pred_check_branch
      %63 = sbr.rel (0) target = $region21
    $region20: #{tpu_custom_call.1} parent=1 // pred_region
      %s65 = ssub.s32 416, 416
      %66 = vsyncadd [#allocation9], %s65
      %s68 = sshll.u32 [#allocation10], 4
      %s69 = int_to_ptr.vmem [resolvable:$true] %s68
      %71 = dma.hbm_to_vmem [thread:$0]  %s4, 416, %s69, [#allocation9]
    $region21: #{tpu_custom_call.1} parent=1 // pred_fallthru
      _
    // Predicated region
    $region22: #{tpu_custom_call.1} parent=1 // pred_check
      _
    $region23: #{tpu_custom_call.1} parent=1 // pred_check_branch
      %73 = sbr.rel (0) target = $region25
    $region24: #{tpu_custom_call.1} parent=1 // pred_region
      %74 = dma.done [#allocation3], 2048
    $region25: #{tpu_custom_call.1} parent=1 // pred_fallthru
      _
    // Predicated region
    $region26: #{tpu_custom_call.1} parent=1 // pred_check
      _
    $region27: #{tpu_custom_call.1} parent=1 // pred_check_branch
      %76 = sbr.rel (0) target = $region29
    $region28: #{tpu_custom_call.1} parent=1 // pred_region
      %77 = dma.done [#allocation6], 4096
    $region29: #{tpu_custom_call.1} parent=1 // pred_fallthru
      _
    // Predicated region
    $region30: #{tpu_custom_call.1} parent=1 // pred_check
      _
    $region31: #{tpu_custom_call.1} parent=1 // pred_check_branch
      %79 = sbr.rel (0) target = $region33
    $region32: #{tpu_custom_call.1} parent=1 // pred_region
      %80 = dma.done [#allocation6], 47104
    $region33: #{tpu_custom_call.1} parent=1 // pred_fallthru
      _
    // Predicated region
    $region34: #{tpu_custom_call.1} parent=1 // pred_check
      _
    $region35: #{tpu_custom_call.1} parent=1 // pred_check_branch
      %82 = sbr.rel (0) target = $region37
    $region36: #{tpu_custom_call.1} parent=1 // pred_region
      %83 = dma.done [#allocation9], 10240
    $region37: #{tpu_custom_call.1} parent=1 // pred_fallthru
      _
    // Predicated region
    $region38: #{tpu_custom_call.1} parent=1 // pred_check
      _
    $region39: #{tpu_custom_call.1} parent=1 // pred_check_branch
      %85 = sbr.rel (0) target = $region41
    $region40: #{tpu_custom_call.1} parent=1 // pred_region
      %86 = dma.done [#allocation9], 416
    $region41: #{tpu_custom_call.1} parent=1 // pred_fallthru
      _
    %v88 = vld [vmem:[#allocation2] sm:$0xff]
    %v89 = vld [vmem:[#allocation2 + $0x8] sm:$0xff]
    %v90 = vld [vmem:[#allocation2 + $0x10] sm:$0xff]
    %v91 = vld [vmem:[#allocation2 + $0x18] sm:$0xff]
    %v92 = vld [vmem:[#allocation2 + $0x20] sm:$0xff]
    %v93 = vld [vmem:[#allocation2 + $0x28] sm:$0xff]
    %v94 = vld [vmem:[#allocation2 + $0x30] sm:$0xff]
    %v95 = vld [vmem:[#allocation2 + $0x38] sm:$0xff]
    %v96 = vld [vmem:[#allocation2 + $0x40] sm:$0xff]
    %v97 = vld [vmem:[#allocation2 + $0x48] sm:$0xff]
    %v98 = vld [vmem:[#allocation2 + $0x50] sm:$0xff]
    %v99 = vld [vmem:[#allocation2 + $0x58] sm:$0xff]
    %v100 = vld [vmem:[#allocation2 + $0x60] sm:$0xff]
    %v101 = vld [vmem:[#allocation2 + $0x68] sm:$0xff]
    %v102 = vld [vmem:[#allocation2 + $0x70] sm:$0xff]
    %v103 = vld [vmem:[#allocation2 + $0x78] sm:$0xff]
    %v104 = vld [vmem:[#allocation7] sm:$0xff]
    %v105 = vld [vmem:[#allocation7 + $0x8] sm:$0xff]
    %v106 = vld [vmem:[#allocation7 + $0x5c] sm:$0xff]
    %v107 = vld [vmem:[#allocation7 + $0x64] sm:$0xff]
    %v108 = vld [vmem:[#allocation7 + $0xb8] sm:$0xff]
    %v109 = vld [vmem:[#allocation7 + $0xc0] sm:$0xff]
    %v110 = vld [vmem:[#allocation7 + $0x114] sm:$0xff]
    %v111 = vld [vmem:[#allocation7 + $0x11c] sm:$0xff]
    %v112 = vld [vmem:[#allocation7 + $0x170] sm:$0xff]
    %v113 = vld [vmem:[#allocation7 + $0x178] sm:$0xff]
    %v114 = vld [vmem:[#allocation7 + $0x1cc] sm:$0xff]
    %v115 = vld [vmem:[#allocation7 + $0x1d4] sm:$0xff]
    %v116 = vld [vmem:[#allocation7 + $0x228] sm:$0xff]
    %v117 = vld [vmem:[#allocation7 + $0x230] sm:$0xff]
    %v118 = vld [vmem:[#allocation7 + $0x284] sm:$0xff]
    %v119 = vld [vmem:[#allocation7 + $0x28c] sm:$0xff]
    %v120 = vld [vmem:[#allocation7 + $0x2e0] sm:$0xff]
    %v121 = vld [vmem:[#allocation7 + $0x2e8] sm:$0xff]
    %v122 = vld [vmem:[#allocation7 + $0x33c] sm:$0xff]
    %v123 = vld [vmem:[#allocation7 + $0x344] sm:$0xff]
    %v124 = vld [vmem:[#allocation7 + $0x398] sm:$0xff]
    %v125 = vld [vmem:[#allocation7 + $0x3a0] sm:$0xff]
    %v126 = vld [vmem:[#allocation7 + $0x3f4] sm:$0xff]
    %v127 = vld [vmem:[#allocation7 + $0x3fc] sm:$0xff]
    %v128 = vld [vmem:[#allocation7 + $0x450] sm:$0xff]
    %v129 = vld [vmem:[#allocation7 + $0x458] sm:$0xff]
    %v130 = vld [vmem:[#allocation7 + $0x4ac] sm:$0xff]
    %v131 = vld [vmem:[#allocation7 + $0x4b4] sm:$0xff]
    %v132 = vld [vmem:[#allocation7 + $0x508] sm:$0xff]
    %v133 = vld [vmem:[#allocation7 + $0x510] sm:$0xff]
    %v134 = vld [vmem:[#allocation7 + $0x564] sm:$0xff]
    %v135 = vld [vmem:[#allocation7 + $0x56c] sm:$0xff]
    %v136 = vld [vmem:[#allocation7 + $0x5c0] sm:$0xff]
    %v137 = vld [vmem:[#allocation7 + $0x5c8] sm:$0xff]
    %v138 = vld [vmem:[#allocation7 + $0x61c] sm:$0xff]
    %v139 = vld [vmem:[#allocation7 + $0x624] sm:$0xff]
    %v140 = vld [vmem:[#allocation7 + $0x678] sm:$0xff]
    %v141 = vld [vmem:[#allocation7 + $0x680] sm:$0xff]
    %v142 = vld [vmem:[#allocation7 + $0x6d4] sm:$0xff]
    %v143 = vld [vmem:[#allocation7 + $0x6dc] sm:$0xff]
    %v144 = vld [vmem:[#allocation7 + $0x730] sm:$0xff]
    %v145 = vld [vmem:[#allocation7 + $0x738] sm:$0xff]
    %v146 = vld [vmem:[#allocation7 + $0x78c] sm:$0xff]
    %v147 = vld [vmem:[#allocation7 + $0x794] sm:$0xff]
    %v148 = vld [vmem:[#allocation7 + $0x7e8] sm:$0xff]
    %v149 = vld [vmem:[#allocation7 + $0x7f0] sm:$0xff]
    %v150 = vld [vmem:[#allocation7 + $0x844] sm:$0xff]
    %v151 = vld [vmem:[#allocation7 + $0x84c] sm:$0xff]
    %v152 = vld [vmem:[#allocation7 + $0x8a0] sm:$0xff]
    %v153 = vld [vmem:[#allocation7 + $0x8a8] sm:$0xff]
    %v154 = vld [vmem:[#allocation7 + $0x8fc] sm:$0xff]
    %v155 = vld [vmem:[#allocation7 + $0x904] sm:$0xff]
    %v156 = vld [vmem:[#allocation7 + $0x958] sm:$0xff]
    %v157 = vld [vmem:[#allocation7 + $0x960] sm:$0xff]
    %v158 = vld [vmem:[#allocation7 + $0x9b4] sm:$0xff]
    %v159 = vld [vmem:[#allocation7 + $0x9bc] sm:$0xff]
    %v160 = vld [vmem:[#allocation7 + $0xa10] sm:$0xff]
    %v161 = vld [vmem:[#allocation7 + $0xa18] sm:$0xff]
    %v162 = vld [vmem:[#allocation7 + $0xa6c] sm:$0xff]
    %v163 = vld [vmem:[#allocation7 + $0xa74] sm:$0xff]
    %v164 = vld [vmem:[#allocation7 + $0xac8] sm:$0xff]
    %v165 = vld [vmem:[#allocation7 + $0xad0] sm:$0xff]
    %v166 = vld [vmem:[#allocation7 + $0xb24] sm:$0xff]
    %v167 = vld [vmem:[#allocation7 + $0xb2c] sm:$0xff]
    %v168 = vld [vmem:[#allocation10] sm:$0xf]
    %v170 = vlaneseq
    %v171 = vshrl.u32 %v170, 7
    %v172 = vsub.s32 0, %v171
    %v173 = vrot.slane %v168, %v172
    %v174 = vlaneseq
    %v175 = vshrl.u32 %v174, 7
    %v176 = vsub.s32 1, %v175
    %v177 = vrot.slane %v168, %v176
    %v178 = vlaneseq
    %v179 = vshrl.u32 %v178, 7
    %v180 = vsub.s32 2, %v179
    %v181 = vrot.slane %v168, %v180
    %v182 = vlaneseq
    %v183 = vshrl.u32 %v182, 7
    %v184 = vsub.s32 3, %v183
    %v185 = vrot.slane %v168, %v184
    %v206 = vunpack.c.l.b16 %v88
    %v207 = vunpack.c.h.b16 %v88
    %v208 = vunpack.c.l.b16 %v89
    %v209 = vunpack.c.h.b16 %v89
    %v210 = vunpack.c.l.b16 %v90
    %v211 = vunpack.c.h.b16 %v90
    %v212 = vunpack.c.l.b16 %v91
    %v213 = vunpack.c.h.b16 %v91
    %v214 = vunpack.c.l.b16 %v92
    %v215 = vunpack.c.h.b16 %v92
    %v216 = vunpack.c.l.b16 %v93
    %v217 = vunpack.c.h.b16 %v93
    %v218 = vunpack.c.l.b16 %v94
    %v219 = vunpack.c.h.b16 %v94
    %v220 = vunpack.c.l.b16 %v95
    %v221 = vunpack.c.h.b16 %v95
    %v222 = vunpack.c.l.b16 %v96
    %v223 = vunpack.c.h.b16 %v96
    %v224 = vunpack.c.l.b16 %v97
    %v225 = vunpack.c.h.b16 %v97
    %v226 = vunpack.c.l.b16 %v98
    %v227 = vunpack.c.h.b16 %v98
    %v228 = vunpack.c.l.b16 %v99
    %v229 = vunpack.c.h.b16 %v99
    %v230 = vunpack.c.l.b16 %v100
    %v231 = vunpack.c.h.b16 %v100
    %v232 = vunpack.c.l.b16 %v101
    %v233 = vunpack.c.h.b16 %v101
    %v234 = vunpack.c.l.b16 %v102
    %v235 = vunpack.c.h.b16 %v102
    %v236 = vunpack.c.l.b16 %v103
    %v237 = vunpack.c.h.b16 %v103
    %v238 = vpack.c.b16 %v208, %v206
    %v239 = vpack.c.b16 %v209, %v207
    %v240 = vpack.c.b16 %v212, %v210
    %v241 = vpack.c.b16 %v213, %v211
    %v242 = vpack.c.b16 %v216, %v214
    %v243 = vpack.c.b16 %v217, %v215
    %v244 = vpack.c.b16 %v220, %v218
    %v245 = vpack.c.b16 %v221, %v219
    %v246 = vpack.c.b16 %v224, %v222
    %v247 = vpack.c.b16 %v225, %v223
    %v248 = vpack.c.b16 %v228, %v226
    %v249 = vpack.c.b16 %v229, %v227
    %v250 = vpack.c.b16 %v232, %v230
    %v251 = vpack.c.b16 %v233, %v231
    %v252 = vpack.c.b16 %v236, %v234
    %v253 = vpack.c.b16 %v237, %v235
    %v334 = vunpack.c.l.b16 %v104
    %v335 = vunpack.c.h.b16 %v104
    %v336 = vunpack.c.l.b16 %v105
    %v337 = vunpack.c.h.b16 %v105
    %v338 = vunpack.c.l.b16 %v106
    %v339 = vunpack.c.h.b16 %v106
    %v340 = vunpack.c.l.b16 %v107
    %v341 = vunpack.c.h.b16 %v107
    %v342 = vunpack.c.l.b16 %v108
    %v343 = vunpack.c.h.b16 %v108
    %v344 = vunpack.c.l.b16 %v109
    %v345 = vunpack.c.h.b16 %v109
    %v346 = vunpack.c.l.b16 %v110
    %v347 = vunpack.c.h.b16 %v110
    %v348 = vunpack.c.l.b16 %v111
    %v349 = vunpack.c.h.b16 %v111
    %v350 = vunpack.c.l.b16 %v112
    %v351 = vunpack.c.h.b16 %v112
    %v352 = vunpack.c.l.b16 %v113
    %v353 = vunpack.c.h.b16 %v113
    %v354 = vunpack.c.l.b16 %v114
    %v355 = vunpack.c.h.b16 %v114
    %v356 = vunpack.c.l.b16 %v115
    %v357 = vunpack.c.h.b16 %v115
    %v358 = vunpack.c.l.b16 %v116
    %v359 = vunpack.c.h.b16 %v116
    %v360 = vunpack.c.l.b16 %v117
    %v361 = vunpack.c.h.b16 %v117
    %v362 = vunpack.c.l.b16 %v118
    %v363 = vunpack.c.h.b16 %v118
    %v364 = vunpack.c.l.b16 %v119
    %v365 = vunpack.c.h.b16 %v119
    %v366 = vunpack.c.l.b16 %v120
    %v367 = vunpack.c.h.b16 %v120
    %v368 = vunpack.c.l.b16 %v121
    %v369 = vunpack.c.h.b16 %v121
    %v370 = vunpack.c.l.b16 %v122
    %v371 = vunpack.c.h.b16 %v122
    %v372 = vunpack.c.l.b16 %v123
    %v373 = vunpack.c.h.b16 %v123
    %v374 = vunpack.c.l.b16 %v124
    %v375 = vunpack.c.h.b16 %v124
    %v376 = vunpack.c.l.b16 %v125
    %v377 = vunpack.c.h.b16 %v125
    %v378 = vunpack.c.l.b16 %v126
    %v379 = vunpack.c.h.b16 %v126
    %v380 = vunpack.c.l.b16 %v127
    %v381 = vunpack.c.h.b16 %v127
    %v382 = vunpack.c.l.b16 %v128
    %v383 = vunpack.c.h.b16 %v128
    %v384 = vunpack.c.l.b16 %v129
    %v385 = vunpack.c.h.b16 %v129
    %v386 = vunpack.c.l.b16 %v130
    %v387 = vunpack.c.h.b16 %v130
    %v388 = vunpack.c.l.b16 %v131
    %v389 = vunpack.c.h.b16 %v131
    %v390 = vunpack.c.l.b16 %v132
    %v391 = vunpack.c.h.b16 %v132
    %v392 = vunpack.c.l.b16 %v133
    %v393 = vunpack.c.h.b16 %v133
    %v394 = vunpack.c.l.b16 %v134
    %v395 = vunpack.c.h.b16 %v134
    %v396 = vunpack.c.l.b16 %v135
    %v397 = vunpack.c.h.b16 %v135
    %v398 = vunpack.c.l.b16 %v136
    %v399 = vunpack.c.h.b16 %v136
    %v400 = vunpack.c.l.b16 %v137
    %v401 = vunpack.c.h.b16 %v137
    %v402 = vunpack.c.l.b16 %v138
    %v403 = vunpack.c.h.b16 %v138
    %v404 = vunpack.c.l.b16 %v139
    %v405 = vunpack.c.h.b16 %v139
    %v406 = vunpack.c.l.b16 %v140
    %v407 = vunpack.c.h.b16 %v140
    %v408 = vunpack.c.l.b16 %v141
    %v409 = vunpack.c.h.b16 %v141
    %v410 = vunpack.c.l.b16 %v142
    %v411 = vunpack.c.h.b16 %v142
    %v412 = vunpack.c.l.b16 %v143
    %v413 = vunpack.c.h.b16 %v143
    %v414 = vunpack.c.l.b16 %v144
    %v415 = vunpack.c.h.b16 %v144
    %v416 = vunpack.c.l.b16 %v145
    %v417 = vunpack.c.h.b16 %v145
    %v418 = vunpack.c.l.b16 %v146
    %v419 = vunpack.c.h.b16 %v146
    %v420 = vunpack.c.l.b16 %v147
    %v421 = vunpack.c.h.b16 %v147
    %v422 = vunpack.c.l.b16 %v148
    %v423 = vunpack.c.h.b16 %v148
    %v424 = vunpack.c.l.b16 %v149
    %v425 = vunpack.c.h.b16 %v149
    %v426 = vunpack.c.l.b16 %v150
    %v427 = vunpack.c.h.b16 %v150
    %v428 = vunpack.c.l.b16 %v151
    %v429 = vunpack.c.h.b16 %v151
    %v430 = vunpack.c.l.b16 %v152
    %v431 = vunpack.c.h.b16 %v152
    %v432 = vunpack.c.l.b16 %v153
    %v433 = vunpack.c.h.b16 %v153
    %v434 = vunpack.c.l.b16 %v154
    %v435 = vunpack.c.h.b16 %v154
    %v436 = vunpack.c.l.b16 %v155
    %v437 = vunpack.c.h.b16 %v155
    %v438 = vunpack.c.l.b16 %v156
    %v439 = vunpack.c.h.b16 %v156
    %v440 = vunpack.c.l.b16 %v157
    %v441 = vunpack.c.h.b16 %v157
    %v442 = vunpack.c.l.b16 %v158
    %v443 = vunpack.c.h.b16 %v158
    %v444 = vunpack.c.l.b16 %v159
    %v445 = vunpack.c.h.b16 %v159
    %v446 = vunpack.c.l.b16 %v160
    %v447 = vunpack.c.h.b16 %v160
    %v448 = vunpack.c.l.b16 %v161
    %v449 = vunpack.c.h.b16 %v161
    %v450 = vunpack.c.l.b16 %v162
    %v451 = vunpack.c.h.b16 %v162
    %v452 = vunpack.c.l.b16 %v163
    %v453 = vunpack.c.h.b16 %v163
    %v454 = vunpack.c.l.b16 %v164
    %v455 = vunpack.c.h.b16 %v164
    %v456 = vunpack.c.l.b16 %v165
    %v457 = vunpack.c.h.b16 %v165
    %v458 = vunpack.c.l.b16 %v166
    %v459 = vunpack.c.h.b16 %v166
    %v460 = vunpack.c.l.b16 %v167
    %v461 = vunpack.c.h.b16 %v167
    %v462 = vpack.c.b16 %v338, %v334
    %v463 = vpack.c.b16 %v339, %v335
    %v464 = vpack.c.b16 %v340, %v336
    %v465 = vpack.c.b16 %v341, %v337
    %v466 = vpack.c.b16 %v346, %v342
    %v467 = vpack.c.b16 %v347, %v343
    %v468 = vpack.c.b16 %v348, %v344
    %v469 = vpack.c.b16 %v349, %v345
    %v470 = vpack.c.b16 %v354, %v350
    %v471 = vpack.c.b16 %v355, %v351
    %v472 = vpack.c.b16 %v356, %v352
    %v473 = vpack.c.b16 %v357, %v353
    %v474 = vpack.c.b16 %v362, %v358
    %v475 = vpack.c.b16 %v363, %v359
    %v476 = vpack.c.b16 %v364, %v360
    %v477 = vpack.c.b16 %v365, %v361
    %v478 = vpack.c.b16 %v370, %v366
    %v479 = vpack.c.b16 %v371, %v367
    %v480 = vpack.c.b16 %v372, %v368
    %v481 = vpack.c.b16 %v373, %v369
    %v482 = vpack.c.b16 %v378, %v374
    %v483 = vpack.c.b16 %v379, %v375
    %v484 = vpack.c.b16 %v380, %v376
    %v485 = vpack.c.b16 %v381, %v377
    %v486 = vpack.c.b16 %v386, %v382
    %v487 = vpack.c.b16 %v387, %v383
    %v488 = vpack.c.b16 %v388, %v384
    %v489 = vpack.c.b16 %v389, %v385
    %v490 = vpack.c.b16 %v394, %v390
    %v491 = vpack.c.b16 %v395, %v391
    %v492 = vpack.c.b16 %v396, %v392
    %v493 = vpack.c.b16 %v397, %v393
    %v494 = vpack.c.b16 %v402, %v398
    %v495 = vpack.c.b16 %v403, %v399
    %v496 = vpack.c.b16 %v404, %v400
    %v497 = vpack.c.b16 %v405, %v401
    %v498 = vpack.c.b16 %v410, %v406
    %v499 = vpack.c.b16 %v411, %v407
    %v500 = vpack.c.b16 %v412, %v408
    %v501 = vpack.c.b16 %v413, %v409
    %v502 = vpack.c.b16 %v418, %v414
    %v503 = vpack.c.b16 %v419, %v415
    %v504 = vpack.c.b16 %v420, %v416
    %v505 = vpack.c.b16 %v421, %v417
    %v506 = vpack.c.b16 %v426, %v422
    %v507 = vpack.c.b16 %v427, %v423
    %v508 = vpack.c.b16 %v428, %v424
    %v509 = vpack.c.b16 %v429, %v425
    %v510 = vpack.c.b16 %v434, %v430
    %v511 = vpack.c.b16 %v435, %v431
    %v512 = vpack.c.b16 %v436, %v432
    %v513 = vpack.c.b16 %v437, %v433
    %v514 = vpack.c.b16 %v442, %v438
    %v515 = vpack.c.b16 %v443, %v439
    %v516 = vpack.c.b16 %v444, %v440
    %v517 = vpack.c.b16 %v445, %v441
    %v518 = vpack.c.b16 %v450, %v446
    %v519 = vpack.c.b16 %v451, %v447
    %v520 = vpack.c.b16 %v452, %v448
    %v521 = vpack.c.b16 %v453, %v449
    %v522 = vpack.c.b16 %v458, %v454
    %v523 = vpack.c.b16 %v459, %v455
    %v524 = vpack.c.b16 %v460, %v456
    %v525 = vpack.c.b16 %v461, %v457
    %590 = vmatprep.subr.bf16.mxu0 %v463
    %591 = vmatpush1.bf16.msra.mxu0 %v462
    %592 = vmatprep.subr.bf16.mxu0 %v467
    %593 = vmatpush1.bf16.msra.mxu0 %v466
    %594 = vmatprep.subr.bf16.mxu0 %v471
    %595 = vmatpush1.bf16.msra.mxu0 %v470
    %596 = vmatprep.subr.bf16.mxu0 %v475
    %597 = vmatpush1.bf16.msra.mxu0 %v474
    %598 = vmatprep.subr.bf16.mxu0 %v479
    %599 = vmatpush1.bf16.msra.mxu0 %v478
    %600 = vmatprep.subr.bf16.mxu0 %v483
    %601 = vmatpush1.bf16.msra.mxu0 %v482
    %602 = vmatprep.subr.bf16.mxu0 %v487
    %603 = vmatpush1.bf16.msra.mxu0 %v486
    %604 = vmatprep.subr.bf16.mxu0 %v491
    %605 = vmatpush1.bf16.msra.mxu0 %v490
    %606 = vmatprep.subr.bf16.mxu0 %v495
    %607 = vmatpush1.bf16.msra.mxu0 %v494
    %608 = vmatprep.subr.bf16.mxu0 %v499
    %609 = vmatpush1.bf16.msra.mxu0 %v498
    %610 = vmatprep.subr.bf16.mxu0 %v503
    %611 = vmatpush1.bf16.msra.mxu0 %v502
    %612 = vmatprep.subr.bf16.mxu0 %v507
    %613 = vmatpush1.bf16.msra.mxu0 %v506
    %614 = vmatprep.subr.bf16.mxu0 %v511
    %615 = vmatpush1.bf16.msra.mxu0 %v510
    %616 = vmatprep.subr.bf16.mxu0 %v515
    %617 = vmatpush1.bf16.msra.mxu0 %v514
    %618 = vmatprep.subr.bf16.mxu0 %v519
    %619 = vmatpush1.bf16.msra.mxu0 %v518
    %620 = vmatprep.subr.bf16.mxu0 %v523
    %621 = vmatpush1.bf16.msra.mxu0 %v522
    %622 = vmatprep.mubr.bf16.mxu0 %v239
    %623 = vmatmul.mubr.bf16.gmra.mrb[0].mxu0 %v238
    %v624 = vpop.f32.mrb[0].mxu0
    %v625 = vadd.f32 %v173, %v624
    %v626 = vpop.f32.mrb[0].mxu0
    %v627 = vadd.f32 %v177, %v626
    %v628 = vpop.f32.mrb[0].mxu0
    %v629 = vadd.f32 %v173, %v628
    %v630 = vpop.f32.mrb[0].mxu0
    %v631 = vadd.f32 %v177, %v630
    %632 = vmatprep.mubr.bf16.mxu0 %v241
    %633 = vmatmul.mubr.bf16.gmra.mrb[0].mxu0 %v240
    %v634 = vpop.f32.mrb[0].mxu0
    %v635 = vadd.f32 %v173, %v634
    %v636 = vpop.f32.mrb[0].mxu0
    %v637 = vadd.f32 %v177, %v636
    %v638 = vpop.f32.mrb[0].mxu0
    %v639 = vadd.f32 %v173, %v638
    %v640 = vpop.f32.mrb[0].mxu0
    %v641 = vadd.f32 %v177, %v640
    %642 = vmatprep.mubr.bf16.mxu0 %v243
    %643 = vmatmul.mubr.bf16.gmra.mrb[0].mxu0 %v242
    %v644 = vpop.f32.mrb[0].mxu0
    %v645 = vadd.f32 %v173, %v644
    %v646 = vpop.f32.mrb[0].mxu0
    %v647 = vadd.f32 %v177, %v646
    %v648 = vpop.f32.mrb[0].mxu0
    %v649 = vadd.f32 %v173, %v648
    %v650 = vpop.f32.mrb[0].mxu0
    %v651 = vadd.f32 %v177, %v650
    %652 = vmatprep.mubr.bf16.mxu0 %v245
    %653 = vmatmul.mubr.bf16.gmra.mrb[0].mxu0 %v244
    %v654 = vpop.f32.mrb[0].mxu0
    %v655 = vadd.f32 %v173, %v654
    %v656 = vpop.f32.mrb[0].mxu0
    %v657 = vadd.f32 %v177, %v656
    %v658 = vpop.f32.mrb[0].mxu0
    %v659 = vadd.f32 %v173, %v658
    %v660 = vpop.f32.mrb[0].mxu0
    %v661 = vadd.f32 %v177, %v660
    %662 = vmatprep.mubr.bf16.mxu0 %v247
    %663 = vmatmul.mubr.bf16.gmra.mrb[0].mxu0 %v246
    %v664 = vpop.f32.mrb[0].mxu0
    %v665 = vadd.f32 %v173, %v664
    %v666 = vpop.f32.mrb[0].mxu0
    %v667 = vadd.f32 %v177, %v666
    %v668 = vpop.f32.mrb[0].mxu0
    %v669 = vadd.f32 %v173, %v668
    %v670 = vpop.f32.mrb[0].mxu0
    %v671 = vadd.f32 %v177, %v670
    %672 = vmatprep.mubr.bf16.mxu0 %v249
    %673 = vmatmul.mubr.bf16.gmra.mrb[0].mxu0 %v248
    %v674 = vpop.f32.mrb[0].mxu0
    %v675 = vadd.f32 %v173, %v674
    %v676 = vpop.f32.mrb[0].mxu0
    %v677 = vadd.f32 %v177, %v676
    %v678 = vpop.f32.mrb[0].mxu0
    %v679 = vadd.f32 %v173, %v678
    %v680 = vpop.f32.mrb[0].mxu0
    %v681 = vadd.f32 %v177, %v680
    %682 = vmatprep.mubr.bf16.mxu0 %v251
    %683 = vmatmul.mubr.bf16.gmra.mrb[0].mxu0 %v250
    %v684 = vpop.f32.mrb[0].mxu0
    %v685 = vadd.f32 %v173, %v684
    %v686 = vpop.f32.mrb[0].mxu0
    %v687 = vadd.f32 %v177, %v686
    %v688 = vpop.f32.mrb[0].mxu0
    %v689 = vadd.f32 %v173, %v688
    %v690 = vpop.f32.mrb[0].mxu0
    %v691 = vadd.f32 %v177, %v690
    %692 = vmatprep.mubr.bf16.mxu0 %v253
    %693 = vmatmul.mubr.bf16.gmra.mrb[0].mxu0 %v252
    %v694 = vpop.f32.mrb[0].mxu0
    %v695 = vadd.f32 %v173, %v694
    %v696 = vpop.f32.mrb[0].mxu0
    %v697 = vadd.f32 %v177, %v696
    %v698 = vpop.f32.mrb[0].mxu0
    %v699 = vadd.f32 %v173, %v698
    %v700 = vpop.f32.mrb[0].mxu0
    %v701 = vadd.f32 %v177, %v700
    %702 = vdwg.mxu0
    %703 = vmatprep.subr.bf16.mxu0 %v465
    %704 = vmatpush1.bf16.msra.mxu0 %v464
    %705 = vmatprep.subr.bf16.mxu0 %v469
    %706 = vmatpush1.bf16.msra.mxu0 %v468
    %707 = vmatprep.subr.bf16.mxu0 %v473
    %708 = vmatpush1.bf16.msra.mxu0 %v472
    %709 = vmatprep.subr.bf16.mxu0 %v477
    %710 = vmatpush1.bf16.msra.mxu0 %v476
    %711 = vmatprep.subr.bf16.mxu0 %v481
    %712 = vmatpush1.bf16.msra.mxu0 %v480
    %713 = vmatprep.subr.bf16.mxu0 %v485
    %714 = vmatpush1.bf16.msra.mxu0 %v484
    %715 = vmatprep.subr.bf16.mxu0 %v489
    %716 = vmatpush1.bf16.msra.mxu0 %v488
    %717 = vmatprep.subr.bf16.mxu0 %v493
    %718 = vmatpush1.bf16.msra.mxu0 %v492
    %719 = vmatprep.subr.bf16.mxu0 %v497
    %720 = vmatpush1.bf16.msra.mxu0 %v496
    %721 = vmatprep.subr.bf16.mxu0 %v501
    %722 = vmatpush1.bf16.msra.mxu0 %v500
    %723 = vmatprep.subr.bf16.mxu0 %v505
    %724 = vmatpush1.bf16.msra.mxu0 %v504
    %725 = vmatprep.subr.bf16.mxu0 %v509
    %726 = vmatpush1.bf16.msra.mxu0 %v508
    %727 = vmatprep.subr.bf16.mxu0 %v513
    %728 = vmatpush1.bf16.msra.mxu0 %v512
    %729 = vmatprep.subr.bf16.mxu0 %v517
    %730 = vmatpush1.bf16.msra.mxu0 %v516
    %731 = vmatprep.subr.bf16.mxu0 %v521
    %732 = vmatpush1.bf16.msra.mxu0 %v520
    %733 = vmatprep.subr.bf16.mxu0 %v525
    %734 = vmatpush1.bf16.msra.mxu0 %v524
    %735 = vmatprep.mubr.bf16.mxu0 %v239
    %736 = vmatmul.mubr.bf16.gmra.mrb[0].mxu0 %v238
    %v737 = vpop.f32.mrb[0].mxu0
    %v738 = vadd.f32 %v181, %v737
    %v739 = vpop.f32.mrb[0].mxu0
    %v740 = vadd.f32 %v185, %v739
    %v741 = vpop.f32.mrb[0].mxu0
    %v742 = vadd.f32 %v181, %v741
    %v743 = vpop.f32.mrb[0].mxu0
    %v744 = vadd.f32 %v185, %v743
    %745 = vmatprep.mubr.bf16.mxu0 %v241
    %746 = vmatmul.mubr.bf16.gmra.mrb[0].mxu0 %v240
    %v747 = vpop.f32.mrb[0].mxu0
    %v748 = vadd.f32 %v181, %v747
    %v749 = vpop.f32.mrb[0].mxu0
    %v750 = vadd.f32 %v185, %v749
    %v751 = vpop.f32.mrb[0].mxu0
    %v752 = vadd.f32 %v181, %v751
    %v753 = vpop.f32.mrb[0].mxu0
    %v754 = vadd.f32 %v185, %v753
    %755 = vmatprep.mubr.bf16.mxu0 %v243
    %756 = vmatmul.mubr.bf16.gmra.mrb[0].mxu0 %v242
    %v757 = vpop.f32.mrb[0].mxu0
    %v758 = vadd.f32 %v181, %v757
    %v759 = vpop.f32.mrb[0].mxu0
    %v760 = vadd.f32 %v185, %v759
    %v761 = vpop.f32.mrb[0].mxu0
    %v762 = vadd.f32 %v181, %v761
    %v763 = vpop.f32.mrb[0].mxu0
    %v764 = vadd.f32 %v185, %v763
    %765 = vmatprep.mubr.bf16.mxu0 %v245
    %766 = vmatmul.mubr.bf16.gmra.mrb[0].mxu0 %v244
    %v767 = vpop.f32.mrb[0].mxu0
    %v768 = vadd.f32 %v181, %v767
    %v769 = vpop.f32.mrb[0].mxu0
    %v770 = vadd.f32 %v185, %v769
    %v771 = vpop.f32.mrb[0].mxu0
    %v772 = vadd.f32 %v181, %v771
    %v773 = vpop.f32.mrb[0].mxu0
    %v774 = vadd.f32 %v185, %v773
    %775 = vmatprep.mubr.bf16.mxu0 %v247
    %776 = vmatmul.mubr.bf16.gmra.mrb[0].mxu0 %v246
    %v777 = vpop.f32.mrb[0].mxu0
    %v778 = vadd.f32 %v181, %v777
    %v779 = vpop.f32.mrb[0].mxu0
    %v780 = vadd.f32 %v185, %v779
    %v781 = vpop.f32.mrb[0].mxu0
    %v782 = vadd.f32 %v181, %v781
    %v783 = vpop.f32.mrb[0].mxu0
    %v784 = vadd.f32 %v185, %v783
    %785 = vmatprep.mubr.bf16.mxu0 %v249
    %786 = vmatmul.mubr.bf16.gmra.mrb[0].mxu0 %v248
    %v787 = vpop.f32.mrb[0].mxu0
    %v788 = vadd.f32 %v181, %v787
    %v789 = vpop.f32.mrb[0].mxu0
    %v790 = vadd.f32 %v185, %v789
    %v791 = vpop.f32.mrb[0].mxu0
    %v792 = vadd.f32 %v181, %v791
    %v793 = vpop.f32.mrb[0].mxu0
    %v794 = vadd.f32 %v185, %v793
    %795 = vmatprep.mubr.bf16.mxu0 %v251
    %796 = vmatmul.mubr.bf16.gmra.mrb[0].mxu0 %v250
    %v797 = vpop.f32.mrb[0].mxu0
    %v798 = vadd.f32 %v181, %v797
    %v799 = vpop.f32.mrb[0].mxu0
    %v800 = vadd.f32 %v185, %v799
    %v801 = vpop.f32.mrb[0].mxu0
    %v802 = vadd.f32 %v181, %v801
    %v803 = vpop.f32.mrb[0].mxu0
    %v804 = vadd.f32 %v185, %v803
    %805 = vmatprep.mubr.bf16.mxu0 %v253
    %806 = vmatmul.mubr.bf16.gmra.mrb[0].mxu0 %v252
    %v807 = vpop.f32.mrb[0].mxu0
    %v808 = vadd.f32 %v181, %v807
    %v809 = vpop.f32.mrb[0].mxu0
    %v810 = vadd.f32 %v185, %v809
    %v811 = vpop.f32.mrb[0].mxu0
    %v812 = vadd.f32 %v181, %v811
    %v813 = vpop.f32.mrb[0].mxu0
    %v814 = vadd.f32 %v185, %v813
    %815 = vdwg.mxu0
    %v816 = vmax.f32 %v625, 0.0
    %v817 = vmax.f32 %v627, 0.0
    %v818 = vmax.f32 %v738, 0.0
    %v819 = vmax.f32 %v740, 0.0
    %v820 = vmax.f32 %v629, 0.0
    %v821 = vmax.f32 %v631, 0.0
    %v822 = vmax.f32 %v742, 0.0
    %v823 = vmax.f32 %v744, 0.0
    %v824 = vmax.f32 %v635, 0.0
    %v825 = vmax.f32 %v637, 0.0
    %v826 = vmax.f32 %v748, 0.0
    %v827 = vmax.f32 %v750, 0.0
    %v828 = vmax.f32 %v639, 0.0
    %v829 = vmax.f32 %v641, 0.0
    %v830 = vmax.f32 %v752, 0.0
    %v831 = vmax.f32 %v754, 0.0
    %v832 = vmax.f32 %v645, 0.0
    %v833 = vmax.f32 %v647, 0.0
    %v834 = vmax.f32 %v758, 0.0
    %v835 = vmax.f32 %v760, 0.0
    %v836 = vmax.f32 %v649, 0.0
    %v837 = vmax.f32 %v651, 0.0
    %v838 = vmax.f32 %v762, 0.0
    %v839 = vmax.f32 %v764, 0.0
    %v840 = vmax.f32 %v655, 0.0
    %v841 = vmax.f32 %v657, 0.0
    %v842 = vmax.f32 %v768, 0.0
    %v843 = vmax.f32 %v770, 0.0
    %v844 = vmax.f32 %v659, 0.0
    %v845 = vmax.f32 %v661, 0.0
    %v846 = vmax.f32 %v772, 0.0
    %v847 = vmax.f32 %v774, 0.0
    %v848 = vmax.f32 %v665, 0.0
    %v849 = vmax.f32 %v667, 0.0
    %v850 = vmax.f32 %v778, 0.0
    %v851 = vmax.f32 %v780, 0.0
    %v852 = vmax.f32 %v669, 0.0
    %v853 = vmax.f32 %v671, 0.0
    %v854 = vmax.f32 %v782, 0.0
    %v855 = vmax.f32 %v784, 0.0
    %v856 = vmax.f32 %v675, 0.0
    %v857 = vmax.f32 %v677, 0.0
    %v858 = vmax.f32 %v788, 0.0
    %v859 = vmax.f32 %v790, 0.0
    %v860 = vmax.f32 %v679, 0.0
    %v861 = vmax.f32 %v681, 0.0
    %v862 = vmax.f32 %v792, 0.0
    %v863 = vmax.f32 %v794, 0.0
    %v864 = vmax.f32 %v685, 0.0
    %v865 = vmax.f32 %v687, 0.0
    %v866 = vmax.f32 %v798, 0.0
    %v867 = vmax.f32 %v800, 0.0
    %v868 = vmax.f32 %v689, 0.0
    %v869 = vmax.f32 %v691, 0.0
    %v870 = vmax.f32 %v802, 0.0
    %v871 = vmax.f32 %v804, 0.0
    %v872 = vmax.f32 %v695, 0.0
    %v873 = vmax.f32 %v697, 0.0
    %v874 = vmax.f32 %v808, 0.0
    %v875 = vmax.f32 %v810, 0.0
    %v876 = vmax.f32 %v699, 0.0
    %v877 = vmax.f32 %v701, 0.0
    %v878 = vmax.f32 %v812, 0.0
    %v879 = vmax.f32 %v814, 0.0
    %v880 = vpack.c.bf16 %v820, %v816
    %v881 = vpack.c.bf16 %v821, %v817
    %v882 = vpack.c.bf16 %v822, %v818
    %v883 = vpack.c.bf16 %v823, %v819
    %v884 = vpack.c.bf16 %v828, %v824
    %v885 = vpack.c.bf16 %v829, %v825
    %v886 = vpack.c.bf16 %v830, %v826
    %v887 = vpack.c.bf16 %v831, %v827
    %v888 = vpack.c.bf16 %v836, %v832
    %v889 = vpack.c.bf16 %v837, %v833
    %v890 = vpack.c.bf16 %v838, %v834
    %v891 = vpack.c.bf16 %v839, %v835
    %v892 = vpack.c.bf16 %v844, %v840
    %v893 = vpack.c.bf16 %v845, %v841
    %v894 = vpack.c.bf16 %v846, %v842
    %v895 = vpack.c.bf16 %v847, %v843
    %v896 = vpack.c.bf16 %v852, %v848
    %v897 = vpack.c.bf16 %v853, %v849
    %v898 = vpack.c.bf16 %v854, %v850
    %v899 = vpack.c.bf16 %v855, %v851
    %v900 = vpack.c.bf16 %v860, %v856
    %v901 = vpack.c.bf16 %v861, %v857
    %v902 = vpack.c.bf16 %v862, %v858
    %v903 = vpack.c.bf16 %v863, %v859
    %v904 = vpack.c.bf16 %v868, %v864
    %v905 = vpack.c.bf16 %v869, %v865
    %v906 = vpack.c.bf16 %v870, %v866
    %v907 = vpack.c.bf16 %v871, %v867
    %v908 = vpack.c.bf16 %v876, %v872
    %v909 = vpack.c.bf16 %v877, %v873
    %v910 = vpack.c.bf16 %v878, %v874
    %v911 = vpack.c.bf16 %v879, %v875
    %v912 = vld [vmem:[#allocation7 + $0x10] sm:$0xff]
    %v913 = vld [vmem:[#allocation7 + $0x6c] sm:$0xff]
    %v914 = vld [vmem:[#allocation7 + $0xc8] sm:$0xff]
    %v915 = vld [vmem:[#allocation7 + $0x124] sm:$0xff]
    %v916 = vld [vmem:[#allocation7 + $0x180] sm:$0xff]
    %v917 = vld [vmem:[#allocation7 + $0x1dc] sm:$0xff]
    %v918 = vld [vmem:[#allocation7 + $0x238] sm:$0xff]
    %v919 = vld [vmem:[#allocation7 + $0x294] sm:$0xff]
    %v920 = vld [vmem:[#allocation7 + $0x2f0] sm:$0xff]
    %v921 = vld [vmem:[#allocation7 + $0x34c] sm:$0xff]
    %v922 = vld [vmem:[#allocation7 + $0x3a8] sm:$0xff]
    %v923 = vld [vmem:[#allocation7 + $0x404] sm:$0xff]
    %v924 = vld [vmem:[#allocation7 + $0x460] sm:$0xff]
    %v925 = vld [vmem:[#allocation7 + $0x4bc] sm:$0xff]
    %v926 = vld [vmem:[#allocation7 + $0x518] sm:$0xff]
    %v927 = vld [vmem:[#allocation7 + $0x574] sm:$0xff]
    %v928 = vld [vmem:[#allocation7 + $0x5d0] sm:$0xff]
    %v929 = vld [vmem:[#allocation7 + $0x62c] sm:$0xff]
    %v930 = vld [vmem:[#allocation7 + $0x688] sm:$0xff]
    %v931 = vld [vmem:[#allocation7 + $0x6e4] sm:$0xff]
    %v932 = vld [vmem:[#allocation7 + $0x740] sm:$0xff]
    %v933 = vld [vmem:[#allocation7 + $0x79c] sm:$0xff]
    %v934 = vld [vmem:[#allocation7 + $0x7f8] sm:$0xff]
    %v935 = vld [vmem:[#allocation7 + $0x854] sm:$0xff]
    %v936 = vld [vmem:[#allocation7 + $0x8b0] sm:$0xff]
    %v937 = vld [vmem:[#allocation7 + $0x90c] sm:$0xff]
    %v938 = vld [vmem:[#allocation7 + $0x968] sm:$0xff]
    %v939 = vld [vmem:[#allocation7 + $0x9c4] sm:$0xff]
    %v940 = vld [vmem:[#allocation7 + $0xa20] sm:$0xff]
    %v941 = vld [vmem:[#allocation7 + $0xa7c] sm:$0xff]
    %v942 = vld [vmem:[#allocation7 + $0xad8] sm:$0xff]
    %v943 = vld [vmem:[#allocation7 + $0xb34] sm:$0xff]
    %v944 = vld [vmem:[#allocation10 + $0x4] sm:$0x3]
    %v946 = vlaneseq
    %v947 = vshrl.u32 %v946, 7
    %v948 = vsub.s32 0, %v947
    %v949 = vrot.slane %v944, %v948
    %v950 = vlaneseq
    %v951 = vshrl.u32 %v950, 7
    %v952 = vsub.s32 1, %v951
    %v953 = vrot.slane %v944, %v952
    %v988 = vunpack.c.l.b16 %v912
    %v989 = vunpack.c.h.b16 %v912
    %v990 = vunpack.c.l.b16 %v913
    %v991 = vunpack.c.h.b16 %v913
    %v992 = vunpack.c.l.b16 %v914
    %v993 = vunpack.c.h.b16 %v914
    %v994 = vunpack.c.l.b16 %v915
    %v995 = vunpack.c.h.b16 %v915
    %v996 = vunpack.c.l.b16 %v916
    %v997 = vunpack.c.h.b16 %v916
    %v998 = vunpack.c.l.b16 %v917
    %v999 = vunpack.c.h.b16 %v917
    %v1000 = vunpack.c.l.b16 %v918
    %v1001 = vunpack.c.h.b16 %v918
    %v1002 = vunpack.c.l.b16 %v919
    %v1003 = vunpack.c.h.b16 %v919
    %v1004 = vunpack.c.l.b16 %v920
    %v1005 = vunpack.c.h.b16 %v920
    %v1006 = vunpack.c.l.b16 %v921
    %v1007 = vunpack.c.h.b16 %v921
    %v1008 = vunpack.c.l.b16 %v922
    %v1009 = vunpack.c.h.b16 %v922
    %v1010 = vunpack.c.l.b16 %v923
    %v1011 = vunpack.c.h.b16 %v923
    %v1012 = vunpack.c.l.b16 %v924
    %v1013 = vunpack.c.h.b16 %v924
    %v1014 = vunpack.c.l.b16 %v925
    %v1015 = vunpack.c.h.b16 %v925
    %v1016 = vunpack.c.l.b16 %v926
    %v1017 = vunpack.c.h.b16 %v926
    %v1018 = vunpack.c.l.b16 %v927
    %v1019 = vunpack.c.h.b16 %v927
    %v1020 = vunpack.c.l.b16 %v928
    %v1021 = vunpack.c.h.b16 %v928
    %v1022 = vunpack.c.l.b16 %v929
    %v1023 = vunpack.c.h.b16 %v929
    %v1024 = vunpack.c.l.b16 %v930
    %v1025 = vunpack.c.h.b16 %v930
    %v1026 = vunpack.c.l.b16 %v931
    %v1027 = vunpack.c.h.b16 %v931
    %v1028 = vunpack.c.l.b16 %v932
    %v1029 = vunpack.c.h.b16 %v932
    %v1030 = vunpack.c.l.b16 %v933
    %v1031 = vunpack.c.h.b16 %v933
    %v1032 = vunpack.c.l.b16 %v934
    %v1033 = vunpack.c.h.b16 %v934
    %v1034 = vunpack.c.l.b16 %v935
    %v1035 = vunpack.c.h.b16 %v935
    %v1036 = vunpack.c.l.b16 %v936
    %v1037 = vunpack.c.h.b16 %v936
    %v1038 = vunpack.c.l.b16 %v937
    %v1039 = vunpack.c.h.b16 %v937
    %v1040 = vunpack.c.l.b16 %v938
    %v1041 = vunpack.c.h.b16 %v938
    %v1042 = vunpack.c.l.b16 %v939
    %v1043 = vunpack.c.h.b16 %v939
    %v1044 = vunpack.c.l.b16 %v940
    %v1045 = vunpack.c.h.b16 %v940
    %v1046 = vunpack.c.l.b16 %v941
    %v1047 = vunpack.c.h.b16 %v941
    %v1048 = vunpack.c.l.b16 %v942
    %v1049 = vunpack.c.h.b16 %v942
    %v1050 = vunpack.c.l.b16 %v943
    %v1051 = vunpack.c.h.b16 %v943
    %v1052 = vpack.c.b16 %v990, %v988
    %v1053 = vpack.c.b16 %v991, %v989
    %v1054 = vpack.c.b16 %v994, %v992
    %v1055 = vpack.c.b16 %v995, %v993
    %v1056 = vpack.c.b16 %v998, %v996
    %v1057 = vpack.c.b16 %v999, %v997
    %v1058 = vpack.c.b16 %v1002, %v1000
    %v1059 = vpack.c.b16 %v1003, %v1001
    %v1060 = vpack.c.b16 %v1006, %v1004
    %v1061 = vpack.c.b16 %v1007, %v1005
    %v1062 = vpack.c.b16 %v1010, %v1008
    %v1063 = vpack.c.b16 %v1011, %v1009
    %v1064 = vpack.c.b16 %v1014, %v1012
    %v1065 = vpack.c.b16 %v1015, %v1013
    %v1066 = vpack.c.b16 %v1018, %v1016
    %v1067 = vpack.c.b16 %v1019, %v1017
    %v1068 = vpack.c.b16 %v1022, %v1020
    %v1069 = vpack.c.b16 %v1023, %v1021
    %v1070 = vpack.c.b16 %v1026, %v1024
    %v1071 = vpack.c.b16 %v1027, %v1025
    %v1072 = vpack.c.b16 %v1030, %v1028
    %v1073 = vpack.c.b16 %v1031, %v1029
    %v1074 = vpack.c.b16 %v1034, %v1032
    %v1075 = vpack.c.b16 %v1035, %v1033
    %v1076 = vpack.c.b16 %v1038, %v1036
    %v1077 = vpack.c.b16 %v1039, %v1037
    %v1078 = vpack.c.b16 %v1042, %v1040
    %v1079 = vpack.c.b16 %v1043, %v1041
    %v1080 = vpack.c.b16 %v1046, %v1044
    %v1081 = vpack.c.b16 %v1047, %v1045
    %v1082 = vpack.c.b16 %v1050, %v1048
    %v1083 = vpack.c.b16 %v1051, %v1049
    %1116 = vmatprep.subr.bf16.mxu0 %v1053
    %1117 = vmatpush1.bf16.msra.mxu0 %v1052
    %1118 = vmatprep.subr.bf16.mxu0 %v1055
    %1119 = vmatpush1.bf16.msra.mxu0 %v1054
    %1120 = vmatprep.subr.bf16.mxu0 %v1057
    %1121 = vmatpush1.bf16.msra.mxu0 %v1056
    %1122 = vmatprep.subr.bf16.mxu0 %v1059
    %1123 = vmatpush1.bf16.msra.mxu0 %v1058
    %1124 = vmatprep.subr.bf16.mxu0 %v1061
    %1125 = vmatpush1.bf16.msra.mxu0 %v1060
    %1126 = vmatprep.subr.bf16.mxu0 %v1063
    %1127 = vmatpush1.bf16.msra.mxu0 %v1062
    %1128 = vmatprep.subr.bf16.mxu0 %v1065
    %1129 = vmatpush1.bf16.msra.mxu0 %v1064
    %1130 = vmatprep.subr.bf16.mxu0 %v1067
    %1131 = vmatpush1.bf16.msra.mxu0 %v1066
    %1132 = vmatprep.subr.bf16.mxu0 %v1069
    %1133 = vmatpush1.bf16.msra.mxu0 %v1068
    %1134 = vmatprep.subr.bf16.mxu0 %v1071
    %1135 = vmatpush1.bf16.msra.mxu0 %v1070
    %1136 = vmatprep.subr.bf16.mxu0 %v1073
    %1137 = vmatpush1.bf16.msra.mxu0 %v1072
    %1138 = vmatprep.subr.bf16.mxu0 %v1075
    %1139 = vmatpush1.bf16.msra.mxu0 %v1074
    %1140 = vmatprep.subr.bf16.mxu0 %v1077
    %1141 = vmatpush1.bf16.msra.mxu0 %v1076
    %1142 = vmatprep.subr.bf16.mxu0 %v1079
    %1143 = vmatpush1.bf16.msra.mxu0 %v1078
    %1144 = vmatprep.subr.bf16.mxu0 %v1081
    %1145 = vmatpush1.bf16.msra.mxu0 %v1080
    %1146 = vmatprep.subr.bf16.mxu0 %v1083
    %1147 = vmatpush1.bf16.msra.mxu0 %v1082
    %1148 = vmatprep.mubr.bf16.mxu0 %v881
    %1149 = vmatmul.mubr.bf16.gmra.mrb[0].mxu0 %v880
    %v1150 = vpop.f32.mrb[0].mxu0
    %v1151 = vadd.f32 %v949, %v1150
    %v1152 = vpop.f32.mrb[0].mxu0
    %v1153 = vadd.f32 %v953, %v1152
    %v1154 = vpop.f32.mrb[0].mxu0
    %v1155 = vadd.f32 %v949, %v1154
    %v1156 = vpop.f32.mrb[0].mxu0
    %v1157 = vadd.f32 %v953, %v1156
    %1158 = vmatprep.mubr.bf16.mxu0 %v885
    %1159 = vmatmul.mubr.bf16.gmra.mrb[0].mxu0 %v884
    %v1160 = vpop.f32.mrb[0].mxu0
    %v1161 = vadd.f32 %v949, %v1160
    %v1162 = vpop.f32.mrb[0].mxu0
    %v1163 = vadd.f32 %v953, %v1162
    %v1164 = vpop.f32.mrb[0].mxu0
    %v1165 = vadd.f32 %v949, %v1164
    %v1166 = vpop.f32.mrb[0].mxu0
    %v1167 = vadd.f32 %v953, %v1166
    %1168 = vmatprep.mubr.bf16.mxu0 %v889
    %1169 = vmatmul.mubr.bf16.gmra.mrb[0].mxu0 %v888
    %v1170 = vpop.f32.mrb[0].mxu0
    %v1171 = vadd.f32 %v949, %v1170
    %v1172 = vpop.f32.mrb[0].mxu0
    %v1173 = vadd.f32 %v953, %v1172
    %v1174 = vpop.f32.mrb[0].mxu0
    %v1175 = vadd.f32 %v949, %v1174
    %v1176 = vpop.f32.mrb[0].mxu0
    %v1177 = vadd.f32 %v953, %v1176
    %1178 = vmatprep.mubr.bf16.mxu0 %v893
    %1179 = vmatmul.mubr.bf16.gmra.mrb[0].mxu0 %v892
    %v1180 = vpop.f32.mrb[0].mxu0
    %v1181 = vadd.f32 %v949, %v1180
    %v1182 = vpop.f32.mrb[0].mxu0
    %v1183 = vadd.f32 %v953, %v1182
    %v1184 = vpop.f32.mrb[0].mxu0
    %v1185 = vadd.f32 %v949, %v1184
    %v1186 = vpop.f32.mrb[0].mxu0
    %v1187 = vadd.f32 %v953, %v1186
    %1188 = vmatprep.mubr.bf16.mxu0 %v897
    %1189 = vmatmul.mubr.bf16.gmra.mrb[0].mxu0 %v896
    %v1190 = vpop.f32.mrb[0].mxu0
    %v1191 = vadd.f32 %v949, %v1190
    %v1192 = vpop.f32.mrb[0].mxu0
    %v1193 = vadd.f32 %v953, %v1192
    %v1194 = vpop.f32.mrb[0].mxu0
    %v1195 = vadd.f32 %v949, %v1194
    %v1196 = vpop.f32.mrb[0].mxu0
    %v1197 = vadd.f32 %v953, %v1196
    %1198 = vmatprep.mubr.bf16.mxu0 %v901
    %1199 = vmatmul.mubr.bf16.gmra.mrb[0].mxu0 %v900
    %v1200 = vpop.f32.mrb[0].mxu0
    %v1201 = vadd.f32 %v949, %v1200
    %v1202 = vpop.f32.mrb[0].mxu0
    %v1203 = vadd.f32 %v953, %v1202
    %v1204 = vpop.f32.mrb[0].mxu0
    %v1205 = vadd.f32 %v949, %v1204
    %v1206 = vpop.f32.mrb[0].mxu0
    %v1207 = vadd.f32 %v953, %v1206
    %1208 = vmatprep.mubr.bf16.mxu0 %v905
    %1209 = vmatmul.mubr.bf16.gmra.mrb[0].mxu0 %v904
    %v1210 = vpop.f32.mrb[0].mxu0
    %v1211 = vadd.f32 %v949, %v1210
    %v1212 = vpop.f32.mrb[0].mxu0
    %v1213 = vadd.f32 %v953, %v1212
    %v1214 = vpop.f32.mrb[0].mxu0
    %v1215 = vadd.f32 %v949, %v1214
    %v1216 = vpop.f32.mrb[0].mxu0
    %v1217 = vadd.f32 %v953, %v1216
    %1218 = vmatprep.mubr.bf16.mxu0 %v909
    %1219 = vmatmul.mubr.bf16.gmra.mrb[0].mxu0 %v908
    %v1220 = vpop.f32.mrb[0].mxu0
    %v1221 = vadd.f32 %v949, %v1220
    %v1222 = vpop.f32.mrb[0].mxu0
    %v1223 = vadd.f32 %v953, %v1222
    %v1224 = vpop.f32.mrb[0].mxu0
    %v1225 = vadd.f32 %v949, %v1224
    %v1226 = vpop.f32.mrb[0].mxu0
    %v1227 = vadd.f32 %v953, %v1226
    %1228 = vdwg.mxu0
    %v1229 = vmax.f32 %v1151, 0.0
    %v1230 = vmax.f32 %v1153, 0.0
    %v1231 = vmax.f32 %v1155, 0.0
    %v1232 = vmax.f32 %v1157, 0.0
    %v1233 = vmax.f32 %v1161, 0.0
    %v1234 = vmax.f32 %v1163, 0.0
    %v1235 = vmax.f32 %v1165, 0.0
    %v1236 = vmax.f32 %v1167, 0.0
    %v1237 = vmax.f32 %v1171, 0.0
    %v1238 = vmax.f32 %v1173, 0.0
    %v1239 = vmax.f32 %v1175, 0.0
    %v1240 = vmax.f32 %v1177, 0.0
    %v1241 = vmax.f32 %v1181, 0.0
    %v1242 = vmax.f32 %v1183, 0.0
    %v1243 = vmax.f32 %v1185, 0.0
    %v1244 = vmax.f32 %v1187, 0.0
    %v1245 = vmax.f32 %v1191, 0.0
    %v1246 = vmax.f32 %v1193, 0.0
    %v1247 = vmax.f32 %v1195, 0.0
    %v1248 = vmax.f32 %v1197, 0.0
    %v1249 = vmax.f32 %v1201, 0.0
    %v1250 = vmax.f32 %v1203, 0.0
    %v1251 = vmax.f32 %v1205, 0.0
    %v1252 = vmax.f32 %v1207, 0.0
    %v1253 = vmax.f32 %v1211, 0.0
    %v1254 = vmax.f32 %v1213, 0.0
    %v1255 = vmax.f32 %v1215, 0.0
    %v1256 = vmax.f32 %v1217, 0.0
    %v1257 = vmax.f32 %v1221, 0.0
    %v1258 = vmax.f32 %v1223, 0.0
    %v1259 = vmax.f32 %v1225, 0.0
    %v1260 = vmax.f32 %v1227, 0.0
    %v1261 = vpack.c.bf16 %v1231, %v1229
    %v1262 = vpack.c.bf16 %v1232, %v1230
    %v1263 = vpack.c.bf16 %v1235, %v1233
    %v1264 = vpack.c.bf16 %v1236, %v1234
    %v1265 = vpack.c.bf16 %v1239, %v1237
    %v1266 = vpack.c.bf16 %v1240, %v1238
    %v1267 = vpack.c.bf16 %v1243, %v1241
    %v1268 = vpack.c.bf16 %v1244, %v1242
    %v1269 = vpack.c.bf16 %v1247, %v1245
    %v1270 = vpack.c.bf16 %v1248, %v1246
    %v1271 = vpack.c.bf16 %v1251, %v1249
    %v1272 = vpack.c.bf16 %v1252, %v1250
    %v1273 = vpack.c.bf16 %v1255, %v1253
    %v1274 = vpack.c.bf16 %v1256, %v1254
    %v1275 = vpack.c.bf16 %v1259, %v1257
    %v1276 = vpack.c.bf16 %v1260, %v1258
    %v1277 = vld [vmem:[#allocation7 + $0x20] sm:$0xff]
    %v1278 = vld [vmem:[#allocation7 + $0x28] sm:$0xff]
    %v1279 = vld [vmem:[#allocation7 + $0x30] sm:$0xf]
    %v1280 = vld [vmem:[#allocation7 + $0x7c] sm:$0xff]
    %v1281 = vld [vmem:[#allocation7 + $0x84] sm:$0xff]
    %v1282 = vld [vmem:[#allocation7 + $0x8c] sm:$0xf]
    %v1283 = vld [vmem:[#allocation7 + $0xd8] sm:$0xff]
    %v1284 = vld [vmem:[#allocation7 + $0xe0] sm:$0xff]
    %v1285 = vld [vmem:[#allocation7 + $0xe8] sm:$0xf]
    %v1286 = vld [vmem:[#allocation7 + $0x134] sm:$0xff]
    %v1287 = vld [vmem:[#allocation7 + $0x13c] sm:$0xff]
    %v1288 = vld [vmem:[#allocation7 + $0x144] sm:$0xf]
    %v1289 = vld [vmem:[#allocation7 + $0x190] sm:$0xff]
    %v1290 = vld [vmem:[#allocation7 + $0x198] sm:$0xff]
    %v1291 = vld [vmem:[#allocation7 + $0x1a0] sm:$0xf]
    %v1292 = vld [vmem:[#allocation7 + $0x1ec] sm:$0xff]
    %v1293 = vld [vmem:[#allocation7 + $0x1f4] sm:$0xff]
    %v1294 = vld [vmem:[#allocation7 + $0x1fc] sm:$0xf]
    %v1295 = vld [vmem:[#allocation7 + $0x248] sm:$0xff]
    %v1296 = vld [vmem:[#allocation7 + $0x250] sm:$0xff]
    %v1297 = vld [vmem:[#allocation7 + $0x258] sm:$0xf]
    %v1298 = vld [vmem:[#allocation7 + $0x2a4] sm:$0xff]
    %v1299 = vld [vmem:[#allocation7 + $0x2ac] sm:$0xff]
    %v1300 = vld [vmem:[#allocation7 + $0x2b4] sm:$0xf]
    %v1301 = vld [vmem:[#allocation7 + $0x300] sm:$0xff]
    %v1302 = vld [vmem:[#allocation7 + $0x308] sm:$0xff]
    %v1303 = vld [vmem:[#allocation7 + $0x310] sm:$0xf]
    %v1304 = vld [vmem:[#allocation7 + $0x35c] sm:$0xff]
    %v1305 = vld [vmem:[#allocation7 + $0x364] sm:$0xff]
    %v1306 = vld [vmem:[#allocation7 + $0x36c] sm:$0xf]
    %v1307 = vld [vmem:[#allocation7 + $0x3b8] sm:$0xff]
    %v1308 = vld [vmem:[#allocation7 + $0x3c0] sm:$0xff]
    %v1309 = vld [vmem:[#allocation7 + $0x3c8] sm:$0xf]
    %v1310 = vld [vmem:[#allocation7 + $0x414] sm:$0xff]
    %v1311 = vld [vmem:[#allocation7 + $0x41c] sm:$0xff]
    %v1312 = vld [vmem:[#allocation7 + $0x424] sm:$0xf]
    %v1313 = vld [vmem:[#allocation7 + $0x470] sm:$0xff]
    %v1314 = vld [vmem:[#allocation7 + $0x478] sm:$0xff]
    %v1315 = vld [vmem:[#allocation7 + $0x480] sm:$0xf]
    %v1316 = vld [vmem:[#allocation7 + $0x4cc] sm:$0xff]
    %v1317 = vld [vmem:[#allocation7 + $0x4d4] sm:$0xff]
    %v1318 = vld [vmem:[#allocation7 + $0x4dc] sm:$0xf]
    %v1319 = vld [vmem:[#allocation7 + $0x528] sm:$0xff]
    %v1320 = vld [vmem:[#allocation7 + $0x530] sm:$0xff]
    %v1321 = vld [vmem:[#allocation7 + $0x538] sm:$0xf]
    %v1322 = vld [vmem:[#allocation7 + $0x584] sm:$0xff]
    %v1323 = vld [vmem:[#allocation7 + $0x58c] sm:$0xff]
    %v1324 = vld [vmem:[#allocation7 + $0x594] sm:$0xf]
    %v1325 = vld [vmem:[#allocation7 + $0x5e0] sm:$0xff]
    %v1326 = vld [vmem:[#allocation7 + $0x5e8] sm:$0xff]
    %v1327 = vld [vmem:[#allocation7 + $0x5f0] sm:$0xf]
    %v1328 = vld [vmem:[#allocation7 + $0x63c] sm:$0xff]
    %v1329 = vld [vmem:[#allocation7 + $0x644] sm:$0xff]
    %v1330 = vld [vmem:[#allocation7 + $0x64c] sm:$0xf]
    %v1331 = vld [vmem:[#allocation7 + $0x698] sm:$0xff]
    %v1332 = vld [vmem:[#allocation7 + $0x6a0] sm:$0xff]
    %v1333 = vld [vmem:[#allocation7 + $0x6a8] sm:$0xf]
    %v1334 = vld [vmem:[#allocation7 + $0x6f4] sm:$0xff]
    %v1335 = vld [vmem:[#allocation7 + $0x6fc] sm:$0xff]
    %v1336 = vld [vmem:[#allocation7 + $0x704] sm:$0xf]
    %v1337 = vld [vmem:[#allocation7 + $0x750] sm:$0xff]
    %v1338 = vld [vmem:[#allocation7 + $0x758] sm:$0xff]
    %v1339 = vld [vmem:[#allocation7 + $0x760] sm:$0xf]
    %v1340 = vld [vmem:[#allocation7 + $0x7ac] sm:$0xff]
    %v1341 = vld [vmem:[#allocation7 + $0x7b4] sm:$0xff]
    %v1342 = vld [vmem:[#allocation7 + $0x7bc] sm:$0xf]
    %v1343 = vld [vmem:[#allocation7 + $0x808] sm:$0xff]
    %v1344 = vld [vmem:[#allocation7 + $0x810] sm:$0xff]
    %v1345 = vld [vmem:[#allocation7 + $0x818] sm:$0xf]
    %v1346 = vld [vmem:[#allocation7 + $0x864] sm:$0xff]
    %v1347 = vld [vmem:[#allocation7 + $0x86c] sm:$0xff]
    %v1348 = vld [vmem:[#allocation7 + $0x874] sm:$0xf]
    %v1349 = vld [vmem:[#allocation7 + $0x8c0] sm:$0xff]
    %v1350 = vld [vmem:[#allocation7 + $0x8c8] sm:$0xff]
    %v1351 = vld [vmem:[#allocation7 + $0x8d0] sm:$0xf]
    %v1352 = vld [vmem:[#allocation7 + $0x91c] sm:$0xff]
    %v1353 = vld [vmem:[#allocation7 + $0x924] sm:$0xff]
    %v1354 = vld [vmem:[#allocation7 + $0x92c] sm:$0xf]
    %v1355 = vld [vmem:[#allocation7 + $0x978] sm:$0xff]
    %v1356 = vld [vmem:[#allocation7 + $0x980] sm:$0xff]
    %v1357 = vld [vmem:[#allocation7 + $0x988] sm:$0xf]
    %v1358 = vld [vmem:[#allocation7 + $0x9d4] sm:$0xff]
    %v1359 = vld [vmem:[#allocation7 + $0x9dc] sm:$0xff]
    %v1360 = vld [vmem:[#allocation7 + $0x9e4] sm:$0xf]
    %v1361 = vld [vmem:[#allocation7 + $0xa30] sm:$0xff]
    %v1362 = vld [vmem:[#allocation7 + $0xa38] sm:$0xff]
    %v1363 = vld [vmem:[#allocation7 + $0xa40] sm:$0xf]
    %v1364 = vld [vmem:[#allocation7 + $0xa8c] sm:$0xff]
    %v1365 = vld [vmem:[#allocation7 + $0xa94] sm:$0xff]
    %v1366 = vld [vmem:[#allocation7 + $0xa9c] sm:$0xf]
    %v1367 = vld [vmem:[#allocation7 + $0xae8] sm:$0xff]
    %v1368 = vld [vmem:[#allocation7 + $0xaf0] sm:$0xff]
    %v1369 = vld [vmem:[#allocation7 + $0xaf8] sm:$0xf]
    %v1370 = vld [vmem:[#allocation7 + $0xb44] sm:$0xff]
    %v1371 = vld [vmem:[#allocation7 + $0xb4c] sm:$0xff]
    %v1372 = vld [vmem:[#allocation7 + $0xb54] sm:$0xf]
    %v1373 = vld [vmem:[#allocation10 + $0x8] sm:$0x1f]
    %v1375 = vlaneseq
    %v1376 = vshrl.u32 %v1375, 7
    %v1377 = vsub.s32 0, %v1376
    %v1378 = vrot.slane %v1373, %v1377
    %v1379 = vlaneseq
    %v1380 = vshrl.u32 %v1379, 7
    %v1381 = vsub.s32 1, %v1380
    %v1382 = vrot.slane %v1373, %v1381
    %v1383 = vlaneseq
    %v1384 = vshrl.u32 %v1383, 7
    %v1385 = vsub.s32 2, %v1384
    %v1386 = vrot.slane %v1373, %v1385
    %v1387 = vlaneseq
    %v1388 = vshrl.u32 %v1387, 7
    %v1389 = vsub.s32 3, %v1388
    %v1390 = vrot.slane %v1373, %v1389
    %v1391 = vlaneseq
    %v1392 = vshrl.u32 %v1391, 7
    %v1393 = vsub.s32 4, %v1392
    %v1394 = vrot.slane %v1373, %v1393
    %v1496 = vunpack.c.l.b16 %v1277
    %v1497 = vunpack.c.h.b16 %v1277
    %v1498 = vunpack.c.l.b16 %v1278
    %v1499 = vunpack.c.h.b16 %v1278
    %v1500 = vunpack.c.l.b16 %v1279
    %v1501 = vunpack.c.l.b16 %v1280
    %v1502 = vunpack.c.h.b16 %v1280
    %v1503 = vunpack.c.l.b16 %v1281
    %v1504 = vunpack.c.h.b16 %v1281
    %v1505 = vunpack.c.l.b16 %v1282
    %v1506 = vunpack.c.l.b16 %v1283
    %v1507 = vunpack.c.h.b16 %v1283
    %v1508 = vunpack.c.l.b16 %v1284
    %v1509 = vunpack.c.h.b16 %v1284
    %v1510 = vunpack.c.l.b16 %v1285
    %v1511 = vunpack.c.l.b16 %v1286
    %v1512 = vunpack.c.h.b16 %v1286
    %v1513 = vunpack.c.l.b16 %v1287
    %v1514 = vunpack.c.h.b16 %v1287
    %v1515 = vunpack.c.l.b16 %v1288
    %v1516 = vunpack.c.l.b16 %v1289
    %v1517 = vunpack.c.h.b16 %v1289
    %v1518 = vunpack.c.l.b16 %v1290
    %v1519 = vunpack.c.h.b16 %v1290
    %v1520 = vunpack.c.l.b16 %v1291
    %v1521 = vunpack.c.l.b16 %v1292
    %v1522 = vunpack.c.h.b16 %v1292
    %v1523 = vunpack.c.l.b16 %v1293
    %v1524 = vunpack.c.h.b16 %v1293
    %v1525 = vunpack.c.l.b16 %v1294
    %v1526 = vunpack.c.l.b16 %v1295
    %v1527 = vunpack.c.h.b16 %v1295
    %v1528 = vunpack.c.l.b16 %v1296
    %v1529 = vunpack.c.h.b16 %v1296
    %v1530 = vunpack.c.l.b16 %v1297
    %v1531 = vunpack.c.l.b16 %v1298
    %v1532 = vunpack.c.h.b16 %v1298
    %v1533 = vunpack.c.l.b16 %v1299
    %v1534 = vunpack.c.h.b16 %v1299
    %v1535 = vunpack.c.l.b16 %v1300
    %v1536 = vunpack.c.l.b16 %v1301
    %v1537 = vunpack.c.h.b16 %v1301
    %v1538 = vunpack.c.l.b16 %v1302
    %v1539 = vunpack.c.h.b16 %v1302
    %v1540 = vunpack.c.l.b16 %v1303
    %v1541 = vunpack.c.l.b16 %v1304
    %v1542 = vunpack.c.h.b16 %v1304
    %v1543 = vunpack.c.l.b16 %v1305
    %v1544 = vunpack.c.h.b16 %v1305
    %v1545 = vunpack.c.l.b16 %v1306
    %v1546 = vunpack.c.l.b16 %v1307
    %v1547 = vunpack.c.h.b16 %v1307
    %v1548 = vunpack.c.l.b16 %v1308
    %v1549 = vunpack.c.h.b16 %v1308
    %v1550 = vunpack.c.l.b16 %v1309
    %v1551 = vunpack.c.l.b16 %v1310
    %v1552 = vunpack.c.h.b16 %v1310
    %v1553 = vunpack.c.l.b16 %v1311
    %v1554 = vunpack.c.h.b16 %v1311
    %v1555 = vunpack.c.l.b16 %v1312
    %v1556 = vunpack.c.l.b16 %v1313
    %v1557 = vunpack.c.h.b16 %v1313
    %v1558 = vunpack.c.l.b16 %v1314
    %v1559 = vunpack.c.h.b16 %v1314
    %v1560 = vunpack.c.l.b16 %v1315
    %v1561 = vunpack.c.l.b16 %v1316
    %v1562 = vunpack.c.h.b16 %v1316
    %v1563 = vunpack.c.l.b16 %v1317
    %v1564 = vunpack.c.h.b16 %v1317
    %v1565 = vunpack.c.l.b16 %v1318
    %v1566 = vunpack.c.l.b16 %v1319
    %v1567 = vunpack.c.h.b16 %v1319
    %v1568 = vunpack.c.l.b16 %v1320
    %v1569 = vunpack.c.h.b16 %v1320
    %v1570 = vunpack.c.l.b16 %v1321
    %v1571 = vunpack.c.l.b16 %v1322
    %v1572 = vunpack.c.h.b16 %v1322
    %v1573 = vunpack.c.l.b16 %v1323
    %v1574 = vunpack.c.h.b16 %v1323
    %v1575 = vunpack.c.l.b16 %v1324
    %v1576 = vunpack.c.l.b16 %v1325
    %v1577 = vunpack.c.h.b16 %v1325
    %v1578 = vunpack.c.l.b16 %v1326
    %v1579 = vunpack.c.h.b16 %v1326
    %v1580 = vunpack.c.l.b16 %v1327
    %v1581 = vunpack.c.l.b16 %v1328
    %v1582 = vunpack.c.h.b16 %v1328
    %v1583 = vunpack.c.l.b16 %v1329
    %v1584 = vunpack.c.h.b16 %v1329
    %v1585 = vunpack.c.l.b16 %v1330
    %v1586 = vunpack.c.l.b16 %v1331
    %v1587 = vunpack.c.h.b16 %v1331
    %v1588 = vunpack.c.l.b16 %v1332
    %v1589 = vunpack.c.h.b16 %v1332
    %v1590 = vunpack.c.l.b16 %v1333
    %v1591 = vunpack.c.l.b16 %v1334
    %v1592 = vunpack.c.h.b16 %v1334
    %v1593 = vunpack.c.l.b16 %v1335
    %v1594 = vunpack.c.h.b16 %v1335
    %v1595 = vunpack.c.l.b16 %v1336
    %v1596 = vunpack.c.l.b16 %v1337
    %v1597 = vunpack.c.h.b16 %v1337
    %v1598 = vunpack.c.l.b16 %v1338
    %v1599 = vunpack.c.h.b16 %v1338
    %v1600 = vunpack.c.l.b16 %v1339
    %v1601 = vunpack.c.l.b16 %v1340
    %v1602 = vunpack.c.h.b16 %v1340
    %v1603 = vunpack.c.l.b16 %v1341
    %v1604 = vunpack.c.h.b16 %v1341
    %v1605 = vunpack.c.l.b16 %v1342
    %v1606 = vunpack.c.l.b16 %v1343
    %v1607 = vunpack.c.h.b16 %v1343
    %v1608 = vunpack.c.l.b16 %v1344
    %v1609 = vunpack.c.h.b16 %v1344
    %v1610 = vunpack.c.l.b16 %v1345
    %v1611 = vunpack.c.l.b16 %v1346
    %v1612 = vunpack.c.h.b16 %v1346
    %v1613 = vunpack.c.l.b16 %v1347
    %v1614 = vunpack.c.h.b16 %v1347
    %v1615 = vunpack.c.l.b16 %v1348
    %v1616 = vunpack.c.l.b16 %v1349
    %v1617 = vunpack.c.h.b16 %v1349
    %v1618 = vunpack.c.l.b16 %v1350
    %v1619 = vunpack.c.h.b16 %v1350
    %v1620 = vunpack.c.l.b16 %v1351
    %v1621 = vunpack.c.l.b16 %v1352
    %v1622 = vunpack.c.h.b16 %v1352
    %v1623 = vunpack.c.l.b16 %v1353
    %v1624 = vunpack.c.h.b16 %v1353
    %v1625 = vunpack.c.l.b16 %v1354
    %v1626 = vunpack.c.l.b16 %v1355
    %v1627 = vunpack.c.h.b16 %v1355
    %v1628 = vunpack.c.l.b16 %v1356
    %v1629 = vunpack.c.h.b16 %v1356
    %v1630 = vunpack.c.l.b16 %v1357
    %v1631 = vunpack.c.l.b16 %v1358
    %v1632 = vunpack.c.h.b16 %v1358
    %v1633 = vunpack.c.l.b16 %v1359
    %v1634 = vunpack.c.h.b16 %v1359
    %v1635 = vunpack.c.l.b16 %v1360
    %v1636 = vunpack.c.l.b16 %v1361
    %v1637 = vunpack.c.h.b16 %v1361
    %v1638 = vunpack.c.l.b16 %v1362
    %v1639 = vunpack.c.h.b16 %v1362
    %v1640 = vunpack.c.l.b16 %v1363
    %v1641 = vunpack.c.l.b16 %v1364
    %v1642 = vunpack.c.h.b16 %v1364
    %v1643 = vunpack.c.l.b16 %v1365
    %v1644 = vunpack.c.h.b16 %v1365
    %v1645 = vunpack.c.l.b16 %v1366
    %v1646 = vunpack.c.l.b16 %v1367
    %v1647 = vunpack.c.h.b16 %v1367
    %v1648 = vunpack.c.l.b16 %v1368
    %v1649 = vunpack.c.h.b16 %v1368
    %v1650 = vunpack.c.l.b16 %v1369
    %v1651 = vunpack.c.l.b16 %v1370
    %v1652 = vunpack.c.h.b16 %v1370
    %v1653 = vunpack.c.l.b16 %v1371
    %v1654 = vunpack.c.h.b16 %v1371
    %v1655 = vunpack.c.l.b16 %v1372
    %v1656 = vpack.c.b16 %v1501, %v1496
    %v1657 = vpack.c.b16 %v1502, %v1497
    %v1658 = vpack.c.b16 %v1503, %v1498
    %v1659 = vpack.c.b16 %v1504, %v1499
    %v1660 = vpack.c.b16 %v1505, %v1500
    %v1661 = vpack.c.b16 %v1511, %v1506
    %v1662 = vpack.c.b16 %v1512, %v1507
    %v1663 = vpack.c.b16 %v1513, %v1508
    %v1664 = vpack.c.b16 %v1514, %v1509
    %v1665 = vpack.c.b16 %v1515, %v1510
    %v1666 = vpack.c.b16 %v1521, %v1516
    %v1667 = vpack.c.b16 %v1522, %v1517
    %v1668 = vpack.c.b16 %v1523, %v1518
    %v1669 = vpack.c.b16 %v1524, %v1519
    %v1670 = vpack.c.b16 %v1525, %v1520
    %v1671 = vpack.c.b16 %v1531, %v1526
    %v1672 = vpack.c.b16 %v1532, %v1527
    %v1673 = vpack.c.b16 %v1533, %v1528
    %v1674 = vpack.c.b16 %v1534, %v1529
    %v1675 = vpack.c.b16 %v1535, %v1530
    %v1676 = vpack.c.b16 %v1541, %v1536
    %v1677 = vpack.c.b16 %v1542, %v1537
    %v1678 = vpack.c.b16 %v1543, %v1538
    %v1679 = vpack.c.b16 %v1544, %v1539
    %v1680 = vpack.c.b16 %v1545, %v1540
    %v1681 = vpack.c.b16 %v1551, %v1546
    %v1682 = vpack.c.b16 %v1552, %v1547
    %v1683 = vpack.c.b16 %v1553, %v1548
    %v1684 = vpack.c.b16 %v1554, %v1549
    %v1685 = vpack.c.b16 %v1555, %v1550
    %v1686 = vpack.c.b16 %v1561, %v1556
    %v1687 = vpack.c.b16 %v1562, %v1557
    %v1688 = vpack.c.b16 %v1563, %v1558
    %v1689 = vpack.c.b16 %v1564, %v1559
    %v1690 = vpack.c.b16 %v1565, %v1560
    %v1691 = vpack.c.b16 %v1571, %v1566
    %v1692 = vpack.c.b16 %v1572, %v1567
    %v1693 = vpack.c.b16 %v1573, %v1568
    %v1694 = vpack.c.b16 %v1574, %v1569
    %v1695 = vpack.c.b16 %v1575, %v1570
    %v1696 = vpack.c.b16 %v1581, %v1576
    %v1697 = vpack.c.b16 %v1582, %v1577
    %v1698 = vpack.c.b16 %v1583, %v1578
    %v1699 = vpack.c.b16 %v1584, %v1579
    %v1700 = vpack.c.b16 %v1585, %v1580
    %v1701 = vpack.c.b16 %v1591, %v1586
    %v1702 = vpack.c.b16 %v1592, %v1587
    %v1703 = vpack.c.b16 %v1593, %v1588
    %v1704 = vpack.c.b16 %v1594, %v1589
    %v1705 = vpack.c.b16 %v1595, %v1590
    %v1706 = vpack.c.b16 %v1601, %v1596
    %v1707 = vpack.c.b16 %v1602, %v1597
    %v1708 = vpack.c.b16 %v1603, %v1598
    %v1709 = vpack.c.b16 %v1604, %v1599
    %v1710 = vpack.c.b16 %v1605, %v1600
    %v1711 = vpack.c.b16 %v1611, %v1606
    %v1712 = vpack.c.b16 %v1612, %v1607
    %v1713 = vpack.c.b16 %v1613, %v1608
    %v1714 = vpack.c.b16 %v1614, %v1609
    %v1715 = vpack.c.b16 %v1615, %v1610
    %v1716 = vpack.c.b16 %v1621, %v1616
    %v1717 = vpack.c.b16 %v1622, %v1617
    %v1718 = vpack.c.b16 %v1623, %v1618
    %v1719 = vpack.c.b16 %v1624, %v1619
    %v1720 = vpack.c.b16 %v1625, %v1620
    %v1721 = vpack.c.b16 %v1631, %v1626
    %v1722 = vpack.c.b16 %v1632, %v1627
    %v1723 = vpack.c.b16 %v1633, %v1628
    %v1724 = vpack.c.b16 %v1634, %v1629
    %v1725 = vpack.c.b16 %v1635, %v1630
    %v1726 = vpack.c.b16 %v1641, %v1636
    %v1727 = vpack.c.b16 %v1642, %v1637
    %v1728 = vpack.c.b16 %v1643, %v1638
    %v1729 = vpack.c.b16 %v1644, %v1639
    %v1730 = vpack.c.b16 %v1645, %v1640
    %v1731 = vpack.c.b16 %v1651, %v1646
    %v1732 = vpack.c.b16 %v1652, %v1647
    %v1733 = vpack.c.b16 %v1653, %v1648
    %v1734 = vpack.c.b16 %v1654, %v1649
    %v1735 = vpack.c.b16 %v1655, %v1650
    %1816 = vmatprep.subr.bf16.mxu0 %v1657
    %1817 = vmatpush1.bf16.msra.mxu0 %v1656
    %1818 = vmatprep.subr.bf16.mxu0 %v1662
    %1819 = vmatpush1.bf16.msra.mxu0 %v1661
    %1820 = vmatprep.subr.bf16.mxu0 %v1667
    %1821 = vmatpush1.bf16.msra.mxu0 %v1666
    %1822 = vmatprep.subr.bf16.mxu0 %v1672
    %1823 = vmatpush1.bf16.msra.mxu0 %v1671
    %1824 = vmatprep.subr.bf16.mxu0 %v1677
    %1825 = vmatpush1.bf16.msra.mxu0 %v1676
    %1826 = vmatprep.subr.bf16.mxu0 %v1682
    %1827 = vmatpush1.bf16.msra.mxu0 %v1681
    %1828 = vmatprep.subr.bf16.mxu0 %v1687
    %1829 = vmatpush1.bf16.msra.mxu0 %v1686
    %1830 = vmatprep.subr.bf16.mxu0 %v1692
    %1831 = vmatpush1.bf16.msra.mxu0 %v1691
    %1832 = vmatprep.subr.bf16.mxu0 %v1697
    %1833 = vmatpush1.bf16.msra.mxu0 %v1696
    %1834 = vmatprep.subr.bf16.mxu0 %v1702
    %1835 = vmatpush1.bf16.msra.mxu0 %v1701
    %1836 = vmatprep.subr.bf16.mxu0 %v1707
    %1837 = vmatpush1.bf16.msra.mxu0 %v1706
    %1838 = vmatprep.subr.bf16.mxu0 %v1712
    %1839 = vmatpush1.bf16.msra.mxu0 %v1711
    %1840 = vmatprep.subr.bf16.mxu0 %v1717
    %1841 = vmatpush1.bf16.msra.mxu0 %v1716
    %1842 = vmatprep.subr.bf16.mxu0 %v1722
    %1843 = vmatpush1.bf16.msra.mxu0 %v1721
    %1844 = vmatprep.subr.bf16.mxu0 %v1727
    %1845 = vmatpush1.bf16.msra.mxu0 %v1726
    %1846 = vmatprep.subr.bf16.mxu0 %v1732
    %1847 = vmatpush1.bf16.msra.mxu0 %v1731
    %1848 = vmatprep.mubr.bf16.mxu0 %v1262
    %1849 = vmatmul.mubr.bf16.gmra.mrb[0].mxu0 %v1261
    %v1850 = vpop.f32.mrb[0].mxu0
    %v1851 = vadd.f32 %v1378, %v1850
    %v1852 = vpop.f32.mrb[0].mxu0
    %v1853 = vadd.f32 %v1382, %v1852
    %v1854 = vpop.f32.mrb[0].mxu0
    %v1855 = vadd.f32 %v1378, %v1854
    %v1856 = vpop.f32.mrb[0].mxu0
    %v1857 = vadd.f32 %v1382, %v1856
    %1858 = vmatprep.mubr.bf16.mxu0 %v1264
    %1859 = vmatmul.mubr.bf16.gmra.mrb[0].mxu0 %v1263
    %v1860 = vpop.f32.mrb[0].mxu0
    %v1861 = vadd.f32 %v1378, %v1860
    %v1862 = vpop.f32.mrb[0].mxu0
    %v1863 = vadd.f32 %v1382, %v1862
    %v1864 = vpop.f32.mrb[0].mxu0
    %v1865 = vadd.f32 %v1378, %v1864
    %v1866 = vpop.f32.mrb[0].mxu0
    %v1867 = vadd.f32 %v1382, %v1866
    %1868 = vmatprep.mubr.bf16.mxu0 %v1266
    %1869 = vmatmul.mubr.bf16.gmra.mrb[0].mxu0 %v1265
    %v1870 = vpop.f32.mrb[0].mxu0
    %v1871 = vadd.f32 %v1378, %v1870
    %v1872 = vpop.f32.mrb[0].mxu0
    %v1873 = vadd.f32 %v1382, %v1872
    %v1874 = vpop.f32.mrb[0].mxu0
    %v1875 = vadd.f32 %v1378, %v1874
    %v1876 = vpop.f32.mrb[0].mxu0
    %v1877 = vadd.f32 %v1382, %v1876
    %1878 = vmatprep.mubr.bf16.mxu0 %v1268
    %1879 = vmatmul.mubr.bf16.gmra.mrb[0].mxu0 %v1267
    %v1880 = vpop.f32.mrb[0].mxu0
    %v1881 = vadd.f32 %v1378, %v1880
    %v1882 = vpop.f32.mrb[0].mxu0
    %v1883 = vadd.f32 %v1382, %v1882
    %v1884 = vpop.f32.mrb[0].mxu0
    %v1885 = vadd.f32 %v1378, %v1884
    %v1886 = vpop.f32.mrb[0].mxu0
    %v1887 = vadd.f32 %v1382, %v1886
    %1888 = vmatprep.mubr.bf16.mxu0 %v1270
    %1889 = vmatmul.mubr.bf16.gmra.mrb[0].mxu0 %v1269
    %v1890 = vpop.f32.mrb[0].mxu0
    %v1891 = vadd.f32 %v1378, %v1890
    %v1892 = vpop.f32.mrb[0].mxu0
    %v1893 = vadd.f32 %v1382, %v1892
    %v1894 = vpop.f32.mrb[0].mxu0
    %v1895 = vadd.f32 %v1378, %v1894
    %v1896 = vpop.f32.mrb[0].mxu0
    %v1897 = vadd.f32 %v1382, %v1896
    %1898 = vmatprep.mubr.bf16.mxu0 %v1272
    %1899 = vmatmul.mubr.bf16.gmra.mrb[0].mxu0 %v1271
    %v1900 = vpop.f32.mrb[0].mxu0
    %v1901 = vadd.f32 %v1378, %v1900
    %v1902 = vpop.f32.mrb[0].mxu0
    %v1903 = vadd.f32 %v1382, %v1902
    %v1904 = vpop.f32.mrb[0].mxu0
    %v1905 = vadd.f32 %v1378, %v1904
    %v1906 = vpop.f32.mrb[0].mxu0
    %v1907 = vadd.f32 %v1382, %v1906
    %1908 = vmatprep.mubr.bf16.mxu0 %v1274
    %1909 = vmatmul.mubr.bf16.gmra.mrb[0].mxu0 %v1273
    %v1910 = vpop.f32.mrb[0].mxu0
    %v1911 = vadd.f32 %v1378, %v1910
    %v1912 = vpop.f32.mrb[0].mxu0
    %v1913 = vadd.f32 %v1382, %v1912
    %v1914 = vpop.f32.mrb[0].mxu0
    %v1915 = vadd.f32 %v1378, %v1914
    %v1916 = vpop.f32.mrb[0].mxu0
    %v1917 = vadd.f32 %v1382, %v1916
    %1918 = vmatprep.mubr.bf16.mxu0 %v1276
    %1919 = vmatmul.mubr.bf16.gmra.mrb[0].mxu0 %v1275
    %v1920 = vpop.f32.mrb[0].mxu0
    %v1921 = vadd.f32 %v1378, %v1920
    %v1922 = vpop.f32.mrb[0].mxu0
    %v1923 = vadd.f32 %v1382, %v1922
    %v1924 = vpop.f32.mrb[0].mxu0
    %v1925 = vadd.f32 %v1378, %v1924
    %v1926 = vpop.f32.mrb[0].mxu0
    %v1927 = vadd.f32 %v1382, %v1926
    %1928 = vdwg.mxu0
    %1929 = vmatprep.subr.bf16.mxu0 %v1659
    %1930 = vmatpush1.bf16.msra.mxu0 %v1658
    %1931 = vmatprep.subr.bf16.mxu0 %v1664
    %1932 = vmatpush1.bf16.msra.mxu0 %v1663
    %1933 = vmatprep.subr.bf16.mxu0 %v1669
    %1934 = vmatpush1.bf16.msra.mxu0 %v1668
    %1935 = vmatprep.subr.bf16.mxu0 %v1674
    %1936 = vmatpush1.bf16.msra.mxu0 %v1673
    %1937 = vmatprep.subr.bf16.mxu0 %v1679
    %1938 = vmatpush1.bf16.msra.mxu0 %v1678
    %1939 = vmatprep.subr.bf16.mxu0 %v1684
    %1940 = vmatpush1.bf16.msra.mxu0 %v1683
    %1941 = vmatprep.subr.bf16.mxu0 %v1689
    %1942 = vmatpush1.bf16.msra.mxu0 %v1688
    %1943 = vmatprep.subr.bf16.mxu0 %v1694
    %1944 = vmatpush1.bf16.msra.mxu0 %v1693
    %1945 = vmatprep.subr.bf16.mxu0 %v1699
    %1946 = vmatpush1.bf16.msra.mxu0 %v1698
    %1947 = vmatprep.subr.bf16.mxu0 %v1704
    %1948 = vmatpush1.bf16.msra.mxu0 %v1703
    %1949 = vmatprep.subr.bf16.mxu0 %v1709
    %1950 = vmatpush1.bf16.msra.mxu0 %v1708
    %1951 = vmatprep.subr.bf16.mxu0 %v1714
    %1952 = vmatpush1.bf16.msra.mxu0 %v1713
    %1953 = vmatprep.subr.bf16.mxu0 %v1719
    %1954 = vmatpush1.bf16.msra.mxu0 %v1718
    %1955 = vmatprep.subr.bf16.mxu0 %v1724
    %1956 = vmatpush1.bf16.msra.mxu0 %v1723
    %1957 = vmatprep.subr.bf16.mxu0 %v1729
    %1958 = vmatpush1.bf16.msra.mxu0 %v1728
    %1959 = vmatprep.subr.bf16.mxu0 %v1734
    %1960 = vmatpush1.bf16.msra.mxu0 %v1733
    %1961 = vmatprep.mubr.bf16.mxu0 %v1262
    %1962 = vmatmul.mubr.bf16.gmra.mrb[0].mxu0 %v1261
    %v1963 = vpop.f32.mrb[0].mxu0
    %v1964 = vadd.f32 %v1386, %v1963
    %v1965 = vpop.f32.mrb[0].mxu0
    %v1966 = vadd.f32 %v1390, %v1965
    %v1967 = vpop.f32.mrb[0].mxu0
    %v1968 = vadd.f32 %v1386, %v1967
    %v1969 = vpop.f32.mrb[0].mxu0
    %v1970 = vadd.f32 %v1390, %v1969
    %1971 = vmatprep.mubr.bf16.mxu0 %v1264
    %1972 = vmatmul.mubr.bf16.gmra.mrb[0].mxu0 %v1263
    %v1973 = vpop.f32.mrb[0].mxu0
    %v1974 = vadd.f32 %v1386, %v1973
    %v1975 = vpop.f32.mrb[0].mxu0
    %v1976 = vadd.f32 %v1390, %v1975
    %v1977 = vpop.f32.mrb[0].mxu0
    %v1978 = vadd.f32 %v1386, %v1977
    %v1979 = vpop.f32.mrb[0].mxu0
    %v1980 = vadd.f32 %v1390, %v1979
    %1981 = vmatprep.mubr.bf16.mxu0 %v1266
    %1982 = vmatmul.mubr.bf16.gmra.mrb[0].mxu0 %v1265
    %v1983 = vpop.f32.mrb[0].mxu0
    %v1984 = vadd.f32 %v1386, %v1983
    %v1985 = vpop.f32.mrb[0].mxu0
    %v1986 = vadd.f32 %v1390, %v1985
    %v1987 = vpop.f32.mrb[0].mxu0
    %v1988 = vadd.f32 %v1386, %v1987
    %v1989 = vpop.f32.mrb[0].mxu0
    %v1990 = vadd.f32 %v1390, %v1989
    %1991 = vmatprep.mubr.bf16.mxu0 %v1268
    %1992 = vmatmul.mubr.bf16.gmra.mrb[0].mxu0 %v1267
    %v1993 = vpop.f32.mrb[0].mxu0
    %v1994 = vadd.f32 %v1386, %v1993
    %v1995 = vpop.f32.mrb[0].mxu0
    %v1996 = vadd.f32 %v1390, %v1995
    %v1997 = vpop.f32.mrb[0].mxu0
    %v1998 = vadd.f32 %v1386, %v1997
    %v1999 = vpop.f32.mrb[0].mxu0
    %v2000 = vadd.f32 %v1390, %v1999
    %2001 = vmatprep.mubr.bf16.mxu0 %v1270
    %2002 = vmatmul.mubr.bf16.gmra.mrb[0].mxu0 %v1269
    %v2003 = vpop.f32.mrb[0].mxu0
    %v2004 = vadd.f32 %v1386, %v2003
    %v2005 = vpop.f32.mrb[0].mxu0
    %v2006 = vadd.f32 %v1390, %v2005
    %v2007 = vpop.f32.mrb[0].mxu0
    %v2008 = vadd.f32 %v1386, %v2007
    %v2009 = vpop.f32.mrb[0].mxu0
    %v2010 = vadd.f32 %v1390, %v2009
    %2011 = vmatprep.mubr.bf16.mxu0 %v1272
    %2012 = vmatmul.mubr.bf16.gmra.mrb[0].mxu0 %v1271
    %v2013 = vpop.f32.mrb[0].mxu0
    %v2014 = vadd.f32 %v1386, %v2013
    %v2015 = vpop.f32.mrb[0].mxu0
    %v2016 = vadd.f32 %v1390, %v2015
    %v2017 = vpop.f32.mrb[0].mxu0
    %v2018 = vadd.f32 %v1386, %v2017
    %v2019 = vpop.f32.mrb[0].mxu0
    %v2020 = vadd.f32 %v1390, %v2019
    %2021 = vmatprep.mubr.bf16.mxu0 %v1274
    %2022 = vmatmul.mubr.bf16.gmra.mrb[0].mxu0 %v1273
    %v2023 = vpop.f32.mrb[0].mxu0
    %v2024 = vadd.f32 %v1386, %v2023
    %v2025 = vpop.f32.mrb[0].mxu0
    %v2026 = vadd.f32 %v1390, %v2025
    %v2027 = vpop.f32.mrb[0].mxu0
    %v2028 = vadd.f32 %v1386, %v2027
    %v2029 = vpop.f32.mrb[0].mxu0
    %v2030 = vadd.f32 %v1390, %v2029
    %2031 = vmatprep.mubr.bf16.mxu0 %v1276
    %2032 = vmatmul.mubr.bf16.gmra.mrb[0].mxu0 %v1275
    %v2033 = vpop.f32.mrb[0].mxu0
    %v2034 = vadd.f32 %v1386, %v2033
    %v2035 = vpop.f32.mrb[0].mxu0
    %v2036 = vadd.f32 %v1390, %v2035
    %v2037 = vpop.f32.mrb[0].mxu0
    %v2038 = vadd.f32 %v1386, %v2037
    %v2039 = vpop.f32.mrb[0].mxu0
    %v2040 = vadd.f32 %v1390, %v2039
    %2041 = vdwg.mxu0
    %2042 = vmatprep.subr.bf16.mxu0 0
    %2043 = vmatpush1.bf16.msra.mxu0 %v1660
    %2044 = vmatprep.subr.bf16.mxu0 0
    %2045 = vmatpush1.bf16.msra.mxu0 %v1665
    %2046 = vmatprep.subr.bf16.mxu0 0
    %2047 = vmatpush1.bf16.msra.mxu0 %v1670
    %2048 = vmatprep.subr.bf16.mxu0 0
    %2049 = vmatpush1.bf16.msra.mxu0 %v1675
    %2050 = vmatprep.subr.bf16.mxu0 0
    %2051 = vmatpush1.bf16.msra.mxu0 %v1680
    %2052 = vmatprep.subr.bf16.mxu0 0
    %2053 = vmatpush1.bf16.msra.mxu0 %v1685
    %2054 = vmatprep.subr.bf16.mxu0 0
    %2055 = vmatpush1.bf16.msra.mxu0 %v1690
    %2056 = vmatprep.subr.bf16.mxu0 0
    %2057 = vmatpush1.bf16.msra.mxu0 %v1695
    %2058 = vmatprep.subr.bf16.mxu0 0
    %2059 = vmatpush1.bf16.msra.mxu0 %v1700
    %2060 = vmatprep.subr.bf16.mxu0 0
    %2061 = vmatpush1.bf16.msra.mxu0 %v1705
    %2062 = vmatprep.subr.bf16.mxu0 0
    %2063 = vmatpush1.bf16.msra.mxu0 %v1710
    %2064 = vmatprep.subr.bf16.mxu0 0
    %2065 = vmatpush1.bf16.msra.mxu0 %v1715
    %2066 = vmatprep.subr.bf16.mxu0 0
    %2067 = vmatpush1.bf16.msra.mxu0 %v1720
    %2068 = vmatprep.subr.bf16.mxu0 0
    %2069 = vmatpush1.bf16.msra.mxu0 %v1725
    %2070 = vmatprep.subr.bf16.mxu0 0
    %2071 = vmatpush1.bf16.msra.mxu0 %v1730
    %2072 = vmatprep.subr.bf16.mxu0 0
    %2073 = vmatpush1.bf16.msra.mxu0 %v1735
    %2074 = vmatprep.mubr.bf16.mxu0 %v1262
    %2075 = vmatmul.mubr.bf16.gmra.mrb[0].mxu0 %v1261
    %v2076 = vpop.f32.mrb[0].mxu0
    %v2077 = vadd.f32 %v1394, %v2076
    %v2078 = vpop.f32.mrb[0].mxu0
    %v2079 = vpop.f32.mrb[0].mxu0
    %v2080 = vadd.f32 %v1394, %v2079
    %v2081 = vpop.f32.mrb[0].mxu0
    %2082 = vmatprep.mubr.bf16.mxu0 %v1264
    %2083 = vmatmul.mubr.bf16.gmra.mrb[0].mxu0 %v1263
    %v2084 = vpop.f32.mrb[0].mxu0
    %v2085 = vadd.f32 %v1394, %v2084
    %v2086 = vpop.f32.mrb[0].mxu0
    %v2087 = vpop.f32.mrb[0].mxu0
    %v2088 = vadd.f32 %v1394, %v2087
    %v2089 = vpop.f32.mrb[0].mxu0
    %2090 = vmatprep.mubr.bf16.mxu0 %v1266
    %2091 = vmatmul.mubr.bf16.gmra.mrb[0].mxu0 %v1265
    %v2092 = vpop.f32.mrb[0].mxu0
    %v2093 = vadd.f32 %v1394, %v2092
    %v2094 = vpop.f32.mrb[0].mxu0
    %v2095 = vpop.f32.mrb[0].mxu0
    %v2096 = vadd.f32 %v1394, %v2095
    %v2097 = vpop.f32.mrb[0].mxu0
    %2098 = vmatprep.mubr.bf16.mxu0 %v1268
    %2099 = vmatmul.mubr.bf16.gmra.mrb[0].mxu0 %v1267
    %v2100 = vpop.f32.mrb[0].mxu0
    %v2101 = vadd.f32 %v1394, %v2100
    %v2102 = vpop.f32.mrb[0].mxu0
    %v2103 = vpop.f32.mrb[0].mxu0
    %v2104 = vadd.f32 %v1394, %v2103
    %v2105 = vpop.f32.mrb[0].mxu0
    %2106 = vmatprep.mubr.bf16.mxu0 %v1270
    %2107 = vmatmul.mubr.bf16.gmra.mrb[0].mxu0 %v1269
    %v2108 = vpop.f32.mrb[0].mxu0
    %v2109 = vadd.f32 %v1394, %v2108
    %v2110 = vpop.f32.mrb[0].mxu0
    %v2111 = vpop.f32.mrb[0].mxu0
    %v2112 = vadd.f32 %v1394, %v2111
    %v2113 = vpop.f32.mrb[0].mxu0
    %2114 = vmatprep.mubr.bf16.mxu0 %v1272
    %2115 = vmatmul.mubr.bf16.gmra.mrb[0].mxu0 %v1271
    %v2116 = vpop.f32.mrb[0].mxu0
    %v2117 = vadd.f32 %v1394, %v2116
    %v2118 = vpop.f32.mrb[0].mxu0
    %v2119 = vpop.f32.mrb[0].mxu0
    %v2120 = vadd.f32 %v1394, %v2119
    %v2121 = vpop.f32.mrb[0].mxu0
    %2122 = vmatprep.mubr.bf16.mxu0 %v1274
    %2123 = vmatmul.mubr.bf16.gmra.mrb[0].mxu0 %v1273
    %v2124 = vpop.f32.mrb[0].mxu0
    %v2125 = vadd.f32 %v1394, %v2124
    %v2126 = vpop.f32.mrb[0].mxu0
    %v2127 = vpop.f32.mrb[0].mxu0
    %v2128 = vadd.f32 %v1394, %v2127
    %v2129 = vpop.f32.mrb[0].mxu0
    %2130 = vmatprep.mubr.bf16.mxu0 %v1276
    %2131 = vmatmul.mubr.bf16.gmra.mrb[0].mxu0 %v1275
    %v2132 = vpop.f32.mrb[0].mxu0
    %v2133 = vadd.f32 %v1394, %v2132
    %v2134 = vpop.f32.mrb[0].mxu0
    %v2135 = vpop.f32.mrb[0].mxu0
    %v2136 = vadd.f32 %v1394, %v2135
    %v2137 = vpop.f32.mrb[0].mxu0
    %2138 = vdwg.mxu0
    %v2139 = vmax.f32 %v1851, 0.0
    %v2140 = vmax.f32 %v1853, 0.0
    %v2141 = vmax.f32 %v1964, 0.0
    %v2142 = vmax.f32 %v1966, 0.0
    %v2143 = vmax.f32 %v2077, 0.0
    %v2144 = vmax.f32 %v1855, 0.0
    %v2145 = vmax.f32 %v1857, 0.0
    %v2146 = vmax.f32 %v1968, 0.0
    %v2147 = vmax.f32 %v1970, 0.0
    %v2148 = vmax.f32 %v2080, 0.0
    %v2149 = vmax.f32 %v1861, 0.0
    %v2150 = vmax.f32 %v1863, 0.0
    %v2151 = vmax.f32 %v1974, 0.0
    %v2152 = vmax.f32 %v1976, 0.0
    %v2153 = vmax.f32 %v2085, 0.0
    %v2154 = vmax.f32 %v1865, 0.0
    %v2155 = vmax.f32 %v1867, 0.0
    %v2156 = vmax.f32 %v1978, 0.0
    %v2157 = vmax.f32 %v1980, 0.0
    %v2158 = vmax.f32 %v2088, 0.0
    %v2159 = vmax.f32 %v1871, 0.0
    %v2160 = vmax.f32 %v1873, 0.0
    %v2161 = vmax.f32 %v1984, 0.0
    %v2162 = vmax.f32 %v1986, 0.0
    %v2163 = vmax.f32 %v2093, 0.0
    %v2164 = vmax.f32 %v1875, 0.0
    %v2165 = vmax.f32 %v1877, 0.0
    %v2166 = vmax.f32 %v1988, 0.0
    %v2167 = vmax.f32 %v1990, 0.0
    %v2168 = vmax.f32 %v2096, 0.0
    %v2169 = vmax.f32 %v1881, 0.0
    %v2170 = vmax.f32 %v1883, 0.0
    %v2171 = vmax.f32 %v1994, 0.0
    %v2172 = vmax.f32 %v1996, 0.0
    %v2173 = vmax.f32 %v2101, 0.0
    %v2174 = vmax.f32 %v1885, 0.0
    %v2175 = vmax.f32 %v1887, 0.0
    %v2176 = vmax.f32 %v1998, 0.0
    %v2177 = vmax.f32 %v2000, 0.0
    %v2178 = vmax.f32 %v2104, 0.0
    %v2179 = vmax.f32 %v1891, 0.0
    %v2180 = vmax.f32 %v1893, 0.0
    %v2181 = vmax.f32 %v2004, 0.0
    %v2182 = vmax.f32 %v2006, 0.0
    %v2183 = vmax.f32 %v2109, 0.0
    %v2184 = vmax.f32 %v1895, 0.0
    %v2185 = vmax.f32 %v1897, 0.0
    %v2186 = vmax.f32 %v2008, 0.0
    %v2187 = vmax.f32 %v2010, 0.0
    %v2188 = vmax.f32 %v2112, 0.0
    %v2189 = vmax.f32 %v1901, 0.0
    %v2190 = vmax.f32 %v1903, 0.0
    %v2191 = vmax.f32 %v2014, 0.0
    %v2192 = vmax.f32 %v2016, 0.0
    %v2193 = vmax.f32 %v2117, 0.0
    %v2194 = vmax.f32 %v1905, 0.0
    %v2195 = vmax.f32 %v1907, 0.0
    %v2196 = vmax.f32 %v2018, 0.0
    %v2197 = vmax.f32 %v2020, 0.0
    %v2198 = vmax.f32 %v2120, 0.0
    %v2199 = vmax.f32 %v1911, 0.0
    %v2200 = vmax.f32 %v1913, 0.0
    %v2201 = vmax.f32 %v2024, 0.0
    %v2202 = vmax.f32 %v2026, 0.0
    %v2203 = vmax.f32 %v2125, 0.0
    %v2204 = vmax.f32 %v1915, 0.0
    %v2205 = vmax.f32 %v1917, 0.0
    %v2206 = vmax.f32 %v2028, 0.0
    %v2207 = vmax.f32 %v2030, 0.0
    %v2208 = vmax.f32 %v2128, 0.0
    %v2209 = vmax.f32 %v1921, 0.0
    %v2210 = vmax.f32 %v1923, 0.0
    %v2211 = vmax.f32 %v2034, 0.0
    %v2212 = vmax.f32 %v2036, 0.0
    %v2213 = vmax.f32 %v2133, 0.0
    %v2214 = vmax.f32 %v1925, 0.0
    %v2215 = vmax.f32 %v1927, 0.0
    %v2216 = vmax.f32 %v2038, 0.0
    %v2217 = vmax.f32 %v2040, 0.0
    %v2218 = vmax.f32 %v2136, 0.0
    %v2219 = vpack.c.bf16 %v2144, %v2139
    %v2220 = vpack.c.bf16 %v2145, %v2140
    %v2221 = vpack.c.bf16 %v2146, %v2141
    %v2222 = vpack.c.bf16 %v2147, %v2142
    %v2223 = vpack.c.bf16 %v2148, %v2143
    %v2224 = vpack.c.bf16 %v2154, %v2149
    %v2225 = vpack.c.bf16 %v2155, %v2150
    %v2226 = vpack.c.bf16 %v2156, %v2151
    %v2227 = vpack.c.bf16 %v2157, %v2152
    %v2228 = vpack.c.bf16 %v2158, %v2153
    %v2229 = vpack.c.bf16 %v2164, %v2159
    %v2230 = vpack.c.bf16 %v2165, %v2160
    %v2231 = vpack.c.bf16 %v2166, %v2161
    %v2232 = vpack.c.bf16 %v2167, %v2162
    %v2233 = vpack.c.bf16 %v2168, %v2163
    %v2234 = vpack.c.bf16 %v2174, %v2169
    %v2235 = vpack.c.bf16 %v2175, %v2170
    %v2236 = vpack.c.bf16 %v2176, %v2171
    %v2237 = vpack.c.bf16 %v2177, %v2172
    %v2238 = vpack.c.bf16 %v2178, %v2173
    %v2239 = vpack.c.bf16 %v2184, %v2179
    %v2240 = vpack.c.bf16 %v2185, %v2180
    %v2241 = vpack.c.bf16 %v2186, %v2181
    %v2242 = vpack.c.bf16 %v2187, %v2182
    %v2243 = vpack.c.bf16 %v2188, %v2183
    %v2244 = vpack.c.bf16 %v2194, %v2189
    %v2245 = vpack.c.bf16 %v2195, %v2190
    %v2246 = vpack.c.bf16 %v2196, %v2191
    %v2247 = vpack.c.bf16 %v2197, %v2192
    %v2248 = vpack.c.bf16 %v2198, %v2193
    %v2249 = vpack.c.bf16 %v2204, %v2199
    %v2250 = vpack.c.bf16 %v2205, %v2200
    %v2251 = vpack.c.bf16 %v2206, %v2201
    %v2252 = vpack.c.bf16 %v2207, %v2202
    %v2253 = vpack.c.bf16 %v2208, %v2203
    %v2254 = vpack.c.bf16 %v2214, %v2209
    %v2255 = vpack.c.bf16 %v2215, %v2210
    %v2256 = vpack.c.bf16 %v2216, %v2211
    %v2257 = vpack.c.bf16 %v2217, %v2212
    %v2258 = vpack.c.bf16 %v2218, %v2213
    %v2259 = vld [vmem:[#allocation8] sm:$0xf]
    %v2260 = vld [vmem:[#allocation8 + $0x8] sm:$0xf]
    %v2261 = vld [vmem:[#allocation8 + $0x10] sm:$0xf]
    %v2262 = vld [vmem:[#allocation8 + $0x18] sm:$0xf]
    %v2263 = vld [vmem:[#allocation8 + $0x20] sm:$0xf]
    %v2264 = vld [vmem:[#allocation8 + $0x28] sm:$0xf]
    %v2265 = vld [vmem:[#allocation8 + $0x30] sm:$0xf]
    %v2266 = vld [vmem:[#allocation8 + $0x38] sm:$0xf]
    %v2267 = vld [vmem:[#allocation8 + $0x40] sm:$0xf]
    %v2268 = vld [vmem:[#allocation8 + $0x48] sm:$0xf]
    %v2269 = vld [vmem:[#allocation8 + $0x50] sm:$0xf]
    %v2270 = vld [vmem:[#allocation8 + $0x58] sm:$0xf]
    %v2271 = vld [vmem:[#allocation8 + $0x60] sm:$0xf]
    %v2272 = vld [vmem:[#allocation8 + $0x68] sm:$0xf]
    %v2273 = vld [vmem:[#allocation8 + $0x70] sm:$0xf]
    %v2274 = vld [vmem:[#allocation8 + $0x78] sm:$0xf]
    %v2275 = vld [vmem:[#allocation8 + $0x80] sm:$0xf]
    %v2276 = vld [vmem:[#allocation8 + $0x88] sm:$0xf]
    %v2277 = vld [vmem:[#allocation8 + $0x90] sm:$0xf]
    %v2278 = vld [vmem:[#allocation8 + $0x98] sm:$0xf]
    %v2279 = vld [vmem:[#allocation8 + $0xa0] sm:$0xf]
    %v2280 = vld [vmem:[#allocation8 + $0xa8] sm:$0xf]
    %v2281 = vld [vmem:[#allocation8 + $0xb0] sm:$0xf]
    %v2282 = vld [vmem:[#allocation8 + $0xb8] sm:$0xf]
    %v2283 = vld [vmem:[#allocation8 + $0xc0] sm:$0xf]
    %v2284 = vld [vmem:[#allocation8 + $0xc8] sm:$0xf]
    %v2285 = vld [vmem:[#allocation8 + $0xd0] sm:$0xf]
    %v2286 = vld [vmem:[#allocation8 + $0xd8] sm:$0xf]
    %v2287 = vld [vmem:[#allocation8 + $0xe0] sm:$0xf]
    %v2288 = vld [vmem:[#allocation8 + $0xe8] sm:$0xf]
    %v2289 = vld [vmem:[#allocation8 + $0xf0] sm:$0xf]
    %v2290 = vld [vmem:[#allocation8 + $0xf8] sm:$0xf]
    %v2291 = vld [vmem:[#allocation8 + $0x100] sm:$0xf]
    %v2292 = vld [vmem:[#allocation8 + $0x108] sm:$0xf]
    %v2293 = vld [vmem:[#allocation8 + $0x110] sm:$0xf]
    %v2294 = vld [vmem:[#allocation8 + $0x118] sm:$0xf]
    %v2295 = vld [vmem:[#allocation8 + $0x120] sm:$0xf]
    %v2296 = vld [vmem:[#allocation8 + $0x128] sm:$0xf]
    %v2297 = vld [vmem:[#allocation8 + $0x130] sm:$0xf]
    %v2298 = vld [vmem:[#allocation8 + $0x138] sm:$0xf]
    %v2299 = vld [vmem:[#allocation8 + $0x140] sm:$0xf]
    %v2300 = vld [vmem:[#allocation8 + $0x148] sm:$0xf]
    %v2301 = vld [vmem:[#allocation8 + $0x150] sm:$0xf]
    %v2302 = vld [vmem:[#allocation8 + $0x158] sm:$0xf]
    %v2303 = vld [vmem:[#allocation8 + $0x160] sm:$0xf]
    %v2304 = vld [vmem:[#allocation8 + $0x168] sm:$0xf]
    %v2305 = vld [vmem:[#allocation8 + $0x170] sm:$0xf]
    %v2306 = vld [vmem:[#allocation8 + $0x178] sm:$0xf]
    %v2307 = vld [vmem:[#allocation8 + $0x180] sm:$0xf]
    %v2308 = vld [vmem:[#allocation8 + $0x188] sm:$0xf]
    %v2309 = vld [vmem:[#allocation8 + $0x190] sm:$0xf]
    %v2310 = vld [vmem:[#allocation8 + $0x198] sm:$0xf]
    %v2311 = vld [vmem:[#allocation8 + $0x1a0] sm:$0xf]
    %v2312 = vld [vmem:[#allocation8 + $0x1a8] sm:$0xf]
    %v2313 = vld [vmem:[#allocation8 + $0x1b0] sm:$0xf]
    %v2314 = vld [vmem:[#allocation8 + $0x1b8] sm:$0xf]
    %v2315 = vld [vmem:[#allocation8 + $0x1c0] sm:$0xf]
    %v2316 = vld [vmem:[#allocation8 + $0x1c8] sm:$0xf]
    %v2317 = vld [vmem:[#allocation8 + $0x1d0] sm:$0xf]
    %v2318 = vld [vmem:[#allocation8 + $0x1d8] sm:$0xf]
    %v2319 = vld [vmem:[#allocation8 + $0x1e0] sm:$0xf]
    %v2320 = vld [vmem:[#allocation8 + $0x1e8] sm:$0xf]
    %v2321 = vld [vmem:[#allocation8 + $0x1f0] sm:$0xf]
    %v2322 = vld [vmem:[#allocation8 + $0x1f8] sm:$0xf]
    %v2323 = vld [vmem:[#allocation8 + $0x200] sm:$0xf]
    %v2324 = vld [vmem:[#allocation8 + $0x208] sm:$0xf]
    %v2325 = vld [vmem:[#allocation8 + $0x210] sm:$0xf]
    %v2326 = vld [vmem:[#allocation8 + $0x218] sm:$0xf]
    %v2327 = vld [vmem:[#allocation8 + $0x220] sm:$0xf]
    %v2328 = vld [vmem:[#allocation8 + $0x228] sm:$0xf]
    %v2329 = vld [vmem:[#allocation8 + $0x230] sm:$0xf]
    %v2330 = vld [vmem:[#allocation8 + $0x238] sm:$0xf]
    %v2331 = vld [vmem:[#allocation8 + $0x240] sm:$0xf]
    %v2332 = vld [vmem:[#allocation8 + $0x248] sm:$0xf]
    %v2333 = vld [vmem:[#allocation8 + $0x250] sm:$0xf]
    %v2334 = vld [vmem:[#allocation8 + $0x258] sm:$0xf]
    %v2335 = vld [vmem:[#allocation8 + $0x260] sm:$0xf]
    %v2336 = vld [vmem:[#allocation8 + $0x268] sm:$0xf]
    %v2337 = vld [vmem:[#allocation8 + $0x270] sm:$0xf]
    %v2338 = vld [vmem:[#allocation8 + $0x278] sm:$0xf]
    %v2339 = vld [vmem:[#allocation10 + $0x12] sm:$0x1]
    %v2341 = vlaneseq
    %v2342 = vshrl.u32 %v2341, 7
    %v2343 = vsub.s32 0, %v2342
    %v2344 = vrot.slane %v2339, %v2343
    %v2426 = vunpack.c.l.b16 %v2259
    %v2427 = vunpack.c.l.b16 %v2260
    %v2428 = vunpack.c.l.b16 %v2261
    %v2429 = vunpack.c.l.b16 %v2262
    %v2430 = vunpack.c.l.b16 %v2263
    %v2431 = vunpack.c.l.b16 %v2264
    %v2432 = vunpack.c.l.b16 %v2265
    %v2433 = vunpack.c.l.b16 %v2266
    %v2434 = vunpack.c.l.b16 %v2267
    %v2435 = vunpack.c.l.b16 %v2268
    %v2436 = vunpack.c.l.b16 %v2269
    %v2437 = vunpack.c.l.b16 %v2270
    %v2438 = vunpack.c.l.b16 %v2271
    %v2439 = vunpack.c.l.b16 %v2272
    %v2440 = vunpack.c.l.b16 %v2273
    %v2441 = vunpack.c.l.b16 %v2274
    %v2442 = vunpack.c.l.b16 %v2275
    %v2443 = vunpack.c.l.b16 %v2276
    %v2444 = vunpack.c.l.b16 %v2277
    %v2445 = vunpack.c.l.b16 %v2278
    %v2446 = vunpack.c.l.b16 %v2279
    %v2447 = vunpack.c.l.b16 %v2280
    %v2448 = vunpack.c.l.b16 %v2281
    %v2449 = vunpack.c.l.b16 %v2282
    %v2450 = vunpack.c.l.b16 %v2283
    %v2451 = vunpack.c.l.b16 %v2284
    %v2452 = vunpack.c.l.b16 %v2285
    %v2453 = vunpack.c.l.b16 %v2286
    %v2454 = vunpack.c.l.b16 %v2287
    %v2455 = vunpack.c.l.b16 %v2288
    %v2456 = vunpack.c.l.b16 %v2289
    %v2457 = vunpack.c.l.b16 %v2290
    %v2458 = vunpack.c.l.b16 %v2291
    %v2459 = vunpack.c.l.b16 %v2292
    %v2460 = vunpack.c.l.b16 %v2293
    %v2461 = vunpack.c.l.b16 %v2294
    %v2462 = vunpack.c.l.b16 %v2295
    %v2463 = vunpack.c.l.b16 %v2296
    %v2464 = vunpack.c.l.b16 %v2297
    %v2465 = vunpack.c.l.b16 %v2298
    %v2466 = vunpack.c.l.b16 %v2299
    %v2467 = vunpack.c.l.b16 %v2300
    %v2468 = vunpack.c.l.b16 %v2301
    %v2469 = vunpack.c.l.b16 %v2302
    %v2470 = vunpack.c.l.b16 %v2303
    %v2471 = vunpack.c.l.b16 %v2304
    %v2472 = vunpack.c.l.b16 %v2305
    %v2473 = vunpack.c.l.b16 %v2306
    %v2474 = vunpack.c.l.b16 %v2307
    %v2475 = vunpack.c.l.b16 %v2308
    %v2476 = vunpack.c.l.b16 %v2309
    %v2477 = vunpack.c.l.b16 %v2310
    %v2478 = vunpack.c.l.b16 %v2311
    %v2479 = vunpack.c.l.b16 %v2312
    %v2480 = vunpack.c.l.b16 %v2313
    %v2481 = vunpack.c.l.b16 %v2314
    %v2482 = vunpack.c.l.b16 %v2315
    %v2483 = vunpack.c.l.b16 %v2316
    %v2484 = vunpack.c.l.b16 %v2317
    %v2485 = vunpack.c.l.b16 %v2318
    %v2486 = vunpack.c.l.b16 %v2319
    %v2487 = vunpack.c.l.b16 %v2320
    %v2488 = vunpack.c.l.b16 %v2321
    %v2489 = vunpack.c.l.b16 %v2322
    %v2490 = vunpack.c.l.b16 %v2323
    %v2491 = vunpack.c.l.b16 %v2324
    %v2492 = vunpack.c.l.b16 %v2325
    %v2493 = vunpack.c.l.b16 %v2326
    %v2494 = vunpack.c.l.b16 %v2327
    %v2495 = vunpack.c.l.b16 %v2328
    %v2496 = vunpack.c.l.b16 %v2329
    %v2497 = vunpack.c.l.b16 %v2330
    %v2498 = vunpack.c.l.b16 %v2331
    %v2499 = vunpack.c.l.b16 %v2332
    %v2500 = vunpack.c.l.b16 %v2333
    %v2501 = vunpack.c.l.b16 %v2334
    %v2502 = vunpack.c.l.b16 %v2335
    %v2503 = vunpack.c.l.b16 %v2336
    %v2504 = vunpack.c.l.b16 %v2337
    %v2505 = vunpack.c.l.b16 %v2338
    %v2506 = vpack.c.b16 %v2427, %v2426
    %v2507 = vpack.c.b16 %v2429, %v2428
    %v2508 = vpack.c.b16 %v2431, %v2430
    %v2509 = vpack.c.b16 %v2433, %v2432
    %v2510 = vpack.c.b16 %v2435, %v2434
    %v2511 = vpack.c.b16 %v2437, %v2436
    %v2512 = vpack.c.b16 %v2439, %v2438
    %v2513 = vpack.c.b16 %v2441, %v2440
    %v2514 = vpack.c.b16 %v2443, %v2442
    %v2515 = vpack.c.b16 %v2445, %v2444
    %v2516 = vpack.c.b16 %v2447, %v2446
    %v2517 = vpack.c.b16 %v2449, %v2448
    %v2518 = vpack.c.b16 %v2451, %v2450
    %v2519 = vpack.c.b16 %v2453, %v2452
    %v2520 = vpack.c.b16 %v2455, %v2454
    %v2521 = vpack.c.b16 %v2457, %v2456
    %v2522 = vpack.c.b16 %v2459, %v2458
    %v2523 = vpack.c.b16 %v2461, %v2460
    %v2524 = vpack.c.b16 %v2463, %v2462
    %v2525 = vpack.c.b16 %v2465, %v2464
    %v2526 = vpack.c.b16 %v2467, %v2466
    %v2527 = vpack.c.b16 %v2469, %v2468
    %v2528 = vpack.c.b16 %v2471, %v2470
    %v2529 = vpack.c.b16 %v2473, %v2472
    %v2530 = vpack.c.b16 %v2475, %v2474
    %v2531 = vpack.c.b16 %v2477, %v2476
    %v2532 = vpack.c.b16 %v2479, %v2478
    %v2533 = vpack.c.b16 %v2481, %v2480
    %v2534 = vpack.c.b16 %v2483, %v2482
    %v2535 = vpack.c.b16 %v2485, %v2484
    %v2536 = vpack.c.b16 %v2487, %v2486
    %v2537 = vpack.c.b16 %v2489, %v2488
    %v2538 = vpack.c.b16 %v2491, %v2490
    %v2539 = vpack.c.b16 %v2493, %v2492
    %v2540 = vpack.c.b16 %v2495, %v2494
    %v2541 = vpack.c.b16 %v2497, %v2496
    %v2542 = vpack.c.b16 %v2499, %v2498
    %v2543 = vpack.c.b16 %v2501, %v2500
    %v2544 = vpack.c.b16 %v2503, %v2502
    %v2545 = vpack.c.b16 %v2505, %v2504
    %2586 = vmatprep.subr.bf16.mxu0 0
    %2587 = vmatpush1.bf16.msra.mxu0 %v2506
    %2588 = vmatprep.subr.bf16.mxu0 0
    %2589 = vmatpush1.bf16.msra.mxu0 %v2507
    %2590 = vmatprep.subr.bf16.mxu0 0
    %2591 = vmatpush1.bf16.msra.mxu0 %v2508
    %2592 = vmatprep.subr.bf16.mxu0 0
    %2593 = vmatpush1.bf16.msra.mxu0 %v2509
    %2594 = vmatprep.subr.bf16.mxu0 0
    %2595 = vmatpush1.bf16.msra.mxu0 %v2510
    %2596 = vmatprep.subr.bf16.mxu0 0
    %2597 = vmatpush1.bf16.msra.mxu0 %v2511
    %2598 = vmatprep.subr.bf16.mxu0 0
    %2599 = vmatpush1.bf16.msra.mxu0 %v2512
    %2600 = vmatprep.subr.bf16.mxu0 0
    %2601 = vmatpush1.bf16.msra.mxu0 %v2513
    %2602 = vmatprep.subr.bf16.mxu0 0
    %2603 = vmatpush1.bf16.msra.mxu0 %v2514
    %2604 = vmatprep.subr.bf16.mxu0 0
    %2605 = vmatpush1.bf16.msra.mxu0 %v2515
    %2606 = vmatprep.subr.bf16.mxu0 0
    %2607 = vmatpush1.bf16.msra.mxu0 %v2516
    %2608 = vmatprep.subr.bf16.mxu0 0
    %2609 = vmatpush1.bf16.msra.mxu0 %v2517
    %2610 = vmatprep.subr.bf16.mxu0 0
    %2611 = vmatpush1.bf16.msra.mxu0 %v2518
    %2612 = vmatprep.subr.bf16.mxu0 0
    %2613 = vmatpush1.bf16.msra.mxu0 %v2519
    %2614 = vmatprep.subr.bf16.mxu0 0
    %2615 = vmatpush1.bf16.msra.mxu0 %v2520
    %2616 = vmatprep.subr.bf16.mxu0 0
    %2617 = vmatpush1.bf16.msra.mxu0 %v2521
    %2618 = vmatprep.mubr.bf16.mxu0 %v2220
    %2619 = vmatmul.mubr.bf16.gmra.mrb[0].mxu0 %v2219
    %v2620 = vpop.f32.mrb[0].mxu0
    %v2621 = vadd.f32 %v2344, %v2620
    %v2622 = vpop.f32.mrb[0].mxu0
    %v2623 = vpop.f32.mrb[0].mxu0
    %v2624 = vadd.f32 %v2344, %v2623
    %v2625 = vpop.f32.mrb[0].mxu0
    %2626 = vmatprep.mubr.bf16.mxu0 %v2225
    %2627 = vmatmul.mubr.bf16.gmra.mrb[0].mxu0 %v2224
    %v2628 = vpop.f32.mrb[0].mxu0
    %v2629 = vadd.f32 %v2344, %v2628
    %v2630 = vpop.f32.mrb[0].mxu0
    %v2631 = vpop.f32.mrb[0].mxu0
    %v2632 = vadd.f32 %v2344, %v2631
    %v2633 = vpop.f32.mrb[0].mxu0
    %2634 = vmatprep.mubr.bf16.mxu0 %v2230
    %2635 = vmatmul.mubr.bf16.gmra.mrb[0].mxu0 %v2229
    %v2636 = vpop.f32.mrb[0].mxu0
    %v2637 = vadd.f32 %v2344, %v2636
    %v2638 = vpop.f32.mrb[0].mxu0
    %v2639 = vpop.f32.mrb[0].mxu0
    %v2640 = vadd.f32 %v2344, %v2639
    %v2641 = vpop.f32.mrb[0].mxu0
    %2642 = vmatprep.mubr.bf16.mxu0 %v2235
    %2643 = vmatmul.mubr.bf16.gmra.mrb[0].mxu0 %v2234
    %v2644 = vpop.f32.mrb[0].mxu0
    %v2645 = vadd.f32 %v2344, %v2644
    %v2646 = vpop.f32.mrb[0].mxu0
    %v2647 = vpop.f32.mrb[0].mxu0
    %v2648 = vadd.f32 %v2344, %v2647
    %v2649 = vpop.f32.mrb[0].mxu0
    %2650 = vmatprep.mubr.bf16.mxu0 %v2240
    %2651 = vmatmul.mubr.bf16.gmra.mrb[0].mxu0 %v2239
    %v2652 = vpop.f32.mrb[0].mxu0
    %v2653 = vadd.f32 %v2344, %v2652
    %v2654 = vpop.f32.mrb[0].mxu0
    %v2655 = vpop.f32.mrb[0].mxu0
    %v2656 = vadd.f32 %v2344, %v2655
    %v2657 = vpop.f32.mrb[0].mxu0
    %2658 = vmatprep.mubr.bf16.mxu0 %v2245
    %2659 = vmatmul.mubr.bf16.gmra.mrb[0].mxu0 %v2244
    %v2660 = vpop.f32.mrb[0].mxu0
    %v2661 = vadd.f32 %v2344, %v2660
    %v2662 = vpop.f32.mrb[0].mxu0
    %v2663 = vpop.f32.mrb[0].mxu0
    %v2664 = vadd.f32 %v2344, %v2663
    %v2665 = vpop.f32.mrb[0].mxu0
    %2666 = vmatprep.mubr.bf16.mxu0 %v2250
    %2667 = vmatmul.mubr.bf16.gmra.mrb[0].mxu0 %v2249
    %v2668 = vpop.f32.mrb[0].mxu0
    %v2669 = vadd.f32 %v2344, %v2668
    %v2670 = vpop.f32.mrb[0].mxu0
    %v2671 = vpop.f32.mrb[0].mxu0
    %v2672 = vadd.f32 %v2344, %v2671
    %v2673 = vpop.f32.mrb[0].mxu0
    %2674 = vmatprep.mubr.bf16.mxu0 %v2255
    %2675 = vmatmul.mubr.bf16.gmra.mrb[0].mxu0 %v2254
    %v2676 = vpop.f32.mrb[0].mxu0
    %v2677 = vadd.f32 %v2344, %v2676
    %v2678 = vpop.f32.mrb[0].mxu0
    %v2679 = vpop.f32.mrb[0].mxu0
    %v2680 = vadd.f32 %v2344, %v2679
    %v2681 = vpop.f32.mrb[0].mxu0
    %2682 = vdwg.mxu0
    %2683 = vmatprep.subr.bf16.mxu0 0
    %2684 = vmatpush1.bf16.msra.mxu0 %v2522
    %2685 = vmatprep.subr.bf16.mxu0 0
    %2686 = vmatpush1.bf16.msra.mxu0 %v2523
    %2687 = vmatprep.subr.bf16.mxu0 0
    %2688 = vmatpush1.bf16.msra.mxu0 %v2524
    %2689 = vmatprep.subr.bf16.mxu0 0
    %2690 = vmatpush1.bf16.msra.mxu0 %v2525
    %2691 = vmatprep.subr.bf16.mxu0 0
    %2692 = vmatpush1.bf16.msra.mxu0 %v2526
    %2693 = vmatprep.subr.bf16.mxu0 0
    %2694 = vmatpush1.bf16.msra.mxu0 %v2527
    %2695 = vmatprep.subr.bf16.mxu0 0
    %2696 = vmatpush1.bf16.msra.mxu0 %v2528
    %2697 = vmatprep.subr.bf16.mxu0 0
    %2698 = vmatpush1.bf16.msra.mxu0 %v2529
    %2699 = vmatprep.subr.bf16.mxu0 0
    %2700 = vmatpush1.bf16.msra.mxu0 %v2530
    %2701 = vmatprep.subr.bf16.mxu0 0
    %2702 = vmatpush1.bf16.msra.mxu0 %v2531
    %2703 = vmatprep.subr.bf16.mxu0 0
    %2704 = vmatpush1.bf16.msra.mxu0 %v2532
    %2705 = vmatprep.subr.bf16.mxu0 0
    %2706 = vmatpush1.bf16.msra.mxu0 %v2533
    %2707 = vmatprep.subr.bf16.mxu0 0
    %2708 = vmatpush1.bf16.msra.mxu0 %v2534
    %2709 = vmatprep.subr.bf16.mxu0 0
    %2710 = vmatpush1.bf16.msra.mxu0 %v2535
    %2711 = vmatprep.subr.bf16.mxu0 0
    %2712 = vmatpush1.bf16.msra.mxu0 %v2536
    %2713 = vmatprep.subr.bf16.mxu0 0
    %2714 = vmatpush1.bf16.msra.mxu0 %v2537
    %2715 = vmatprep.mubr.bf16.mxu0 %v2222
    %2716 = vmatmul.mubr.bf16.gmra.mrb[0].mxu0 %v2221
    %v2717 = vpop.f32.mrb[0].mxu0
    %v2718 = vadd.f32 %v2621, %v2717
    %v2719 = vpop.f32.mrb[0].mxu0
    %v2720 = vpop.f32.mrb[0].mxu0
    %v2721 = vadd.f32 %v2624, %v2720
    %v2722 = vpop.f32.mrb[0].mxu0
    %2723 = vmatprep.mubr.bf16.mxu0 %v2227
    %2724 = vmatmul.mubr.bf16.gmra.mrb[0].mxu0 %v2226
    %v2725 = vpop.f32.mrb[0].mxu0
    %v2726 = vadd.f32 %v2629, %v2725
    %v2727 = vpop.f32.mrb[0].mxu0
    %v2728 = vpop.f32.mrb[0].mxu0
    %v2729 = vadd.f32 %v2632, %v2728
    %v2730 = vpop.f32.mrb[0].mxu0
    %2731 = vmatprep.mubr.bf16.mxu0 %v2232
    %2732 = vmatmul.mubr.bf16.gmra.mrb[0].mxu0 %v2231
    %v2733 = vpop.f32.mrb[0].mxu0
    %v2734 = vadd.f32 %v2637, %v2733
    %v2735 = vpop.f32.mrb[0].mxu0
    %v2736 = vpop.f32.mrb[0].mxu0
    %v2737 = vadd.f32 %v2640, %v2736
    %v2738 = vpop.f32.mrb[0].mxu0
    %2739 = vmatprep.mubr.bf16.mxu0 %v2237
    %2740 = vmatmul.mubr.bf16.gmra.mrb[0].mxu0 %v2236
    %v2741 = vpop.f32.mrb[0].mxu0
    %v2742 = vadd.f32 %v2645, %v2741
    %v2743 = vpop.f32.mrb[0].mxu0
    %v2744 = vpop.f32.mrb[0].mxu0
    %v2745 = vadd.f32 %v2648, %v2744
    %v2746 = vpop.f32.mrb[0].mxu0
    %2747 = vmatprep.mubr.bf16.mxu0 %v2242
    %2748 = vmatmul.mubr.bf16.gmra.mrb[0].mxu0 %v2241
    %v2749 = vpop.f32.mrb[0].mxu0
    %v2750 = vadd.f32 %v2653, %v2749
    %v2751 = vpop.f32.mrb[0].mxu0
    %v2752 = vpop.f32.mrb[0].mxu0
    %v2753 = vadd.f32 %v2656, %v2752
    %v2754 = vpop.f32.mrb[0].mxu0
    %2755 = vmatprep.mubr.bf16.mxu0 %v2247
    %2756 = vmatmul.mubr.bf16.gmra.mrb[0].mxu0 %v2246
    %v2757 = vpop.f32.mrb[0].mxu0
    %v2758 = vadd.f32 %v2661, %v2757
    %v2759 = vpop.f32.mrb[0].mxu0
    %v2760 = vpop.f32.mrb[0].mxu0
    %v2761 = vadd.f32 %v2664, %v2760
    %v2762 = vpop.f32.mrb[0].mxu0
    %2763 = vmatprep.mubr.bf16.mxu0 %v2252
    %2764 = vmatmul.mubr.bf16.gmra.mrb[0].mxu0 %v2251
    %v2765 = vpop.f32.mrb[0].mxu0
    %v2766 = vadd.f32 %v2669, %v2765
    %v2767 = vpop.f32.mrb[0].mxu0
    %v2768 = vpop.f32.mrb[0].mxu0
    %v2769 = vadd.f32 %v2672, %v2768
    %v2770 = vpop.f32.mrb[0].mxu0
    %2771 = vmatprep.mubr.bf16.mxu0 %v2257
    %2772 = vmatmul.mubr.bf16.gmra.mrb[0].mxu0 %v2256
    %v2773 = vpop.f32.mrb[0].mxu0
    %v2774 = vadd.f32 %v2677, %v2773
    %v2775 = vpop.f32.mrb[0].mxu0
    %v2776 = vpop.f32.mrb[0].mxu0
    %v2777 = vadd.f32 %v2680, %v2776
    %v2778 = vpop.f32.mrb[0].mxu0
    %2779 = vdwg.mxu0
    %2780 = vmatprep.subr.bf16.mxu0 0
    %2781 = vmatpush1.bf16.msra.mxu0 %v2538
    %2782 = vmatprep.subr.bf16.mxu0 0
    %2783 = vmatpush1.bf16.msra.mxu0 %v2539
    %2784 = vmatprep.subr.bf16.mxu0 0
    %2785 = vmatpush1.bf16.msra.mxu0 %v2540
    %2786 = vmatprep.subr.bf16.mxu0 0
    %2787 = vmatpush1.bf16.msra.mxu0 %v2541
    %2788 = vmatprep.subr.bf16.mxu0 0
    %2789 = vmatpush1.bf16.msra.mxu0 %v2542
    %2790 = vmatprep.subr.bf16.mxu0 0
    %2791 = vmatpush1.bf16.msra.mxu0 %v2543
    %2792 = vmatprep.subr.bf16.mxu0 0
    %2793 = vmatpush1.bf16.msra.mxu0 %v2544
    %2794 = vmatprep.subr.bf16.mxu0 0
    %2795 = vmatpush1.bf16.msra.mxu0 %v2545
    %2796 = vmatprep.subr.bf16.mxu0 0
    %2797 = vmatpush1.bf16.msra.mxu0 0
    %2798 = vmatprep.subr.bf16.mxu0 0
    %2799 = vmatpush1.bf16.msra.mxu0 0
    %2800 = vmatprep.subr.bf16.mxu0 0
    %2801 = vmatpush1.bf16.msra.mxu0 0
    %2802 = vmatprep.subr.bf16.mxu0 0
    %2803 = vmatpush1.bf16.msra.mxu0 0
    %2804 = vmatprep.subr.bf16.mxu0 0
    %2805 = vmatpush1.bf16.msra.mxu0 0
    %2806 = vmatprep.subr.bf16.mxu0 0
    %2807 = vmatpush1.bf16.msra.mxu0 0
    %2808 = vmatprep.subr.bf16.mxu0 0
    %2809 = vmatpush1.bf16.msra.mxu0 0
    %2810 = vmatprep.subr.bf16.mxu0 0
    %2811 = vmatpush1.bf16.msra.mxu0 0
    %2812 = vmatprep.mubr.bf16.mxu0 0
    %2813 = vmatmul.mubr.bf16.gmra.mrb[0].mxu0 %v2223
    %v2814 = vpop.f32.mrb[0].mxu0
    %v2815 = vadd.f32 %v2718, %v2814
    %v2816 = vpop.f32.mrb[0].mxu0
    %v2817 = vpop.f32.mrb[0].mxu0
    %v2818 = vadd.f32 %v2721, %v2817
    %v2819 = vpop.f32.mrb[0].mxu0
    %2820 = vmatprep.mubr.bf16.mxu0 0
    %2821 = vmatmul.mubr.bf16.gmra.mrb[0].mxu0 %v2228
    %v2822 = vpop.f32.mrb[0].mxu0
    %v2823 = vadd.f32 %v2726, %v2822
    %v2824 = vpop.f32.mrb[0].mxu0
    %v2825 = vpop.f32.mrb[0].mxu0
    %v2826 = vadd.f32 %v2729, %v2825
    %v2827 = vpop.f32.mrb[0].mxu0
    %2828 = vmatprep.mubr.bf16.mxu0 0
    %2829 = vmatmul.mubr.bf16.gmra.mrb[0].mxu0 %v2233
    %v2830 = vpop.f32.mrb[0].mxu0
    %v2831 = vadd.f32 %v2734, %v2830
    %v2832 = vpop.f32.mrb[0].mxu0
    %v2833 = vpop.f32.mrb[0].mxu0
    %v2834 = vadd.f32 %v2737, %v2833
    %v2835 = vpop.f32.mrb[0].mxu0
    %2836 = vmatprep.mubr.bf16.mxu0 0
    %2837 = vmatmul.mubr.bf16.gmra.mrb[0].mxu0 %v2238
    %v2838 = vpop.f32.mrb[0].mxu0
    %v2839 = vadd.f32 %v2742, %v2838
    %v2840 = vpop.f32.mrb[0].mxu0
    %v2841 = vpop.f32.mrb[0].mxu0
    %v2842 = vadd.f32 %v2745, %v2841
    %v2843 = vpop.f32.mrb[0].mxu0
    %2844 = vmatprep.mubr.bf16.mxu0 0
    %2845 = vmatmul.mubr.bf16.gmra.mrb[0].mxu0 %v2243
    %v2846 = vpop.f32.mrb[0].mxu0
    %v2847 = vadd.f32 %v2750, %v2846
    %v2848 = vpop.f32.mrb[0].mxu0
    %v2849 = vpop.f32.mrb[0].mxu0
    %v2850 = vadd.f32 %v2753, %v2849
    %v2851 = vpop.f32.mrb[0].mxu0
    %2852 = vmatprep.mubr.bf16.mxu0 0
    %2853 = vmatmul.mubr.bf16.gmra.mrb[0].mxu0 %v2248
    %v2854 = vpop.f32.mrb[0].mxu0
    %v2855 = vadd.f32 %v2758, %v2854
    %v2856 = vpop.f32.mrb[0].mxu0
    %v2857 = vpop.f32.mrb[0].mxu0
    %v2858 = vadd.f32 %v2761, %v2857
    %v2859 = vpop.f32.mrb[0].mxu0
    %2860 = vmatprep.mubr.bf16.mxu0 0
    %2861 = vmatmul.mubr.bf16.gmra.mrb[0].mxu0 %v2253
    %v2862 = vpop.f32.mrb[0].mxu0
    %v2863 = vadd.f32 %v2766, %v2862
    %v2864 = vpop.f32.mrb[0].mxu0
    %v2865 = vpop.f32.mrb[0].mxu0
    %v2866 = vadd.f32 %v2769, %v2865
    %v2867 = vpop.f32.mrb[0].mxu0
    %2868 = vmatprep.mubr.bf16.mxu0 0
    %2869 = vmatmul.mubr.bf16.gmra.mrb[0].mxu0 %v2258
    %v2870 = vpop.f32.mrb[0].mxu0
    %v2871 = vadd.f32 %v2774, %v2870
    %v2872 = vpop.f32.mrb[0].mxu0
    %v2873 = vpop.f32.mrb[0].mxu0
    %v2874 = vadd.f32 %v2777, %v2873
    %v2875 = vpop.f32.mrb[0].mxu0
    %2876 = vdwg.mxu0
    %v2877 = vmax.f32 %v2815, 0.0
    %v2878 = vmax.f32 %v2818, 0.0
    %v2879 = vmax.f32 %v2823, 0.0
    %v2880 = vmax.f32 %v2826, 0.0
    %v2881 = vmax.f32 %v2831, 0.0
    %v2882 = vmax.f32 %v2834, 0.0
    %v2883 = vmax.f32 %v2839, 0.0
    %v2884 = vmax.f32 %v2842, 0.0
    %v2885 = vmax.f32 %v2847, 0.0
    %v2886 = vmax.f32 %v2850, 0.0
    %v2887 = vmax.f32 %v2855, 0.0
    %v2888 = vmax.f32 %v2858, 0.0
    %v2889 = vmax.f32 %v2863, 0.0
    %v2890 = vmax.f32 %v2866, 0.0
    %v2891 = vmax.f32 %v2871, 0.0
    %v2892 = vmax.f32 %v2874, 0.0
    %v2893 = vpack.c.bf16 %v2878, %v2877
    %v2894 = vpack.c.bf16 %v2880, %v2879
    %v2895 = vpack.c.bf16 %v2882, %v2881
    %v2896 = vpack.c.bf16 %v2884, %v2883
    %v2897 = vpack.c.bf16 %v2886, %v2885
    %v2898 = vpack.c.bf16 %v2888, %v2887
    %v2899 = vpack.c.bf16 %v2890, %v2889
    %v2900 = vpack.c.bf16 %v2892, %v2891
    %v2901 = vld [vmem:[#allocation7 + $0x18] sm:$0xff]
    %v2902 = vld [vmem:[#allocation7 + $0x74] sm:$0xff]
    %v2903 = vld [vmem:[#allocation7 + $0xd0] sm:$0xff]
    %v2904 = vld [vmem:[#allocation7 + $0x12c] sm:$0xff]
    %v2905 = vld [vmem:[#allocation7 + $0x188] sm:$0xff]
    %v2906 = vld [vmem:[#allocation7 + $0x1e4] sm:$0xff]
    %v2907 = vld [vmem:[#allocation7 + $0x240] sm:$0xff]
    %v2908 = vld [vmem:[#allocation7 + $0x29c] sm:$0xff]
    %v2909 = vld [vmem:[#allocation7 + $0x2f8] sm:$0xff]
    %v2910 = vld [vmem:[#allocation7 + $0x354] sm:$0xff]
    %v2911 = vld [vmem:[#allocation7 + $0x3b0] sm:$0xff]
    %v2912 = vld [vmem:[#allocation7 + $0x40c] sm:$0xff]
    %v2913 = vld [vmem:[#allocation7 + $0x468] sm:$0xff]
    %v2914 = vld [vmem:[#allocation7 + $0x4c4] sm:$0xff]
    %v2915 = vld [vmem:[#allocation7 + $0x520] sm:$0xff]
    %v2916 = vld [vmem:[#allocation7 + $0x57c] sm:$0xff]
    %v2917 = vld [vmem:[#allocation7 + $0x5d8] sm:$0xff]
    %v2918 = vld [vmem:[#allocation7 + $0x634] sm:$0xff]
    %v2919 = vld [vmem:[#allocation7 + $0x690] sm:$0xff]
    %v2920 = vld [vmem:[#allocation7 + $0x6ec] sm:$0xff]
    %v2921 = vld [vmem:[#allocation7 + $0x748] sm:$0xff]
    %v2922 = vld [vmem:[#allocation7 + $0x7a4] sm:$0xff]
    %v2923 = vld [vmem:[#allocation7 + $0x800] sm:$0xff]
    %v2924 = vld [vmem:[#allocation7 + $0x85c] sm:$0xff]
    %v2925 = vld [vmem:[#allocation7 + $0x8b8] sm:$0xff]
    %v2926 = vld [vmem:[#allocation7 + $0x914] sm:$0xff]
    %v2927 = vld [vmem:[#allocation7 + $0x970] sm:$0xff]
    %v2928 = vld [vmem:[#allocation7 + $0x9cc] sm:$0xff]
    %v2929 = vld [vmem:[#allocation7 + $0xa28] sm:$0xff]
    %v2930 = vld [vmem:[#allocation7 + $0xa84] sm:$0xff]
    %v2931 = vld [vmem:[#allocation7 + $0xae0] sm:$0xff]
    %v2932 = vld [vmem:[#allocation7 + $0xb3c] sm:$0xff]
    %v2933 = vld [vmem:[#allocation10 + $0x6] sm:$0x3]
    %v2935 = vlaneseq
    %v2936 = vshrl.u32 %v2935, 7
    %v2937 = vsub.s32 0, %v2936
    %v2938 = vrot.slane %v2933, %v2937
    %v2939 = vlaneseq
    %v2940 = vshrl.u32 %v2939, 7
    %v2941 = vsub.s32 1, %v2940
    %v2942 = vrot.slane %v2933, %v2941
    %v2977 = vunpack.c.l.b16 %v2901
    %v2978 = vunpack.c.h.b16 %v2901
    %v2979 = vunpack.c.l.b16 %v2902
    %v2980 = vunpack.c.h.b16 %v2902
    %v2981 = vunpack.c.l.b16 %v2903
    %v2982 = vunpack.c.h.b16 %v2903
    %v2983 = vunpack.c.l.b16 %v2904
    %v2984 = vunpack.c.h.b16 %v2904
    %v2985 = vunpack.c.l.b16 %v2905
    %v2986 = vunpack.c.h.b16 %v2905
    %v2987 = vunpack.c.l.b16 %v2906
    %v2988 = vunpack.c.h.b16 %v2906
    %v2989 = vunpack.c.l.b16 %v2907
    %v2990 = vunpack.c.h.b16 %v2907
    %v2991 = vunpack.c.l.b16 %v2908
    %v2992 = vunpack.c.h.b16 %v2908
    %v2993 = vunpack.c.l.b16 %v2909
    %v2994 = vunpack.c.h.b16 %v2909
    %v2995 = vunpack.c.l.b16 %v2910
    %v2996 = vunpack.c.h.b16 %v2910
    %v2997 = vunpack.c.l.b16 %v2911
    %v2998 = vunpack.c.h.b16 %v2911
    %v2999 = vunpack.c.l.b16 %v2912
    %v3000 = vunpack.c.h.b16 %v2912
    %v3001 = vunpack.c.l.b16 %v2913
    %v3002 = vunpack.c.h.b16 %v2913
    %v3003 = vunpack.c.l.b16 %v2914
    %v3004 = vunpack.c.h.b16 %v2914
    %v3005 = vunpack.c.l.b16 %v2915
    %v3006 = vunpack.c.h.b16 %v2915
    %v3007 = vunpack.c.l.b16 %v2916
    %v3008 = vunpack.c.h.b16 %v2916
    %v3009 = vunpack.c.l.b16 %v2917
    %v3010 = vunpack.c.h.b16 %v2917
    %v3011 = vunpack.c.l.b16 %v2918
    %v3012 = vunpack.c.h.b16 %v2918
    %v3013 = vunpack.c.l.b16 %v2919
    %v3014 = vunpack.c.h.b16 %v2919
    %v3015 = vunpack.c.l.b16 %v2920
    %v3016 = vunpack.c.h.b16 %v2920
    %v3017 = vunpack.c.l.b16 %v2921
    %v3018 = vunpack.c.h.b16 %v2921
    %v3019 = vunpack.c.l.b16 %v2922
    %v3020 = vunpack.c.h.b16 %v2922
    %v3021 = vunpack.c.l.b16 %v2923
    %v3022 = vunpack.c.h.b16 %v2923
    %v3023 = vunpack.c.l.b16 %v2924
    %v3024 = vunpack.c.h.b16 %v2924
    %v3025 = vunpack.c.l.b16 %v2925
    %v3026 = vunpack.c.h.b16 %v2925
    %v3027 = vunpack.c.l.b16 %v2926
    %v3028 = vunpack.c.h.b16 %v2926
    %v3029 = vunpack.c.l.b16 %v2927
    %v3030 = vunpack.c.h.b16 %v2927
    %v3031 = vunpack.c.l.b16 %v2928
    %v3032 = vunpack.c.h.b16 %v2928
    %v3033 = vunpack.c.l.b16 %v2929
    %v3034 = vunpack.c.h.b16 %v2929
    %v3035 = vunpack.c.l.b16 %v2930
    %v3036 = vunpack.c.h.b16 %v2930
    %v3037 = vunpack.c.l.b16 %v2931
    %v3038 = vunpack.c.h.b16 %v2931
    %v3039 = vunpack.c.l.b16 %v2932
    %v3040 = vunpack.c.h.b16 %v2932
    %v3041 = vpack.c.b16 %v2979, %v2977
    %v3042 = vpack.c.b16 %v2980, %v2978
    %v3043 = vpack.c.b16 %v2983, %v2981
    %v3044 = vpack.c.b16 %v2984, %v2982
    %v3045 = vpack.c.b16 %v2987, %v2985
    %v3046 = vpack.c.b16 %v2988, %v2986
    %v3047 = vpack.c.b16 %v2991, %v2989
    %v3048 = vpack.c.b16 %v2992, %v2990
    %v3049 = vpack.c.b16 %v2995, %v2993
    %v3050 = vpack.c.b16 %v2996, %v2994
    %v3051 = vpack.c.b16 %v2999, %v2997
    %v3052 = vpack.c.b16 %v3000, %v2998
    %v3053 = vpack.c.b16 %v3003, %v3001
    %v3054 = vpack.c.b16 %v3004, %v3002
    %v3055 = vpack.c.b16 %v3007, %v3005
    %v3056 = vpack.c.b16 %v3008, %v3006
    %v3057 = vpack.c.b16 %v3011, %v3009
    %v3058 = vpack.c.b16 %v3012, %v3010
    %v3059 = vpack.c.b16 %v3015, %v3013
    %v3060 = vpack.c.b16 %v3016, %v3014
    %v3061 = vpack.c.b16 %v3019, %v3017
    %v3062 = vpack.c.b16 %v3020, %v3018
    %v3063 = vpack.c.b16 %v3023, %v3021
    %v3064 = vpack.c.b16 %v3024, %v3022
    %v3065 = vpack.c.b16 %v3027, %v3025
    %v3066 = vpack.c.b16 %v3028, %v3026
    %v3067 = vpack.c.b16 %v3031, %v3029
    %v3068 = vpack.c.b16 %v3032, %v3030
    %v3069 = vpack.c.b16 %v3035, %v3033
    %v3070 = vpack.c.b16 %v3036, %v3034
    %v3071 = vpack.c.b16 %v3039, %v3037
    %v3072 = vpack.c.b16 %v3040, %v3038
    %3105 = vmatprep.subr.bf16.mxu0 %v3042
    %3106 = vmatpush1.bf16.msra.mxu0 %v3041
    %3107 = vmatprep.subr.bf16.mxu0 %v3044
    %3108 = vmatpush1.bf16.msra.mxu0 %v3043
    %3109 = vmatprep.subr.bf16.mxu0 %v3046
    %3110 = vmatpush1.bf16.msra.mxu0 %v3045
    %3111 = vmatprep.subr.bf16.mxu0 %v3048
    %3112 = vmatpush1.bf16.msra.mxu0 %v3047
    %3113 = vmatprep.subr.bf16.mxu0 %v3050
    %3114 = vmatpush1.bf16.msra.mxu0 %v3049
    %3115 = vmatprep.subr.bf16.mxu0 %v3052
    %3116 = vmatpush1.bf16.msra.mxu0 %v3051
    %3117 = vmatprep.subr.bf16.mxu0 %v3054
    %3118 = vmatpush1.bf16.msra.mxu0 %v3053
    %3119 = vmatprep.subr.bf16.mxu0 %v3056
    %3120 = vmatpush1.bf16.msra.mxu0 %v3055
    %3121 = vmatprep.subr.bf16.mxu0 %v3058
    %3122 = vmatpush1.bf16.msra.mxu0 %v3057
    %3123 = vmatprep.subr.bf16.mxu0 %v3060
    %3124 = vmatpush1.bf16.msra.mxu0 %v3059
    %3125 = vmatprep.subr.bf16.mxu0 %v3062
    %3126 = vmatpush1.bf16.msra.mxu0 %v3061
    %3127 = vmatprep.subr.bf16.mxu0 %v3064
    %3128 = vmatpush1.bf16.msra.mxu0 %v3063
    %3129 = vmatprep.subr.bf16.mxu0 %v3066
    %3130 = vmatpush1.bf16.msra.mxu0 %v3065
    %3131 = vmatprep.subr.bf16.mxu0 %v3068
    %3132 = vmatpush1.bf16.msra.mxu0 %v3067
    %3133 = vmatprep.subr.bf16.mxu0 %v3070
    %3134 = vmatpush1.bf16.msra.mxu0 %v3069
    %3135 = vmatprep.subr.bf16.mxu0 %v3072
    %3136 = vmatpush1.bf16.msra.mxu0 %v3071
    %3137 = vmatprep.mubr.bf16.mxu0 %v883
    %3138 = vmatmul.mubr.bf16.gmra.mrb[0].mxu0 %v882
    %v3139 = vpop.f32.mrb[0].mxu0
    %v3140 = vadd.f32 %v2938, %v3139
    %v3141 = vpop.f32.mrb[0].mxu0
    %v3142 = vadd.f32 %v2942, %v3141
    %v3143 = vpop.f32.mrb[0].mxu0
    %v3144 = vadd.f32 %v2938, %v3143
    %v3145 = vpop.f32.mrb[0].mxu0
    %v3146 = vadd.f32 %v2942, %v3145
    %3147 = vmatprep.mubr.bf16.mxu0 %v887
    %3148 = vmatmul.mubr.bf16.gmra.mrb[0].mxu0 %v886
    %v3149 = vpop.f32.mrb[0].mxu0
    %v3150 = vadd.f32 %v2938, %v3149
    %v3151 = vpop.f32.mrb[0].mxu0
    %v3152 = vadd.f32 %v2942, %v3151
    %v3153 = vpop.f32.mrb[0].mxu0
    %v3154 = vadd.f32 %v2938, %v3153
    %v3155 = vpop.f32.mrb[0].mxu0
    %v3156 = vadd.f32 %v2942, %v3155
    %3157 = vmatprep.mubr.bf16.mxu0 %v891
    %3158 = vmatmul.mubr.bf16.gmra.mrb[0].mxu0 %v890
    %v3159 = vpop.f32.mrb[0].mxu0
    %v3160 = vadd.f32 %v2938, %v3159
    %v3161 = vpop.f32.mrb[0].mxu0
    %v3162 = vadd.f32 %v2942, %v3161
    %v3163 = vpop.f32.mrb[0].mxu0
    %v3164 = vadd.f32 %v2938, %v3163
    %v3165 = vpop.f32.mrb[0].mxu0
    %v3166 = vadd.f32 %v2942, %v3165
    %3167 = vmatprep.mubr.bf16.mxu0 %v895
    %3168 = vmatmul.mubr.bf16.gmra.mrb[0].mxu0 %v894
    %v3169 = vpop.f32.mrb[0].mxu0
    %v3170 = vadd.f32 %v2938, %v3169
    %v3171 = vpop.f32.mrb[0].mxu0
    %v3172 = vadd.f32 %v2942, %v3171
    %v3173 = vpop.f32.mrb[0].mxu0
    %v3174 = vadd.f32 %v2938, %v3173
    %v3175 = vpop.f32.mrb[0].mxu0
    %v3176 = vadd.f32 %v2942, %v3175
    %3177 = vmatprep.mubr.bf16.mxu0 %v899
    %3178 = vmatmul.mubr.bf16.gmra.mrb[0].mxu0 %v898
    %v3179 = vpop.f32.mrb[0].mxu0
    %v3180 = vadd.f32 %v2938, %v3179
    %v3181 = vpop.f32.mrb[0].mxu0
    %v3182 = vadd.f32 %v2942, %v3181
    %v3183 = vpop.f32.mrb[0].mxu0
    %v3184 = vadd.f32 %v2938, %v3183
    %v3185 = vpop.f32.mrb[0].mxu0
    %v3186 = vadd.f32 %v2942, %v3185
    %3187 = vmatprep.mubr.bf16.mxu0 %v903
    %3188 = vmatmul.mubr.bf16.gmra.mrb[0].mxu0 %v902
    %v3189 = vpop.f32.mrb[0].mxu0
    %v3190 = vadd.f32 %v2938, %v3189
    %v3191 = vpop.f32.mrb[0].mxu0
    %v3192 = vadd.f32 %v2942, %v3191
    %v3193 = vpop.f32.mrb[0].mxu0
    %v3194 = vadd.f32 %v2938, %v3193
    %v3195 = vpop.f32.mrb[0].mxu0
    %v3196 = vadd.f32 %v2942, %v3195
    %3197 = vmatprep.mubr.bf16.mxu0 %v907
    %3198 = vmatmul.mubr.bf16.gmra.mrb[0].mxu0 %v906
    %v3199 = vpop.f32.mrb[0].mxu0
    %v3200 = vadd.f32 %v2938, %v3199
    %v3201 = vpop.f32.mrb[0].mxu0
    %v3202 = vadd.f32 %v2942, %v3201
    %v3203 = vpop.f32.mrb[0].mxu0
    %v3204 = vadd.f32 %v2938, %v3203
    %v3205 = vpop.f32.mrb[0].mxu0
    %v3206 = vadd.f32 %v2942, %v3205
    %3207 = vmatprep.mubr.bf16.mxu0 %v911
    %3208 = vmatmul.mubr.bf16.gmra.mrb[0].mxu0 %v910
    %v3209 = vpop.f32.mrb[0].mxu0
    %v3210 = vadd.f32 %v2938, %v3209
    %v3211 = vpop.f32.mrb[0].mxu0
    %v3212 = vadd.f32 %v2942, %v3211
    %v3213 = vpop.f32.mrb[0].mxu0
    %v3214 = vadd.f32 %v2938, %v3213
    %v3215 = vpop.f32.mrb[0].mxu0
    %v3216 = vadd.f32 %v2942, %v3215
    %3217 = vdwg.mxu0
    %v3218 = vmax.f32 %v3140, 0.0
    %v3219 = vmax.f32 %v3142, 0.0
    %v3220 = vmax.f32 %v3144, 0.0
    %v3221 = vmax.f32 %v3146, 0.0
    %v3222 = vmax.f32 %v3150, 0.0
    %v3223 = vmax.f32 %v3152, 0.0
    %v3224 = vmax.f32 %v3154, 0.0
    %v3225 = vmax.f32 %v3156, 0.0
    %v3226 = vmax.f32 %v3160, 0.0
    %v3227 = vmax.f32 %v3162, 0.0
    %v3228 = vmax.f32 %v3164, 0.0
    %v3229 = vmax.f32 %v3166, 0.0
    %v3230 = vmax.f32 %v3170, 0.0
    %v3231 = vmax.f32 %v3172, 0.0
    %v3232 = vmax.f32 %v3174, 0.0
    %v3233 = vmax.f32 %v3176, 0.0
    %v3234 = vmax.f32 %v3180, 0.0
    %v3235 = vmax.f32 %v3182, 0.0
    %v3236 = vmax.f32 %v3184, 0.0
    %v3237 = vmax.f32 %v3186, 0.0
    %v3238 = vmax.f32 %v3190, 0.0
    %v3239 = vmax.f32 %v3192, 0.0
    %v3240 = vmax.f32 %v3194, 0.0
    %v3241 = vmax.f32 %v3196, 0.0
    %v3242 = vmax.f32 %v3200, 0.0
    %v3243 = vmax.f32 %v3202, 0.0
    %v3244 = vmax.f32 %v3204, 0.0
    %v3245 = vmax.f32 %v3206, 0.0
    %v3246 = vmax.f32 %v3210, 0.0
    %v3247 = vmax.f32 %v3212, 0.0
    %v3248 = vmax.f32 %v3214, 0.0
    %v3249 = vmax.f32 %v3216, 0.0
    %v3250 = vpack.c.bf16 %v3220, %v3218
    %v3251 = vpack.c.bf16 %v3221, %v3219
    %v3252 = vpack.c.bf16 %v3224, %v3222
    %v3253 = vpack.c.bf16 %v3225, %v3223
    %v3254 = vpack.c.bf16 %v3228, %v3226
    %v3255 = vpack.c.bf16 %v3229, %v3227
    %v3256 = vpack.c.bf16 %v3232, %v3230
    %v3257 = vpack.c.bf16 %v3233, %v3231
    %v3258 = vpack.c.bf16 %v3236, %v3234
    %v3259 = vpack.c.bf16 %v3237, %v3235
    %v3260 = vpack.c.bf16 %v3240, %v3238
    %v3261 = vpack.c.bf16 %v3241, %v3239
    %v3262 = vpack.c.bf16 %v3244, %v3242
    %v3263 = vpack.c.bf16 %v3245, %v3243
    %v3264 = vpack.c.bf16 %v3248, %v3246
    %v3265 = vpack.c.bf16 %v3249, %v3247
    %v3266 = vld [vmem:[#allocation7 + $0x34] sm:$0xff]
    %v3267 = vld [vmem:[#allocation7 + $0x3c] sm:$0xff]
    %v3268 = vld [vmem:[#allocation7 + $0x44] sm:$0xf]
    %v3269 = vld [vmem:[#allocation7 + $0x90] sm:$0xff]
    %v3270 = vld [vmem:[#allocation7 + $0x98] sm:$0xff]
    %v3271 = vld [vmem:[#allocation7 + $0xa0] sm:$0xf]
    %v3272 = vld [vmem:[#allocation7 + $0xec] sm:$0xff]
    %v3273 = vld [vmem:[#allocation7 + $0xf4] sm:$0xff]
    %v3274 = vld [vmem:[#allocation7 + $0xfc] sm:$0xf]
    %v3275 = vld [vmem:[#allocation7 + $0x148] sm:$0xff]
    %v3276 = vld [vmem:[#allocation7 + $0x150] sm:$0xff]
    %v3277 = vld [vmem:[#allocation7 + $0x158] sm:$0xf]
    %v3278 = vld [vmem:[#allocation7 + $0x1a4] sm:$0xff]
    %v3279 = vld [vmem:[#allocation7 + $0x1ac] sm:$0xff]
    %v3280 = vld [vmem:[#allocation7 + $0x1b4] sm:$0xf]
    %v3281 = vld [vmem:[#allocation7 + $0x200] sm:$0xff]
    %v3282 = vld [vmem:[#allocation7 + $0x208] sm:$0xff]
    %v3283 = vld [vmem:[#allocation7 + $0x210] sm:$0xf]
    %v3284 = vld [vmem:[#allocation7 + $0x25c] sm:$0xff]
    %v3285 = vld [vmem:[#allocation7 + $0x264] sm:$0xff]
    %v3286 = vld [vmem:[#allocation7 + $0x26c] sm:$0xf]
    %v3287 = vld [vmem:[#allocation7 + $0x2b8] sm:$0xff]
    %v3288 = vld [vmem:[#allocation7 + $0x2c0] sm:$0xff]
    %v3289 = vld [vmem:[#allocation7 + $0x2c8] sm:$0xf]
    %v3290 = vld [vmem:[#allocation7 + $0x314] sm:$0xff]
    %v3291 = vld [vmem:[#allocation7 + $0x31c] sm:$0xff]
    %v3292 = vld [vmem:[#allocation7 + $0x324] sm:$0xf]
    %v3293 = vld [vmem:[#allocation7 + $0x370] sm:$0xff]
    %v3294 = vld [vmem:[#allocation7 + $0x378] sm:$0xff]
    %v3295 = vld [vmem:[#allocation7 + $0x380] sm:$0xf]
    %v3296 = vld [vmem:[#allocation7 + $0x3cc] sm:$0xff]
    %v3297 = vld [vmem:[#allocation7 + $0x3d4] sm:$0xff]
    %v3298 = vld [vmem:[#allocation7 + $0x3dc] sm:$0xf]
    %v3299 = vld [vmem:[#allocation7 + $0x428] sm:$0xff]
    %v3300 = vld [vmem:[#allocation7 + $0x430] sm:$0xff]
    %v3301 = vld [vmem:[#allocation7 + $0x438] sm:$0xf]
    %v3302 = vld [vmem:[#allocation7 + $0x484] sm:$0xff]
    %v3303 = vld [vmem:[#allocation7 + $0x48c] sm:$0xff]
    %v3304 = vld [vmem:[#allocation7 + $0x494] sm:$0xf]
    %v3305 = vld [vmem:[#allocation7 + $0x4e0] sm:$0xff]
    %v3306 = vld [vmem:[#allocation7 + $0x4e8] sm:$0xff]
    %v3307 = vld [vmem:[#allocation7 + $0x4f0] sm:$0xf]
    %v3308 = vld [vmem:[#allocation7 + $0x53c] sm:$0xff]
    %v3309 = vld [vmem:[#allocation7 + $0x544] sm:$0xff]
    %v3310 = vld [vmem:[#allocation7 + $0x54c] sm:$0xf]
    %v3311 = vld [vmem:[#allocation7 + $0x598] sm:$0xff]
    %v3312 = vld [vmem:[#allocation7 + $0x5a0] sm:$0xff]
    %v3313 = vld [vmem:[#allocation7 + $0x5a8] sm:$0xf]
    %v3314 = vld [vmem:[#allocation7 + $0x5f4] sm:$0xff]
    %v3315 = vld [vmem:[#allocation7 + $0x5fc] sm:$0xff]
    %v3316 = vld [vmem:[#allocation7 + $0x604] sm:$0xf]
    %v3317 = vld [vmem:[#allocation7 + $0x650] sm:$0xff]
    %v3318 = vld [vmem:[#allocation7 + $0x658] sm:$0xff]
    %v3319 = vld [vmem:[#allocation7 + $0x660] sm:$0xf]
    %v3320 = vld [vmem:[#allocation7 + $0x6ac] sm:$0xff]
    %v3321 = vld [vmem:[#allocation7 + $0x6b4] sm:$0xff]
    %v3322 = vld [vmem:[#allocation7 + $0x6bc] sm:$0xf]
    %v3323 = vld [vmem:[#allocation7 + $0x708] sm:$0xff]
    %v3324 = vld [vmem:[#allocation7 + $0x710] sm:$0xff]
    %v3325 = vld [vmem:[#allocation7 + $0x718] sm:$0xf]
    %v3326 = vld [vmem:[#allocation7 + $0x764] sm:$0xff]
    %v3327 = vld [vmem:[#allocation7 + $0x76c] sm:$0xff]
    %v3328 = vld [vmem:[#allocation7 + $0x774] sm:$0xf]
    %v3329 = vld [vmem:[#allocation7 + $0x7c0] sm:$0xff]
    %v3330 = vld [vmem:[#allocation7 + $0x7c8] sm:$0xff]
    %v3331 = vld [vmem:[#allocation7 + $0x7d0] sm:$0xf]
    %v3332 = vld [vmem:[#allocation7 + $0x81c] sm:$0xff]
    %v3333 = vld [vmem:[#allocation7 + $0x824] sm:$0xff]
    %v3334 = vld [vmem:[#allocation7 + $0x82c] sm:$0xf]
    %v3335 = vld [vmem:[#allocation7 + $0x878] sm:$0xff]
    %v3336 = vld [vmem:[#allocation7 + $0x880] sm:$0xff]
    %v3337 = vld [vmem:[#allocation7 + $0x888] sm:$0xf]
    %v3338 = vld [vmem:[#allocation7 + $0x8d4] sm:$0xff]
    %v3339 = vld [vmem:[#allocation7 + $0x8dc] sm:$0xff]
    %v3340 = vld [vmem:[#allocation7 + $0x8e4] sm:$0xf]
    %v3341 = vld [vmem:[#allocation7 + $0x930] sm:$0xff]
    %v3342 = vld [vmem:[#allocation7 + $0x938] sm:$0xff]
    %v3343 = vld [vmem:[#allocation7 + $0x940] sm:$0xf]
    %v3344 = vld [vmem:[#allocation7 + $0x98c] sm:$0xff]
    %v3345 = vld [vmem:[#allocation7 + $0x994] sm:$0xff]
    %v3346 = vld [vmem:[#allocation7 + $0x99c] sm:$0xf]
    %v3347 = vld [vmem:[#allocation7 + $0x9e8] sm:$0xff]
    %v3348 = vld [vmem:[#allocation7 + $0x9f0] sm:$0xff]
    %v3349 = vld [vmem:[#allocation7 + $0x9f8] sm:$0xf]
    %v3350 = vld [vmem:[#allocation7 + $0xa44] sm:$0xff]
    %v3351 = vld [vmem:[#allocation7 + $0xa4c] sm:$0xff]
    %v3352 = vld [vmem:[#allocation7 + $0xa54] sm:$0xf]
    %v3353 = vld [vmem:[#allocation7 + $0xaa0] sm:$0xff]
    %v3354 = vld [vmem:[#allocation7 + $0xaa8] sm:$0xff]
    %v3355 = vld [vmem:[#allocation7 + $0xab0] sm:$0xf]
    %v3356 = vld [vmem:[#allocation7 + $0xafc] sm:$0xff]
    %v3357 = vld [vmem:[#allocation7 + $0xb04] sm:$0xff]
    %v3358 = vld [vmem:[#allocation7 + $0xb0c] sm:$0xf]
    %v3359 = vld [vmem:[#allocation7 + $0xb58] sm:$0xff]
    %v3360 = vld [vmem:[#allocation7 + $0xb60] sm:$0xff]
    %v3361 = vld [vmem:[#allocation7 + $0xb68] sm:$0xf]
    %v3362 = vld [vmem:[#allocation10 + $0xd] sm:$0x1f]
    %v3364 = vlaneseq
    %v3365 = vshrl.u32 %v3364, 7
    %v3366 = vsub.s32 0, %v3365
    %v3367 = vrot.slane %v3362, %v3366
    %v3368 = vlaneseq
    %v3369 = vshrl.u32 %v3368, 7
    %v3370 = vsub.s32 1, %v3369
    %v3371 = vrot.slane %v3362, %v3370
    %v3372 = vlaneseq
    %v3373 = vshrl.u32 %v3372, 7
    %v3374 = vsub.s32 2, %v3373
    %v3375 = vrot.slane %v3362, %v3374
    %v3376 = vlaneseq
    %v3377 = vshrl.u32 %v3376, 7
    %v3378 = vsub.s32 3, %v3377
    %v3379 = vrot.slane %v3362, %v3378
    %v3380 = vlaneseq
    %v3381 = vshrl.u32 %v3380, 7
    %v3382 = vsub.s32 4, %v3381
    %v3383 = vrot.slane %v3362, %v3382
    %v3485 = vunpack.c.l.b16 %v3266
    %v3486 = vunpack.c.h.b16 %v3266
    %v3487 = vunpack.c.l.b16 %v3267
    %v3488 = vunpack.c.h.b16 %v3267
    %v3489 = vunpack.c.l.b16 %v3268
    %v3490 = vunpack.c.l.b16 %v3269
    %v3491 = vunpack.c.h.b16 %v3269
    %v3492 = vunpack.c.l.b16 %v3270
    %v3493 = vunpack.c.h.b16 %v3270
    %v3494 = vunpack.c.l.b16 %v3271
    %v3495 = vunpack.c.l.b16 %v3272
    %v3496 = vunpack.c.h.b16 %v3272
    %v3497 = vunpack.c.l.b16 %v3273
    %v3498 = vunpack.c.h.b16 %v3273
    %v3499 = vunpack.c.l.b16 %v3274
    %v3500 = vunpack.c.l.b16 %v3275
    %v3501 = vunpack.c.h.b16 %v3275
    %v3502 = vunpack.c.l.b16 %v3276
    %v3503 = vunpack.c.h.b16 %v3276
    %v3504 = vunpack.c.l.b16 %v3277
    %v3505 = vunpack.c.l.b16 %v3278
    %v3506 = vunpack.c.h.b16 %v3278
    %v3507 = vunpack.c.l.b16 %v3279
    %v3508 = vunpack.c.h.b16 %v3279
    %v3509 = vunpack.c.l.b16 %v3280
    %v3510 = vunpack.c.l.b16 %v3281
    %v3511 = vunpack.c.h.b16 %v3281
    %v3512 = vunpack.c.l.b16 %v3282
    %v3513 = vunpack.c.h.b16 %v3282
    %v3514 = vunpack.c.l.b16 %v3283
    %v3515 = vunpack.c.l.b16 %v3284
    %v3516 = vunpack.c.h.b16 %v3284
    %v3517 = vunpack.c.l.b16 %v3285
    %v3518 = vunpack.c.h.b16 %v3285
    %v3519 = vunpack.c.l.b16 %v3286
    %v3520 = vunpack.c.l.b16 %v3287
    %v3521 = vunpack.c.h.b16 %v3287
    %v3522 = vunpack.c.l.b16 %v3288
    %v3523 = vunpack.c.h.b16 %v3288
    %v3524 = vunpack.c.l.b16 %v3289
    %v3525 = vunpack.c.l.b16 %v3290
    %v3526 = vunpack.c.h.b16 %v3290
    %v3527 = vunpack.c.l.b16 %v3291
    %v3528 = vunpack.c.h.b16 %v3291
    %v3529 = vunpack.c.l.b16 %v3292
    %v3530 = vunpack.c.l.b16 %v3293
    %v3531 = vunpack.c.h.b16 %v3293
    %v3532 = vunpack.c.l.b16 %v3294
    %v3533 = vunpack.c.h.b16 %v3294
    %v3534 = vunpack.c.l.b16 %v3295
    %v3535 = vunpack.c.l.b16 %v3296
    %v3536 = vunpack.c.h.b16 %v3296
    %v3537 = vunpack.c.l.b16 %v3297
    %v3538 = vunpack.c.h.b16 %v3297
    %v3539 = vunpack.c.l.b16 %v3298
    %v3540 = vunpack.c.l.b16 %v3299
    %v3541 = vunpack.c.h.b16 %v3299
    %v3542 = vunpack.c.l.b16 %v3300
    %v3543 = vunpack.c.h.b16 %v3300
    %v3544 = vunpack.c.l.b16 %v3301
    %v3545 = vunpack.c.l.b16 %v3302
    %v3546 = vunpack.c.h.b16 %v3302
    %v3547 = vunpack.c.l.b16 %v3303
    %v3548 = vunpack.c.h.b16 %v3303
    %v3549 = vunpack.c.l.b16 %v3304
    %v3550 = vunpack.c.l.b16 %v3305
    %v3551 = vunpack.c.h.b16 %v3305
    %v3552 = vunpack.c.l.b16 %v3306
    %v3553 = vunpack.c.h.b16 %v3306
    %v3554 = vunpack.c.l.b16 %v3307
    %v3555 = vunpack.c.l.b16 %v3308
    %v3556 = vunpack.c.h.b16 %v3308
    %v3557 = vunpack.c.l.b16 %v3309
    %v3558 = vunpack.c.h.b16 %v3309
    %v3559 = vunpack.c.l.b16 %v3310
    %v3560 = vunpack.c.l.b16 %v3311
    %v3561 = vunpack.c.h.b16 %v3311
    %v3562 = vunpack.c.l.b16 %v3312
    %v3563 = vunpack.c.h.b16 %v3312
    %v3564 = vunpack.c.l.b16 %v3313
    %v3565 = vunpack.c.l.b16 %v3314
    %v3566 = vunpack.c.h.b16 %v3314
    %v3567 = vunpack.c.l.b16 %v3315
    %v3568 = vunpack.c.h.b16 %v3315
    %v3569 = vunpack.c.l.b16 %v3316
    %v3570 = vunpack.c.l.b16 %v3317
    %v3571 = vunpack.c.h.b16 %v3317
    %v3572 = vunpack.c.l.b16 %v3318
    %v3573 = vunpack.c.h.b16 %v3318
    %v3574 = vunpack.c.l.b16 %v3319
    %v3575 = vunpack.c.l.b16 %v3320
    %v3576 = vunpack.c.h.b16 %v3320
    %v3577 = vunpack.c.l.b16 %v3321
    %v3578 = vunpack.c.h.b16 %v3321
    %v3579 = vunpack.c.l.b16 %v3322
    %v3580 = vunpack.c.l.b16 %v3323
    %v3581 = vunpack.c.h.b16 %v3323
    %v3582 = vunpack.c.l.b16 %v3324
    %v3583 = vunpack.c.h.b16 %v3324
    %v3584 = vunpack.c.l.b16 %v3325
    %v3585 = vunpack.c.l.b16 %v3326
    %v3586 = vunpack.c.h.b16 %v3326
    %v3587 = vunpack.c.l.b16 %v3327
    %v3588 = vunpack.c.h.b16 %v3327
    %v3589 = vunpack.c.l.b16 %v3328
    %v3590 = vunpack.c.l.b16 %v3329
    %v3591 = vunpack.c.h.b16 %v3329
    %v3592 = vunpack.c.l.b16 %v3330
    %v3593 = vunpack.c.h.b16 %v3330
    %v3594 = vunpack.c.l.b16 %v3331
    %v3595 = vunpack.c.l.b16 %v3332
    %v3596 = vunpack.c.h.b16 %v3332
    %v3597 = vunpack.c.l.b16 %v3333
    %v3598 = vunpack.c.h.b16 %v3333
    %v3599 = vunpack.c.l.b16 %v3334
    %v3600 = vunpack.c.l.b16 %v3335
    %v3601 = vunpack.c.h.b16 %v3335
    %v3602 = vunpack.c.l.b16 %v3336
    %v3603 = vunpack.c.h.b16 %v3336
    %v3604 = vunpack.c.l.b16 %v3337
    %v3605 = vunpack.c.l.b16 %v3338
    %v3606 = vunpack.c.h.b16 %v3338
    %v3607 = vunpack.c.l.b16 %v3339
    %v3608 = vunpack.c.h.b16 %v3339
    %v3609 = vunpack.c.l.b16 %v3340
    %v3610 = vunpack.c.l.b16 %v3341
    %v3611 = vunpack.c.h.b16 %v3341
    %v3612 = vunpack.c.l.b16 %v3342
    %v3613 = vunpack.c.h.b16 %v3342
    %v3614 = vunpack.c.l.b16 %v3343
    %v3615 = vunpack.c.l.b16 %v3344
    %v3616 = vunpack.c.h.b16 %v3344
    %v3617 = vunpack.c.l.b16 %v3345
    %v3618 = vunpack.c.h.b16 %v3345
    %v3619 = vunpack.c.l.b16 %v3346
    %v3620 = vunpack.c.l.b16 %v3347
    %v3621 = vunpack.c.h.b16 %v3347
    %v3622 = vunpack.c.l.b16 %v3348
    %v3623 = vunpack.c.h.b16 %v3348
    %v3624 = vunpack.c.l.b16 %v3349
    %v3625 = vunpack.c.l.b16 %v3350
    %v3626 = vunpack.c.h.b16 %v3350
    %v3627 = vunpack.c.l.b16 %v3351
    %v3628 = vunpack.c.h.b16 %v3351
    %v3629 = vunpack.c.l.b16 %v3352
    %v3630 = vunpack.c.l.b16 %v3353
    %v3631 = vunpack.c.h.b16 %v3353
    %v3632 = vunpack.c.l.b16 %v3354
    %v3633 = vunpack.c.h.b16 %v3354
    %v3634 = vunpack.c.l.b16 %v3355
    %v3635 = vunpack.c.l.b16 %v3356
    %v3636 = vunpack.c.h.b16 %v3356
    %v3637 = vunpack.c.l.b16 %v3357
    %v3638 = vunpack.c.h.b16 %v3357
    %v3639 = vunpack.c.l.b16 %v3358
    %v3640 = vunpack.c.l.b16 %v3359
    %v3641 = vunpack.c.h.b16 %v3359
    %v3642 = vunpack.c.l.b16 %v3360
    %v3643 = vunpack.c.h.b16 %v3360
    %v3644 = vunpack.c.l.b16 %v3361
    %v3645 = vpack.c.b16 %v3490, %v3485
    %v3646 = vpack.c.b16 %v3491, %v3486
    %v3647 = vpack.c.b16 %v3492, %v3487
    %v3648 = vpack.c.b16 %v3493, %v3488
    %v3649 = vpack.c.b16 %v3494, %v3489
    %v3650 = vpack.c.b16 %v3500, %v3495
    %v3651 = vpack.c.b16 %v3501, %v3496
    %v3652 = vpack.c.b16 %v3502, %v3497
    %v3653 = vpack.c.b16 %v3503, %v3498
    %v3654 = vpack.c.b16 %v3504, %v3499
    %v3655 = vpack.c.b16 %v3510, %v3505
    %v3656 = vpack.c.b16 %v3511, %v3506
    %v3657 = vpack.c.b16 %v3512, %v3507
    %v3658 = vpack.c.b16 %v3513, %v3508
    %v3659 = vpack.c.b16 %v3514, %v3509
    %v3660 = vpack.c.b16 %v3520, %v3515
    %v3661 = vpack.c.b16 %v3521, %v3516
    %v3662 = vpack.c.b16 %v3522, %v3517
    %v3663 = vpack.c.b16 %v3523, %v3518
    %v3664 = vpack.c.b16 %v3524, %v3519
    %v3665 = vpack.c.b16 %v3530, %v3525
    %v3666 = vpack.c.b16 %v3531, %v3526
    %v3667 = vpack.c.b16 %v3532, %v3527
    %v3668 = vpack.c.b16 %v3533, %v3528
    %v3669 = vpack.c.b16 %v3534, %v3529
    %v3670 = vpack.c.b16 %v3540, %v3535
    %v3671 = vpack.c.b16 %v3541, %v3536
    %v3672 = vpack.c.b16 %v3542, %v3537
    %v3673 = vpack.c.b16 %v3543, %v3538
    %v3674 = vpack.c.b16 %v3544, %v3539
    %v3675 = vpack.c.b16 %v3550, %v3545
    %v3676 = vpack.c.b16 %v3551, %v3546
    %v3677 = vpack.c.b16 %v3552, %v3547
    %v3678 = vpack.c.b16 %v3553, %v3548
    %v3679 = vpack.c.b16 %v3554, %v3549
    %v3680 = vpack.c.b16 %v3560, %v3555
    %v3681 = vpack.c.b16 %v3561, %v3556
    %v3682 = vpack.c.b16 %v3562, %v3557
    %v3683 = vpack.c.b16 %v3563, %v3558
    %v3684 = vpack.c.b16 %v3564, %v3559
    %v3685 = vpack.c.b16 %v3570, %v3565
    %v3686 = vpack.c.b16 %v3571, %v3566
    %v3687 = vpack.c.b16 %v3572, %v3567
    %v3688 = vpack.c.b16 %v3573, %v3568
    %v3689 = vpack.c.b16 %v3574, %v3569
    %v3690 = vpack.c.b16 %v3580, %v3575
    %v3691 = vpack.c.b16 %v3581, %v3576
    %v3692 = vpack.c.b16 %v3582, %v3577
    %v3693 = vpack.c.b16 %v3583, %v3578
    %v3694 = vpack.c.b16 %v3584, %v3579
    %v3695 = vpack.c.b16 %v3590, %v3585
    %v3696 = vpack.c.b16 %v3591, %v3586
    %v3697 = vpack.c.b16 %v3592, %v3587
    %v3698 = vpack.c.b16 %v3593, %v3588
    %v3699 = vpack.c.b16 %v3594, %v3589
    %v3700 = vpack.c.b16 %v3600, %v3595
    %v3701 = vpack.c.b16 %v3601, %v3596
    %v3702 = vpack.c.b16 %v3602, %v3597
    %v3703 = vpack.c.b16 %v3603, %v3598
    %v3704 = vpack.c.b16 %v3604, %v3599
    %v3705 = vpack.c.b16 %v3610, %v3605
    %v3706 = vpack.c.b16 %v3611, %v3606
    %v3707 = vpack.c.b16 %v3612, %v3607
    %v3708 = vpack.c.b16 %v3613, %v3608
    %v3709 = vpack.c.b16 %v3614, %v3609
    %v3710 = vpack.c.b16 %v3620, %v3615
    %v3711 = vpack.c.b16 %v3621, %v3616
    %v3712 = vpack.c.b16 %v3622, %v3617
    %v3713 = vpack.c.b16 %v3623, %v3618
    %v3714 = vpack.c.b16 %v3624, %v3619
    %v3715 = vpack.c.b16 %v3630, %v3625
    %v3716 = vpack.c.b16 %v3631, %v3626
    %v3717 = vpack.c.b16 %v3632, %v3627
    %v3718 = vpack.c.b16 %v3633, %v3628
    %v3719 = vpack.c.b16 %v3634, %v3629
    %v3720 = vpack.c.b16 %v3640, %v3635
    %v3721 = vpack.c.b16 %v3641, %v3636
    %v3722 = vpack.c.b16 %v3642, %v3637
    %v3723 = vpack.c.b16 %v3643, %v3638
    %v3724 = vpack.c.b16 %v3644, %v3639
    %3805 = vmatprep.subr.bf16.mxu0 %v3646
    %3806 = vmatpush1.bf16.msra.mxu0 %v3645
    %3807 = vmatprep.subr.bf16.mxu0 %v3651
    %3808 = vmatpush1.bf16.msra.mxu0 %v3650
    %3809 = vmatprep.subr.bf16.mxu0 %v3656
    %3810 = vmatpush1.bf16.msra.mxu0 %v3655
    %3811 = vmatprep.subr.bf16.mxu0 %v3661
    %3812 = vmatpush1.bf16.msra.mxu0 %v3660
    %3813 = vmatprep.subr.bf16.mxu0 %v3666
    %3814 = vmatpush1.bf16.msra.mxu0 %v3665
    %3815 = vmatprep.subr.bf16.mxu0 %v3671
    %3816 = vmatpush1.bf16.msra.mxu0 %v3670
    %3817 = vmatprep.subr.bf16.mxu0 %v3676
    %3818 = vmatpush1.bf16.msra.mxu0 %v3675
    %3819 = vmatprep.subr.bf16.mxu0 %v3681
    %3820 = vmatpush1.bf16.msra.mxu0 %v3680
    %3821 = vmatprep.subr.bf16.mxu0 %v3686
    %3822 = vmatpush1.bf16.msra.mxu0 %v3685
    %3823 = vmatprep.subr.bf16.mxu0 %v3691
    %3824 = vmatpush1.bf16.msra.mxu0 %v3690
    %3825 = vmatprep.subr.bf16.mxu0 %v3696
    %3826 = vmatpush1.bf16.msra.mxu0 %v3695
    %3827 = vmatprep.subr.bf16.mxu0 %v3701
    %3828 = vmatpush1.bf16.msra.mxu0 %v3700
    %3829 = vmatprep.subr.bf16.mxu0 %v3706
    %3830 = vmatpush1.bf16.msra.mxu0 %v3705
    %3831 = vmatprep.subr.bf16.mxu0 %v3711
    %3832 = vmatpush1.bf16.msra.mxu0 %v3710
    %3833 = vmatprep.subr.bf16.mxu0 %v3716
    %3834 = vmatpush1.bf16.msra.mxu0 %v3715
    %3835 = vmatprep.subr.bf16.mxu0 %v3721
    %3836 = vmatpush1.bf16.msra.mxu0 %v3720
    %3837 = vmatprep.mubr.bf16.mxu0 %v3251
    %3838 = vmatmul.mubr.bf16.gmra.mrb[0].mxu0 %v3250
    %v3839 = vpop.f32.mrb[0].mxu0
    %v3840 = vadd.f32 %v3367, %v3839
    %v3841 = vpop.f32.mrb[0].mxu0
    %v3842 = vadd.f32 %v3371, %v3841
    %v3843 = vpop.f32.mrb[0].mxu0
    %v3844 = vadd.f32 %v3367, %v3843
    %v3845 = vpop.f32.mrb[0].mxu0
    %v3846 = vadd.f32 %v3371, %v3845
    %3847 = vmatprep.mubr.bf16.mxu0 %v3253
    %3848 = vmatmul.mubr.bf16.gmra.mrb[0].mxu0 %v3252
    %v3849 = vpop.f32.mrb[0].mxu0
    %v3850 = vadd.f32 %v3367, %v3849
    %v3851 = vpop.f32.mrb[0].mxu0
    %v3852 = vadd.f32 %v3371, %v3851
    %v3853 = vpop.f32.mrb[0].mxu0
    %v3854 = vadd.f32 %v3367, %v3853
    %v3855 = vpop.f32.mrb[0].mxu0
    %v3856 = vadd.f32 %v3371, %v3855
    %3857 = vmatprep.mubr.bf16.mxu0 %v3255
    %3858 = vmatmul.mubr.bf16.gmra.mrb[0].mxu0 %v3254
    %v3859 = vpop.f32.mrb[0].mxu0
    %v3860 = vadd.f32 %v3367, %v3859
    %v3861 = vpop.f32.mrb[0].mxu0
    %v3862 = vadd.f32 %v3371, %v3861
    %v3863 = vpop.f32.mrb[0].mxu0
    %v3864 = vadd.f32 %v3367, %v3863
    %v3865 = vpop.f32.mrb[0].mxu0
    %v3866 = vadd.f32 %v3371, %v3865
    %3867 = vmatprep.mubr.bf16.mxu0 %v3257
    %3868 = vmatmul.mubr.bf16.gmra.mrb[0].mxu0 %v3256
    %v3869 = vpop.f32.mrb[0].mxu0
    %v3870 = vadd.f32 %v3367, %v3869
    %v3871 = vpop.f32.mrb[0].mxu0
    %v3872 = vadd.f32 %v3371, %v3871
    %v3873 = vpop.f32.mrb[0].mxu0
    %v3874 = vadd.f32 %v3367, %v3873
    %v3875 = vpop.f32.mrb[0].mxu0
    %v3876 = vadd.f32 %v3371, %v3875
    %3877 = vmatprep.mubr.bf16.mxu0 %v3259
    %3878 = vmatmul.mubr.bf16.gmra.mrb[0].mxu0 %v3258
    %v3879 = vpop.f32.mrb[0].mxu0
    %v3880 = vadd.f32 %v3367, %v3879
    %v3881 = vpop.f32.mrb[0].mxu0
    %v3882 = vadd.f32 %v3371, %v3881
    %v3883 = vpop.f32.mrb[0].mxu0
    %v3884 = vadd.f32 %v3367, %v3883
    %v3885 = vpop.f32.mrb[0].mxu0
    %v3886 = vadd.f32 %v3371, %v3885
    %3887 = vmatprep.mubr.bf16.mxu0 %v3261
    %3888 = vmatmul.mubr.bf16.gmra.mrb[0].mxu0 %v3260
    %v3889 = vpop.f32.mrb[0].mxu0
    %v3890 = vadd.f32 %v3367, %v3889
    %v3891 = vpop.f32.mrb[0].mxu0
    %v3892 = vadd.f32 %v3371, %v3891
    %v3893 = vpop.f32.mrb[0].mxu0
    %v3894 = vadd.f32 %v3367, %v3893
    %v3895 = vpop.f32.mrb[0].mxu0
    %v3896 = vadd.f32 %v3371, %v3895
    %3897 = vmatprep.mubr.bf16.mxu0 %v3263
    %3898 = vmatmul.mubr.bf16.gmra.mrb[0].mxu0 %v3262
    %v3899 = vpop.f32.mrb[0].mxu0
    %v3900 = vadd.f32 %v3367, %v3899
    %v3901 = vpop.f32.mrb[0].mxu0
    %v3902 = vadd.f32 %v3371, %v3901
    %v3903 = vpop.f32.mrb[0].mxu0
    %v3904 = vadd.f32 %v3367, %v3903
    %v3905 = vpop.f32.mrb[0].mxu0
    %v3906 = vadd.f32 %v3371, %v3905
    %3907 = vmatprep.mubr.bf16.mxu0 %v3265
    %3908 = vmatmul.mubr.bf16.gmra.mrb[0].mxu0 %v3264
    %v3909 = vpop.f32.mrb[0].mxu0
    %v3910 = vadd.f32 %v3367, %v3909
    %v3911 = vpop.f32.mrb[0].mxu0
    %v3912 = vadd.f32 %v3371, %v3911
    %v3913 = vpop.f32.mrb[0].mxu0
    %v3914 = vadd.f32 %v3367, %v3913
    %v3915 = vpop.f32.mrb[0].mxu0
    %v3916 = vadd.f32 %v3371, %v3915
    %3917 = vdwg.mxu0
    %3918 = vmatprep.subr.bf16.mxu0 %v3648
    %3919 = vmatpush1.bf16.msra.mxu0 %v3647
    %3920 = vmatprep.subr.bf16.mxu0 %v3653
    %3921 = vmatpush1.bf16.msra.mxu0 %v3652
    %3922 = vmatprep.subr.bf16.mxu0 %v3658
    %3923 = vmatpush1.bf16.msra.mxu0 %v3657
    %3924 = vmatprep.subr.bf16.mxu0 %v3663
    %3925 = vmatpush1.bf16.msra.mxu0 %v3662
    %3926 = vmatprep.subr.bf16.mxu0 %v3668
    %3927 = vmatpush1.bf16.msra.mxu0 %v3667
    %3928 = vmatprep.subr.bf16.mxu0 %v3673
    %3929 = vmatpush1.bf16.msra.mxu0 %v3672
    %3930 = vmatprep.subr.bf16.mxu0 %v3678
    %3931 = vmatpush1.bf16.msra.mxu0 %v3677
    %3932 = vmatprep.subr.bf16.mxu0 %v3683
    %3933 = vmatpush1.bf16.msra.mxu0 %v3682
    %3934 = vmatprep.subr.bf16.mxu0 %v3688
    %3935 = vmatpush1.bf16.msra.mxu0 %v3687
    %3936 = vmatprep.subr.bf16.mxu0 %v3693
    %3937 = vmatpush1.bf16.msra.mxu0 %v3692
    %3938 = vmatprep.subr.bf16.mxu0 %v3698
    %3939 = vmatpush1.bf16.msra.mxu0 %v3697
    %3940 = vmatprep.subr.bf16.mxu0 %v3703
    %3941 = vmatpush1.bf16.msra.mxu0 %v3702
    %3942 = vmatprep.subr.bf16.mxu0 %v3708
    %3943 = vmatpush1.bf16.msra.mxu0 %v3707
    %3944 = vmatprep.subr.bf16.mxu0 %v3713
    %3945 = vmatpush1.bf16.msra.mxu0 %v3712
    %3946 = vmatprep.subr.bf16.mxu0 %v3718
    %3947 = vmatpush1.bf16.msra.mxu0 %v3717
    %3948 = vmatprep.subr.bf16.mxu0 %v3723
    %3949 = vmatpush1.bf16.msra.mxu0 %v3722
    %3950 = vmatprep.mubr.bf16.mxu0 %v3251
    %3951 = vmatmul.mubr.bf16.gmra.mrb[0].mxu0 %v3250
    %v3952 = vpop.f32.mrb[0].mxu0
    %v3953 = vadd.f32 %v3375, %v3952
    %v3954 = vpop.f32.mrb[0].mxu0
    %v3955 = vadd.f32 %v3379, %v3954
    %v3956 = vpop.f32.mrb[0].mxu0
    %v3957 = vadd.f32 %v3375, %v3956
    %v3958 = vpop.f32.mrb[0].mxu0
    %v3959 = vadd.f32 %v3379, %v3958
    %3960 = vmatprep.mubr.bf16.mxu0 %v3253
    %3961 = vmatmul.mubr.bf16.gmra.mrb[0].mxu0 %v3252
    %v3962 = vpop.f32.mrb[0].mxu0
    %v3963 = vadd.f32 %v3375, %v3962
    %v3964 = vpop.f32.mrb[0].mxu0
    %v3965 = vadd.f32 %v3379, %v3964
    %v3966 = vpop.f32.mrb[0].mxu0
    %v3967 = vadd.f32 %v3375, %v3966
    %v3968 = vpop.f32.mrb[0].mxu0
    %v3969 = vadd.f32 %v3379, %v3968
    %3970 = vmatprep.mubr.bf16.mxu0 %v3255
    %3971 = vmatmul.mubr.bf16.gmra.mrb[0].mxu0 %v3254
    %v3972 = vpop.f32.mrb[0].mxu0
    %v3973 = vadd.f32 %v3375, %v3972
    %v3974 = vpop.f32.mrb[0].mxu0
    %v3975 = vadd.f32 %v3379, %v3974
    %v3976 = vpop.f32.mrb[0].mxu0
    %v3977 = vadd.f32 %v3375, %v3976
    %v3978 = vpop.f32.mrb[0].mxu0
    %v3979 = vadd.f32 %v3379, %v3978
    %3980 = vmatprep.mubr.bf16.mxu0 %v3257
    %3981 = vmatmul.mubr.bf16.gmra.mrb[0].mxu0 %v3256
    %v3982 = vpop.f32.mrb[0].mxu0
    %v3983 = vadd.f32 %v3375, %v3982
    %v3984 = vpop.f32.mrb[0].mxu0
    %v3985 = vadd.f32 %v3379, %v3984
    %v3986 = vpop.f32.mrb[0].mxu0
    %v3987 = vadd.f32 %v3375, %v3986
    %v3988 = vpop.f32.mrb[0].mxu0
    %v3989 = vadd.f32 %v3379, %v3988
    %3990 = vmatprep.mubr.bf16.mxu0 %v3259
    %3991 = vmatmul.mubr.bf16.gmra.mrb[0].mxu0 %v3258
    %v3992 = vpop.f32.mrb[0].mxu0
    %v3993 = vadd.f32 %v3375, %v3992
    %v3994 = vpop.f32.mrb[0].mxu0
    %v3995 = vadd.f32 %v3379, %v3994
    %v3996 = vpop.f32.mrb[0].mxu0
    %v3997 = vadd.f32 %v3375, %v3996
    %v3998 = vpop.f32.mrb[0].mxu0
    %v3999 = vadd.f32 %v3379, %v3998
    %4000 = vmatprep.mubr.bf16.mxu0 %v3261
    %4001 = vmatmul.mubr.bf16.gmra.mrb[0].mxu0 %v3260
    %v4002 = vpop.f32.mrb[0].mxu0
    %v4003 = vadd.f32 %v3375, %v4002
    %v4004 = vpop.f32.mrb[0].mxu0
    %v4005 = vadd.f32 %v3379, %v4004
    %v4006 = vpop.f32.mrb[0].mxu0
    %v4007 = vadd.f32 %v3375, %v4006
    %v4008 = vpop.f32.mrb[0].mxu0
    %v4009 = vadd.f32 %v3379, %v4008
    %4010 = vmatprep.mubr.bf16.mxu0 %v3263
    %4011 = vmatmul.mubr.bf16.gmra.mrb[0].mxu0 %v3262
    %v4012 = vpop.f32.mrb[0].mxu0
    %v4013 = vadd.f32 %v3375, %v4012
    %v4014 = vpop.f32.mrb[0].mxu0
    %v4015 = vadd.f32 %v3379, %v4014
    %v4016 = vpop.f32.mrb[0].mxu0
    %v4017 = vadd.f32 %v3375, %v4016
    %v4018 = vpop.f32.mrb[0].mxu0
    %v4019 = vadd.f32 %v3379, %v4018
    %4020 = vmatprep.mubr.bf16.mxu0 %v3265
    %4021 = vmatmul.mubr.bf16.gmra.mrb[0].mxu0 %v3264
    %v4022 = vpop.f32.mrb[0].mxu0
    %v4023 = vadd.f32 %v3375, %v4022
    %v4024 = vpop.f32.mrb[0].mxu0
    %v4025 = vadd.f32 %v3379, %v4024
    %v4026 = vpop.f32.mrb[0].mxu0
    %v4027 = vadd.f32 %v3375, %v4026
    %v4028 = vpop.f32.mrb[0].mxu0
    %v4029 = vadd.f32 %v3379, %v4028
    %4030 = vdwg.mxu0
    %4031 = vmatprep.subr.bf16.mxu0 0
    %4032 = vmatpush1.bf16.msra.mxu0 %v3649
    %4033 = vmatprep.subr.bf16.mxu0 0
    %4034 = vmatpush1.bf16.msra.mxu0 %v3654
    %4035 = vmatprep.subr.bf16.mxu0 0
    %4036 = vmatpush1.bf16.msra.mxu0 %v3659
    %4037 = vmatprep.subr.bf16.mxu0 0
    %4038 = vmatpush1.bf16.msra.mxu0 %v3664
    %4039 = vmatprep.subr.bf16.mxu0 0
    %4040 = vmatpush1.bf16.msra.mxu0 %v3669
    %4041 = vmatprep.subr.bf16.mxu0 0
    %4042 = vmatpush1.bf16.msra.mxu0 %v3674
    %4043 = vmatprep.subr.bf16.mxu0 0
    %4044 = vmatpush1.bf16.msra.mxu0 %v3679
    %4045 = vmatprep.subr.bf16.mxu0 0
    %4046 = vmatpush1.bf16.msra.mxu0 %v3684
    %4047 = vmatprep.subr.bf16.mxu0 0
    %4048 = vmatpush1.bf16.msra.mxu0 %v3689
    %4049 = vmatprep.subr.bf16.mxu0 0
    %4050 = vmatpush1.bf16.msra.mxu0 %v3694
    %4051 = vmatprep.subr.bf16.mxu0 0
    %4052 = vmatpush1.bf16.msra.mxu0 %v3699
    %4053 = vmatprep.subr.bf16.mxu0 0
    %4054 = vmatpush1.bf16.msra.mxu0 %v3704
    %4055 = vmatprep.subr.bf16.mxu0 0
    %4056 = vmatpush1.bf16.msra.mxu0 %v3709
    %4057 = vmatprep.subr.bf16.mxu0 0
    %4058 = vmatpush1.bf16.msra.mxu0 %v3714
    %4059 = vmatprep.subr.bf16.mxu0 0
    %4060 = vmatpush1.bf16.msra.mxu0 %v3719
    %4061 = vmatprep.subr.bf16.mxu0 0
    %4062 = vmatpush1.bf16.msra.mxu0 %v3724
    %4063 = vmatprep.mubr.bf16.mxu0 %v3251
    %4064 = vmatmul.mubr.bf16.gmra.mrb[0].mxu0 %v3250
    %v4065 = vpop.f32.mrb[0].mxu0
    %v4066 = vadd.f32 %v3383, %v4065
    %v4067 = vpop.f32.mrb[0].mxu0
    %v4068 = vpop.f32.mrb[0].mxu0
    %v4069 = vadd.f32 %v3383, %v4068
    %v4070 = vpop.f32.mrb[0].mxu0
    %4071 = vmatprep.mubr.bf16.mxu0 %v3253
    %4072 = vmatmul.mubr.bf16.gmra.mrb[0].mxu0 %v3252
    %v4073 = vpop.f32.mrb[0].mxu0
    %v4074 = vadd.f32 %v3383, %v4073
    %v4075 = vpop.f32.mrb[0].mxu0
    %v4076 = vpop.f32.mrb[0].mxu0
    %v4077 = vadd.f32 %v3383, %v4076
    %v4078 = vpop.f32.mrb[0].mxu0
    %4079 = vmatprep.mubr.bf16.mxu0 %v3255
    %4080 = vmatmul.mubr.bf16.gmra.mrb[0].mxu0 %v3254
    %v4081 = vpop.f32.mrb[0].mxu0
    %v4082 = vadd.f32 %v3383, %v4081
    %v4083 = vpop.f32.mrb[0].mxu0
    %v4084 = vpop.f32.mrb[0].mxu0
    %v4085 = vadd.f32 %v3383, %v4084
    %v4086 = vpop.f32.mrb[0].mxu0
    %4087 = vmatprep.mubr.bf16.mxu0 %v3257
    %4088 = vmatmul.mubr.bf16.gmra.mrb[0].mxu0 %v3256
    %v4089 = vpop.f32.mrb[0].mxu0
    %v4090 = vadd.f32 %v3383, %v4089
    %v4091 = vpop.f32.mrb[0].mxu0
    %v4092 = vpop.f32.mrb[0].mxu0
    %v4093 = vadd.f32 %v3383, %v4092
    %v4094 = vpop.f32.mrb[0].mxu0
    %4095 = vmatprep.mubr.bf16.mxu0 %v3259
    %4096 = vmatmul.mubr.bf16.gmra.mrb[0].mxu0 %v3258
    %v4097 = vpop.f32.mrb[0].mxu0
    %v4098 = vadd.f32 %v3383, %v4097
    %v4099 = vpop.f32.mrb[0].mxu0
    %v4100 = vpop.f32.mrb[0].mxu0
    %v4101 = vadd.f32 %v3383, %v4100
    %v4102 = vpop.f32.mrb[0].mxu0
    %4103 = vmatprep.mubr.bf16.mxu0 %v3261
    %4104 = vmatmul.mubr.bf16.gmra.mrb[0].mxu0 %v3260
    %v4105 = vpop.f32.mrb[0].mxu0
    %v4106 = vadd.f32 %v3383, %v4105
    %v4107 = vpop.f32.mrb[0].mxu0
    %v4108 = vpop.f32.mrb[0].mxu0
    %v4109 = vadd.f32 %v3383, %v4108
    %v4110 = vpop.f32.mrb[0].mxu0
    %4111 = vmatprep.mubr.bf16.mxu0 %v3263
    %4112 = vmatmul.mubr.bf16.gmra.mrb[0].mxu0 %v3262
    %v4113 = vpop.f32.mrb[0].mxu0
    %v4114 = vadd.f32 %v3383, %v4113
    %v4115 = vpop.f32.mrb[0].mxu0
    %v4116 = vpop.f32.mrb[0].mxu0
    %v4117 = vadd.f32 %v3383, %v4116
    %v4118 = vpop.f32.mrb[0].mxu0
    %4119 = vmatprep.mubr.bf16.mxu0 %v3265
    %4120 = vmatmul.mubr.bf16.gmra.mrb[0].mxu0 %v3264
    %v4121 = vpop.f32.mrb[0].mxu0
    %v4122 = vadd.f32 %v3383, %v4121
    %v4123 = vpop.f32.mrb[0].mxu0
    %v4124 = vpop.f32.mrb[0].mxu0
    %v4125 = vadd.f32 %v3383, %v4124
    %v4126 = vpop.f32.mrb[0].mxu0
    %4127 = vdwg.mxu0
    %v4128 = vmax.f32 %v3840, 0.0
    %v4129 = vmax.f32 %v3842, 0.0
    %v4130 = vmax.f32 %v3953, 0.0
    %v4131 = vmax.f32 %v3955, 0.0
    %v4132 = vmax.f32 %v4066, 0.0
    %v4133 = vmax.f32 %v3844, 0.0
    %v4134 = vmax.f32 %v3846, 0.0
    %v4135 = vmax.f32 %v3957, 0.0
    %v4136 = vmax.f32 %v3959, 0.0
    %v4137 = vmax.f32 %v4069, 0.0
    %v4138 = vmax.f32 %v3850, 0.0
    %v4139 = vmax.f32 %v3852, 0.0
    %v4140 = vmax.f32 %v3963, 0.0
    %v4141 = vmax.f32 %v3965, 0.0
    %v4142 = vmax.f32 %v4074, 0.0
    %v4143 = vmax.f32 %v3854, 0.0
    %v4144 = vmax.f32 %v3856, 0.0
    %v4145 = vmax.f32 %v3967, 0.0
    %v4146 = vmax.f32 %v3969, 0.0
    %v4147 = vmax.f32 %v4077, 0.0
    %v4148 = vmax.f32 %v3860, 0.0
    %v4149 = vmax.f32 %v3862, 0.0
    %v4150 = vmax.f32 %v3973, 0.0
    %v4151 = vmax.f32 %v3975, 0.0
    %v4152 = vmax.f32 %v4082, 0.0
    %v4153 = vmax.f32 %v3864, 0.0
    %v4154 = vmax.f32 %v3866, 0.0
    %v4155 = vmax.f32 %v3977, 0.0
    %v4156 = vmax.f32 %v3979, 0.0
    %v4157 = vmax.f32 %v4085, 0.0
    %v4158 = vmax.f32 %v3870, 0.0
    %v4159 = vmax.f32 %v3872, 0.0
    %v4160 = vmax.f32 %v3983, 0.0
    %v4161 = vmax.f32 %v3985, 0.0
    %v4162 = vmax.f32 %v4090, 0.0
    %v4163 = vmax.f32 %v3874, 0.0
    %v4164 = vmax.f32 %v3876, 0.0
    %v4165 = vmax.f32 %v3987, 0.0
    %v4166 = vmax.f32 %v3989, 0.0
    %v4167 = vmax.f32 %v4093, 0.0
    %v4168 = vmax.f32 %v3880, 0.0
    %v4169 = vmax.f32 %v3882, 0.0
    %v4170 = vmax.f32 %v3993, 0.0
    %v4171 = vmax.f32 %v3995, 0.0
    %v4172 = vmax.f32 %v4098, 0.0
    %v4173 = vmax.f32 %v3884, 0.0
    %v4174 = vmax.f32 %v3886, 0.0
    %v4175 = vmax.f32 %v3997, 0.0
    %v4176 = vmax.f32 %v3999, 0.0
    %v4177 = vmax.f32 %v4101, 0.0
    %v4178 = vmax.f32 %v3890, 0.0
    %v4179 = vmax.f32 %v3892, 0.0
    %v4180 = vmax.f32 %v4003, 0.0
    %v4181 = vmax.f32 %v4005, 0.0
    %v4182 = vmax.f32 %v4106, 0.0
    %v4183 = vmax.f32 %v3894, 0.0
    %v4184 = vmax.f32 %v3896, 0.0
    %v4185 = vmax.f32 %v4007, 0.0
    %v4186 = vmax.f32 %v4009, 0.0
    %v4187 = vmax.f32 %v4109, 0.0
    %v4188 = vmax.f32 %v3900, 0.0
    %v4189 = vmax.f32 %v3902, 0.0
    %v4190 = vmax.f32 %v4013, 0.0
    %v4191 = vmax.f32 %v4015, 0.0
    %v4192 = vmax.f32 %v4114, 0.0
    %v4193 = vmax.f32 %v3904, 0.0
    %v4194 = vmax.f32 %v3906, 0.0
    %v4195 = vmax.f32 %v4017, 0.0
    %v4196 = vmax.f32 %v4019, 0.0
    %v4197 = vmax.f32 %v4117, 0.0
    %v4198 = vmax.f32 %v3910, 0.0
    %v4199 = vmax.f32 %v3912, 0.0
    %v4200 = vmax.f32 %v4023, 0.0
    %v4201 = vmax.f32 %v4025, 0.0
    %v4202 = vmax.f32 %v4122, 0.0
    %v4203 = vmax.f32 %v3914, 0.0
    %v4204 = vmax.f32 %v3916, 0.0
    %v4205 = vmax.f32 %v4027, 0.0
    %v4206 = vmax.f32 %v4029, 0.0
    %v4207 = vmax.f32 %v4125, 0.0
    %v4208 = vpack.c.bf16 %v4133, %v4128
    %v4209 = vpack.c.bf16 %v4134, %v4129
    %v4210 = vpack.c.bf16 %v4135, %v4130
    %v4211 = vpack.c.bf16 %v4136, %v4131
    %v4212 = vpack.c.bf16 %v4137, %v4132
    %v4213 = vpack.c.bf16 %v4143, %v4138
    %v4214 = vpack.c.bf16 %v4144, %v4139
    %v4215 = vpack.c.bf16 %v4145, %v4140
    %v4216 = vpack.c.bf16 %v4146, %v4141
    %v4217 = vpack.c.bf16 %v4147, %v4142
    %v4218 = vpack.c.bf16 %v4153, %v4148
    %v4219 = vpack.c.bf16 %v4154, %v4149
    %v4220 = vpack.c.bf16 %v4155, %v4150
    %v4221 = vpack.c.bf16 %v4156, %v4151
    %v4222 = vpack.c.bf16 %v4157, %v4152
    %v4223 = vpack.c.bf16 %v4163, %v4158
    %v4224 = vpack.c.bf16 %v4164, %v4159
    %v4225 = vpack.c.bf16 %v4165, %v4160
    %v4226 = vpack.c.bf16 %v4166, %v4161
    %v4227 = vpack.c.bf16 %v4167, %v4162
    %v4228 = vpack.c.bf16 %v4173, %v4168
    %v4229 = vpack.c.bf16 %v4174, %v4169
    %v4230 = vpack.c.bf16 %v4175, %v4170
    %v4231 = vpack.c.bf16 %v4176, %v4171
    %v4232 = vpack.c.bf16 %v4177, %v4172
    %v4233 = vpack.c.bf16 %v4183, %v4178
    %v4234 = vpack.c.bf16 %v4184, %v4179
    %v4235 = vpack.c.bf16 %v4185, %v4180
    %v4236 = vpack.c.bf16 %v4186, %v4181
    %v4237 = vpack.c.bf16 %v4187, %v4182
    %v4238 = vpack.c.bf16 %v4193, %v4188
    %v4239 = vpack.c.bf16 %v4194, %v4189
    %v4240 = vpack.c.bf16 %v4195, %v4190
    %v4241 = vpack.c.bf16 %v4196, %v4191
    %v4242 = vpack.c.bf16 %v4197, %v4192
    %v4243 = vpack.c.bf16 %v4203, %v4198
    %v4244 = vpack.c.bf16 %v4204, %v4199
    %v4245 = vpack.c.bf16 %v4205, %v4200
    %v4246 = vpack.c.bf16 %v4206, %v4201
    %v4247 = vpack.c.bf16 %v4207, %v4202
    %v4248 = vld [vmem:[#allocation8 + $0x4] sm:$0xf]
    %v4249 = vld [vmem:[#allocation8 + $0xc] sm:$0xf]
    %v4250 = vld [vmem:[#allocation8 + $0x14] sm:$0xf]
    %v4251 = vld [vmem:[#allocation8 + $0x1c] sm:$0xf]
    %v4252 = vld [vmem:[#allocation8 + $0x24] sm:$0xf]
    %v4253 = vld [vmem:[#allocation8 + $0x2c] sm:$0xf]
    %v4254 = vld [vmem:[#allocation8 + $0x34] sm:$0xf]
    %v4255 = vld [vmem:[#allocation8 + $0x3c] sm:$0xf]
    %v4256 = vld [vmem:[#allocation8 + $0x44] sm:$0xf]
    %v4257 = vld [vmem:[#allocation8 + $0x4c] sm:$0xf]
    %v4258 = vld [vmem:[#allocation8 + $0x54] sm:$0xf]
    %v4259 = vld [vmem:[#allocation8 + $0x5c] sm:$0xf]
    %v4260 = vld [vmem:[#allocation8 + $0x64] sm:$0xf]
    %v4261 = vld [vmem:[#allocation8 + $0x6c] sm:$0xf]
    %v4262 = vld [vmem:[#allocation8 + $0x74] sm:$0xf]
    %v4263 = vld [vmem:[#allocation8 + $0x7c] sm:$0xf]
    %v4264 = vld [vmem:[#allocation8 + $0x84] sm:$0xf]
    %v4265 = vld [vmem:[#allocation8 + $0x8c] sm:$0xf]
    %v4266 = vld [vmem:[#allocation8 + $0x94] sm:$0xf]
    %v4267 = vld [vmem:[#allocation8 + $0x9c] sm:$0xf]
    %v4268 = vld [vmem:[#allocation8 + $0xa4] sm:$0xf]
    %v4269 = vld [vmem:[#allocation8 + $0xac] sm:$0xf]
    %v4270 = vld [vmem:[#allocation8 + $0xb4] sm:$0xf]
    %v4271 = vld [vmem:[#allocation8 + $0xbc] sm:$0xf]
    %v4272 = vld [vmem:[#allocation8 + $0xc4] sm:$0xf]
    %v4273 = vld [vmem:[#allocation8 + $0xcc] sm:$0xf]
    %v4274 = vld [vmem:[#allocation8 + $0xd4] sm:$0xf]
    %v4275 = vld [vmem:[#allocation8 + $0xdc] sm:$0xf]
    %v4276 = vld [vmem:[#allocation8 + $0xe4] sm:$0xf]
    %v4277 = vld [vmem:[#allocation8 + $0xec] sm:$0xf]
    %v4278 = vld [vmem:[#allocation8 + $0xf4] sm:$0xf]
    %v4279 = vld [vmem:[#allocation8 + $0xfc] sm:$0xf]
    %v4280 = vld [vmem:[#allocation8 + $0x104] sm:$0xf]
    %v4281 = vld [vmem:[#allocation8 + $0x10c] sm:$0xf]
    %v4282 = vld [vmem:[#allocation8 + $0x114] sm:$0xf]
    %v4283 = vld [vmem:[#allocation8 + $0x11c] sm:$0xf]
    %v4284 = vld [vmem:[#allocation8 + $0x124] sm:$0xf]
    %v4285 = vld [vmem:[#allocation8 + $0x12c] sm:$0xf]
    %v4286 = vld [vmem:[#allocation8 + $0x134] sm:$0xf]
    %v4287 = vld [vmem:[#allocation8 + $0x13c] sm:$0xf]
    %v4288 = vld [vmem:[#allocation8 + $0x144] sm:$0xf]
    %v4289 = vld [vmem:[#allocation8 + $0x14c] sm:$0xf]
    %v4290 = vld [vmem:[#allocation8 + $0x154] sm:$0xf]
    %v4291 = vld [vmem:[#allocation8 + $0x15c] sm:$0xf]
    %v4292 = vld [vmem:[#allocation8 + $0x164] sm:$0xf]
    %v4293 = vld [vmem:[#allocation8 + $0x16c] sm:$0xf]
    %v4294 = vld [vmem:[#allocation8 + $0x174] sm:$0xf]
    %v4295 = vld [vmem:[#allocation8 + $0x17c] sm:$0xf]
    %v4296 = vld [vmem:[#allocation8 + $0x184] sm:$0xf]
    %v4297 = vld [vmem:[#allocation8 + $0x18c] sm:$0xf]
    %v4298 = vld [vmem:[#allocation8 + $0x194] sm:$0xf]
    %v4299 = vld [vmem:[#allocation8 + $0x19c] sm:$0xf]
    %v4300 = vld [vmem:[#allocation8 + $0x1a4] sm:$0xf]
    %v4301 = vld [vmem:[#allocation8 + $0x1ac] sm:$0xf]
    %v4302 = vld [vmem:[#allocation8 + $0x1b4] sm:$0xf]
    %v4303 = vld [vmem:[#allocation8 + $0x1bc] sm:$0xf]
    %v4304 = vld [vmem:[#allocation8 + $0x1c4] sm:$0xf]
    %v4305 = vld [vmem:[#allocation8 + $0x1cc] sm:$0xf]
    %v4306 = vld [vmem:[#allocation8 + $0x1d4] sm:$0xf]
    %v4307 = vld [vmem:[#allocation8 + $0x1dc] sm:$0xf]
    %v4308 = vld [vmem:[#allocation8 + $0x1e4] sm:$0xf]
    %v4309 = vld [vmem:[#allocation8 + $0x1ec] sm:$0xf]
    %v4310 = vld [vmem:[#allocation8 + $0x1f4] sm:$0xf]
    %v4311 = vld [vmem:[#allocation8 + $0x1fc] sm:$0xf]
    %v4312 = vld [vmem:[#allocation8 + $0x204] sm:$0xf]
    %v4313 = vld [vmem:[#allocation8 + $0x20c] sm:$0xf]
    %v4314 = vld [vmem:[#allocation8 + $0x214] sm:$0xf]
    %v4315 = vld [vmem:[#allocation8 + $0x21c] sm:$0xf]
    %v4316 = vld [vmem:[#allocation8 + $0x224] sm:$0xf]
    %v4317 = vld [vmem:[#allocation8 + $0x22c] sm:$0xf]
    %v4318 = vld [vmem:[#allocation8 + $0x234] sm:$0xf]
    %v4319 = vld [vmem:[#allocation8 + $0x23c] sm:$0xf]
    %v4320 = vld [vmem:[#allocation8 + $0x244] sm:$0xf]
    %v4321 = vld [vmem:[#allocation8 + $0x24c] sm:$0xf]
    %v4322 = vld [vmem:[#allocation8 + $0x254] sm:$0xf]
    %v4323 = vld [vmem:[#allocation8 + $0x25c] sm:$0xf]
    %v4324 = vld [vmem:[#allocation8 + $0x264] sm:$0xf]
    %v4325 = vld [vmem:[#allocation8 + $0x26c] sm:$0xf]
    %v4326 = vld [vmem:[#allocation8 + $0x274] sm:$0xf]
    %v4327 = vld [vmem:[#allocation8 + $0x27c] sm:$0xf]
    %v4328 = vld [vmem:[#allocation10 + $0x13] sm:$0x1]
    %v4330 = vlaneseq
    %v4331 = vshrl.u32 %v4330, 7
    %v4332 = vsub.s32 0, %v4331
    %v4333 = vrot.slane %v4328, %v4332
    %v4415 = vunpack.c.l.b16 %v4248
    %v4416 = vunpack.c.l.b16 %v4249
    %v4417 = vunpack.c.l.b16 %v4250
    %v4418 = vunpack.c.l.b16 %v4251
    %v4419 = vunpack.c.l.b16 %v4252
    %v4420 = vunpack.c.l.b16 %v4253
    %v4421 = vunpack.c.l.b16 %v4254
    %v4422 = vunpack.c.l.b16 %v4255
    %v4423 = vunpack.c.l.b16 %v4256
    %v4424 = vunpack.c.l.b16 %v4257
    %v4425 = vunpack.c.l.b16 %v4258
    %v4426 = vunpack.c.l.b16 %v4259
    %v4427 = vunpack.c.l.b16 %v4260
    %v4428 = vunpack.c.l.b16 %v4261
    %v4429 = vunpack.c.l.b16 %v4262
    %v4430 = vunpack.c.l.b16 %v4263
    %v4431 = vunpack.c.l.b16 %v4264
    %v4432 = vunpack.c.l.b16 %v4265
    %v4433 = vunpack.c.l.b16 %v4266
    %v4434 = vunpack.c.l.b16 %v4267
    %v4435 = vunpack.c.l.b16 %v4268
    %v4436 = vunpack.c.l.b16 %v4269
    %v4437 = vunpack.c.l.b16 %v4270
    %v4438 = vunpack.c.l.b16 %v4271
    %v4439 = vunpack.c.l.b16 %v4272
    %v4440 = vunpack.c.l.b16 %v4273
    %v4441 = vunpack.c.l.b16 %v4274
    %v4442 = vunpack.c.l.b16 %v4275
    %v4443 = vunpack.c.l.b16 %v4276
    %v4444 = vunpack.c.l.b16 %v4277
    %v4445 = vunpack.c.l.b16 %v4278
    %v4446 = vunpack.c.l.b16 %v4279
    %v4447 = vunpack.c.l.b16 %v4280
    %v4448 = vunpack.c.l.b16 %v4281
    %v4449 = vunpack.c.l.b16 %v4282
    %v4450 = vunpack.c.l.b16 %v4283
    %v4451 = vunpack.c.l.b16 %v4284
    %v4452 = vunpack.c.l.b16 %v4285
    %v4453 = vunpack.c.l.b16 %v4286
    %v4454 = vunpack.c.l.b16 %v4287
    %v4455 = vunpack.c.l.b16 %v4288
    %v4456 = vunpack.c.l.b16 %v4289
    %v4457 = vunpack.c.l.b16 %v4290
    %v4458 = vunpack.c.l.b16 %v4291
    %v4459 = vunpack.c.l.b16 %v4292
    %v4460 = vunpack.c.l.b16 %v4293
    %v4461 = vunpack.c.l.b16 %v4294
    %v4462 = vunpack.c.l.b16 %v4295
    %v4463 = vunpack.c.l.b16 %v4296
    %v4464 = vunpack.c.l.b16 %v4297
    %v4465 = vunpack.c.l.b16 %v4298
    %v4466 = vunpack.c.l.b16 %v4299
    %v4467 = vunpack.c.l.b16 %v4300
    %v4468 = vunpack.c.l.b16 %v4301
    %v4469 = vunpack.c.l.b16 %v4302
    %v4470 = vunpack.c.l.b16 %v4303
    %v4471 = vunpack.c.l.b16 %v4304
    %v4472 = vunpack.c.l.b16 %v4305
    %v4473 = vunpack.c.l.b16 %v4306
    %v4474 = vunpack.c.l.b16 %v4307
    %v4475 = vunpack.c.l.b16 %v4308
    %v4476 = vunpack.c.l.b16 %v4309
    %v4477 = vunpack.c.l.b16 %v4310
    %v4478 = vunpack.c.l.b16 %v4311
    %v4479 = vunpack.c.l.b16 %v4312
    %v4480 = vunpack.c.l.b16 %v4313
    %v4481 = vunpack.c.l.b16 %v4314
    %v4482 = vunpack.c.l.b16 %v4315
    %v4483 = vunpack.c.l.b16 %v4316
    %v4484 = vunpack.c.l.b16 %v4317
    %v4485 = vunpack.c.l.b16 %v4318
    %v4486 = vunpack.c.l.b16 %v4319
    %v4487 = vunpack.c.l.b16 %v4320
    %v4488 = vunpack.c.l.b16 %v4321
    %v4489 = vunpack.c.l.b16 %v4322
    %v4490 = vunpack.c.l.b16 %v4323
    %v4491 = vunpack.c.l.b16 %v4324
    %v4492 = vunpack.c.l.b16 %v4325
    %v4493 = vunpack.c.l.b16 %v4326
    %v4494 = vunpack.c.l.b16 %v4327
    %v4495 = vpack.c.b16 %v4416, %v4415
    %v4496 = vpack.c.b16 %v4418, %v4417
    %v4497 = vpack.c.b16 %v4420, %v4419
    %v4498 = vpack.c.b16 %v4422, %v4421
    %v4499 = vpack.c.b16 %v4424, %v4423
    %v4500 = vpack.c.b16 %v4426, %v4425
    %v4501 = vpack.c.b16 %v4428, %v4427
    %v4502 = vpack.c.b16 %v4430, %v4429
    %v4503 = vpack.c.b16 %v4432, %v4431
    %v4504 = vpack.c.b16 %v4434, %v4433
    %v4505 = vpack.c.b16 %v4436, %v4435
    %v4506 = vpack.c.b16 %v4438, %v4437
    %v4507 = vpack.c.b16 %v4440, %v4439
    %v4508 = vpack.c.b16 %v4442, %v4441
    %v4509 = vpack.c.b16 %v4444, %v4443
    %v4510 = vpack.c.b16 %v4446, %v4445
    %v4511 = vpack.c.b16 %v4448, %v4447
    %v4512 = vpack.c.b16 %v4450, %v4449
    %v4513 = vpack.c.b16 %v4452, %v4451
    %v4514 = vpack.c.b16 %v4454, %v4453
    %v4515 = vpack.c.b16 %v4456, %v4455
    %v4516 = vpack.c.b16 %v4458, %v4457
    %v4517 = vpack.c.b16 %v4460, %v4459
    %v4518 = vpack.c.b16 %v4462, %v4461
    %v4519 = vpack.c.b16 %v4464, %v4463
    %v4520 = vpack.c.b16 %v4466, %v4465
    %v4521 = vpack.c.b16 %v4468, %v4467
    %v4522 = vpack.c.b16 %v4470, %v4469
    %v4523 = vpack.c.b16 %v4472, %v4471
    %v4524 = vpack.c.b16 %v4474, %v4473
    %v4525 = vpack.c.b16 %v4476, %v4475
    %v4526 = vpack.c.b16 %v4478, %v4477
    %v4527 = vpack.c.b16 %v4480, %v4479
    %v4528 = vpack.c.b16 %v4482, %v4481
    %v4529 = vpack.c.b16 %v4484, %v4483
    %v4530 = vpack.c.b16 %v4486, %v4485
    %v4531 = vpack.c.b16 %v4488, %v4487
    %v4532 = vpack.c.b16 %v4490, %v4489
    %v4533 = vpack.c.b16 %v4492, %v4491
    %v4534 = vpack.c.b16 %v4494, %v4493
    %4575 = vmatprep.subr.bf16.mxu0 0
    %4576 = vmatpush1.bf16.msra.mxu0 %v4495
    %4577 = vmatprep.subr.bf16.mxu0 0
    %4578 = vmatpush1.bf16.msra.mxu0 %v4496
    %4579 = vmatprep.subr.bf16.mxu0 0
    %4580 = vmatpush1.bf16.msra.mxu0 %v4497
    %4581 = vmatprep.subr.bf16.mxu0 0
    %4582 = vmatpush1.bf16.msra.mxu0 %v4498
    %4583 = vmatprep.subr.bf16.mxu0 0
    %4584 = vmatpush1.bf16.msra.mxu0 %v4499
    %4585 = vmatprep.subr.bf16.mxu0 0
    %4586 = vmatpush1.bf16.msra.mxu0 %v4500
    %4587 = vmatprep.subr.bf16.mxu0 0
    %4588 = vmatpush1.bf16.msra.mxu0 %v4501
    %4589 = vmatprep.subr.bf16.mxu0 0
    %4590 = vmatpush1.bf16.msra.mxu0 %v4502
    %4591 = vmatprep.subr.bf16.mxu0 0
    %4592 = vmatpush1.bf16.msra.mxu0 %v4503
    %4593 = vmatprep.subr.bf16.mxu0 0
    %4594 = vmatpush1.bf16.msra.mxu0 %v4504
    %4595 = vmatprep.subr.bf16.mxu0 0
    %4596 = vmatpush1.bf16.msra.mxu0 %v4505
    %4597 = vmatprep.subr.bf16.mxu0 0
    %4598 = vmatpush1.bf16.msra.mxu0 %v4506
    %4599 = vmatprep.subr.bf16.mxu0 0
    %4600 = vmatpush1.bf16.msra.mxu0 %v4507
    %4601 = vmatprep.subr.bf16.mxu0 0
    %4602 = vmatpush1.bf16.msra.mxu0 %v4508
    %4603 = vmatprep.subr.bf16.mxu0 0
    %4604 = vmatpush1.bf16.msra.mxu0 %v4509
    %4605 = vmatprep.subr.bf16.mxu0 0
    %4606 = vmatpush1.bf16.msra.mxu0 %v4510
    %4607 = vmatprep.mubr.bf16.mxu0 %v4209
    %4608 = vmatmul.mubr.bf16.gmra.mrb[0].mxu0 %v4208
    %v4609 = vpop.f32.mrb[0].mxu0
    %v4610 = vadd.f32 %v4333, %v4609
    %v4611 = vpop.f32.mrb[0].mxu0
    %v4612 = vpop.f32.mrb[0].mxu0
    %v4613 = vadd.f32 %v4333, %v4612
    %v4614 = vpop.f32.mrb[0].mxu0
    %4615 = vmatprep.mubr.bf16.mxu0 %v4214
    %4616 = vmatmul.mubr.bf16.gmra.mrb[0].mxu0 %v4213
    %v4617 = vpop.f32.mrb[0].mxu0
    %v4618 = vadd.f32 %v4333, %v4617
    %v4619 = vpop.f32.mrb[0].mxu0
    %v4620 = vpop.f32.mrb[0].mxu0
    %v4621 = vadd.f32 %v4333, %v4620
    %v4622 = vpop.f32.mrb[0].mxu0
    %4623 = vmatprep.mubr.bf16.mxu0 %v4219
    %4624 = vmatmul.mubr.bf16.gmra.mrb[0].mxu0 %v4218
    %v4625 = vpop.f32.mrb[0].mxu0
    %v4626 = vadd.f32 %v4333, %v4625
    %v4627 = vpop.f32.mrb[0].mxu0
    %v4628 = vpop.f32.mrb[0].mxu0
    %v4629 = vadd.f32 %v4333, %v4628
    %v4630 = vpop.f32.mrb[0].mxu0
    %4631 = vmatprep.mubr.bf16.mxu0 %v4224
    %4632 = vmatmul.mubr.bf16.gmra.mrb[0].mxu0 %v4223
    %v4633 = vpop.f32.mrb[0].mxu0
    %v4634 = vadd.f32 %v4333, %v4633
    %v4635 = vpop.f32.mrb[0].mxu0
    %v4636 = vpop.f32.mrb[0].mxu0
    %v4637 = vadd.f32 %v4333, %v4636
    %v4638 = vpop.f32.mrb[0].mxu0
    %4639 = vmatprep.mubr.bf16.mxu0 %v4229
    %4640 = vmatmul.mubr.bf16.gmra.mrb[0].mxu0 %v4228
    %v4641 = vpop.f32.mrb[0].mxu0
    %v4642 = vadd.f32 %v4333, %v4641
    %v4643 = vpop.f32.mrb[0].mxu0
    %v4644 = vpop.f32.mrb[0].mxu0
    %v4645 = vadd.f32 %v4333, %v4644
    %v4646 = vpop.f32.mrb[0].mxu0
    %4647 = vmatprep.mubr.bf16.mxu0 %v4234
    %4648 = vmatmul.mubr.bf16.gmra.mrb[0].mxu0 %v4233
    %v4649 = vpop.f32.mrb[0].mxu0
    %v4650 = vadd.f32 %v4333, %v4649
    %v4651 = vpop.f32.mrb[0].mxu0
    %v4652 = vpop.f32.mrb[0].mxu0
    %v4653 = vadd.f32 %v4333, %v4652
    %v4654 = vpop.f32.mrb[0].mxu0
    %4655 = vmatprep.mubr.bf16.mxu0 %v4239
    %4656 = vmatmul.mubr.bf16.gmra.mrb[0].mxu0 %v4238
    %v4657 = vpop.f32.mrb[0].mxu0
    %v4658 = vadd.f32 %v4333, %v4657
    %v4659 = vpop.f32.mrb[0].mxu0
    %v4660 = vpop.f32.mrb[0].mxu0
    %v4661 = vadd.f32 %v4333, %v4660
    %v4662 = vpop.f32.mrb[0].mxu0
    %4663 = vmatprep.mubr.bf16.mxu0 %v4244
    %4664 = vmatmul.mubr.bf16.gmra.mrb[0].mxu0 %v4243
    %v4665 = vpop.f32.mrb[0].mxu0
    %v4666 = vadd.f32 %v4333, %v4665
    %v4667 = vpop.f32.mrb[0].mxu0
    %v4668 = vpop.f32.mrb[0].mxu0
    %v4669 = vadd.f32 %v4333, %v4668
    %v4670 = vpop.f32.mrb[0].mxu0
    %4671 = vdwg.mxu0
    %4672 = vmatprep.subr.bf16.mxu0 0
    %4673 = vmatpush1.bf16.msra.mxu0 %v4511
    %4674 = vmatprep.subr.bf16.mxu0 0
    %4675 = vmatpush1.bf16.msra.mxu0 %v4512
    %4676 = vmatprep.subr.bf16.mxu0 0
    %4677 = vmatpush1.bf16.msra.mxu0 %v4513
    %4678 = vmatprep.subr.bf16.mxu0 0
    %4679 = vmatpush1.bf16.msra.mxu0 %v4514
    %4680 = vmatprep.subr.bf16.mxu0 0
    %4681 = vmatpush1.bf16.msra.mxu0 %v4515
    %4682 = vmatprep.subr.bf16.mxu0 0
    %4683 = vmatpush1.bf16.msra.mxu0 %v4516
    %4684 = vmatprep.subr.bf16.mxu0 0
    %4685 = vmatpush1.bf16.msra.mxu0 %v4517
    %4686 = vmatprep.subr.bf16.mxu0 0
    %4687 = vmatpush1.bf16.msra.mxu0 %v4518
    %4688 = vmatprep.subr.bf16.mxu0 0
    %4689 = vmatpush1.bf16.msra.mxu0 %v4519
    %4690 = vmatprep.subr.bf16.mxu0 0
    %4691 = vmatpush1.bf16.msra.mxu0 %v4520
    %4692 = vmatprep.subr.bf16.mxu0 0
    %4693 = vmatpush1.bf16.msra.mxu0 %v4521
    %4694 = vmatprep.subr.bf16.mxu0 0
    %4695 = vmatpush1.bf16.msra.mxu0 %v4522
    %4696 = vmatprep.subr.bf16.mxu0 0
    %4697 = vmatpush1.bf16.msra.mxu0 %v4523
    %4698 = vmatprep.subr.bf16.mxu0 0
    %4699 = vmatpush1.bf16.msra.mxu0 %v4524
    %4700 = vmatprep.subr.bf16.mxu0 0
    %4701 = vmatpush1.bf16.msra.mxu0 %v4525
    %4702 = vmatprep.subr.bf16.mxu0 0
    %4703 = vmatpush1.bf16.msra.mxu0 %v4526
    %4704 = vmatprep.mubr.bf16.mxu0 %v4211
    %4705 = vmatmul.mubr.bf16.gmra.mrb[0].mxu0 %v4210
    %v4706 = vpop.f32.mrb[0].mxu0
    %v4707 = vadd.f32 %v4610, %v4706
    %v4708 = vpop.f32.mrb[0].mxu0
    %v4709 = vpop.f32.mrb[0].mxu0
    %v4710 = vadd.f32 %v4613, %v4709
    %v4711 = vpop.f32.mrb[0].mxu0
    %4712 = vmatprep.mubr.bf16.mxu0 %v4216
    %4713 = vmatmul.mubr.bf16.gmra.mrb[0].mxu0 %v4215
    %v4714 = vpop.f32.mrb[0].mxu0
    %v4715 = vadd.f32 %v4618, %v4714
    %v4716 = vpop.f32.mrb[0].mxu0
    %v4717 = vpop.f32.mrb[0].mxu0
    %v4718 = vadd.f32 %v4621, %v4717
    %v4719 = vpop.f32.mrb[0].mxu0
    %4720 = vmatprep.mubr.bf16.mxu0 %v4221
    %4721 = vmatmul.mubr.bf16.gmra.mrb[0].mxu0 %v4220
    %v4722 = vpop.f32.mrb[0].mxu0
    %v4723 = vadd.f32 %v4626, %v4722
    %v4724 = vpop.f32.mrb[0].mxu0
    %v4725 = vpop.f32.mrb[0].mxu0
    %v4726 = vadd.f32 %v4629, %v4725
    %v4727 = vpop.f32.mrb[0].mxu0
    %4728 = vmatprep.mubr.bf16.mxu0 %v4226
    %4729 = vmatmul.mubr.bf16.gmra.mrb[0].mxu0 %v4225
    %v4730 = vpop.f32.mrb[0].mxu0
    %v4731 = vadd.f32 %v4634, %v4730
    %v4732 = vpop.f32.mrb[0].mxu0
    %v4733 = vpop.f32.mrb[0].mxu0
    %v4734 = vadd.f32 %v4637, %v4733
    %v4735 = vpop.f32.mrb[0].mxu0
    %4736 = vmatprep.mubr.bf16.mxu0 %v4231
    %4737 = vmatmul.mubr.bf16.gmra.mrb[0].mxu0 %v4230
    %v4738 = vpop.f32.mrb[0].mxu0
    %v4739 = vadd.f32 %v4642, %v4738
    %v4740 = vpop.f32.mrb[0].mxu0
    %v4741 = vpop.f32.mrb[0].mxu0
    %v4742 = vadd.f32 %v4645, %v4741
    %v4743 = vpop.f32.mrb[0].mxu0
    %4744 = vmatprep.mubr.bf16.mxu0 %v4236
    %4745 = vmatmul.mubr.bf16.gmra.mrb[0].mxu0 %v4235
    %v4746 = vpop.f32.mrb[0].mxu0
    %v4747 = vadd.f32 %v4650, %v4746
    %v4748 = vpop.f32.mrb[0].mxu0
    %v4749 = vpop.f32.mrb[0].mxu0
    %v4750 = vadd.f32 %v4653, %v4749
    %v4751 = vpop.f32.mrb[0].mxu0
    %4752 = vmatprep.mubr.bf16.mxu0 %v4241
    %4753 = vmatmul.mubr.bf16.gmra.mrb[0].mxu0 %v4240
    %v4754 = vpop.f32.mrb[0].mxu0
    %v4755 = vadd.f32 %v4658, %v4754
    %v4756 = vpop.f32.mrb[0].mxu0
    %v4757 = vpop.f32.mrb[0].mxu0
    %v4758 = vadd.f32 %v4661, %v4757
    %v4759 = vpop.f32.mrb[0].mxu0
    %4760 = vmatprep.mubr.bf16.mxu0 %v4246
    %4761 = vmatmul.mubr.bf16.gmra.mrb[0].mxu0 %v4245
    %v4762 = vpop.f32.mrb[0].mxu0
    %v4763 = vadd.f32 %v4666, %v4762
    %v4764 = vpop.f32.mrb[0].mxu0
    %v4765 = vpop.f32.mrb[0].mxu0
    %v4766 = vadd.f32 %v4669, %v4765
    %v4767 = vpop.f32.mrb[0].mxu0
    %4768 = vdwg.mxu0
    %4769 = vmatprep.subr.bf16.mxu0 0
    %4770 = vmatpush1.bf16.msra.mxu0 %v4527
    %4771 = vmatprep.subr.bf16.mxu0 0
    %4772 = vmatpush1.bf16.msra.mxu0 %v4528
    %4773 = vmatprep.subr.bf16.mxu0 0
    %4774 = vmatpush1.bf16.msra.mxu0 %v4529
    %4775 = vmatprep.subr.bf16.mxu0 0
    %4776 = vmatpush1.bf16.msra.mxu0 %v4530
    %4777 = vmatprep.subr.bf16.mxu0 0
    %4778 = vmatpush1.bf16.msra.mxu0 %v4531
    %4779 = vmatprep.subr.bf16.mxu0 0
    %4780 = vmatpush1.bf16.msra.mxu0 %v4532
    %4781 = vmatprep.subr.bf16.mxu0 0
    %4782 = vmatpush1.bf16.msra.mxu0 %v4533
    %4783 = vmatprep.subr.bf16.mxu0 0
    %4784 = vmatpush1.bf16.msra.mxu0 %v4534
    %4785 = vmatprep.subr.bf16.mxu0 0
    %4786 = vmatpush1.bf16.msra.mxu0 0
    %4787 = vmatprep.subr.bf16.mxu0 0
    %4788 = vmatpush1.bf16.msra.mxu0 0
    %4789 = vmatprep.subr.bf16.mxu0 0
    %4790 = vmatpush1.bf16.msra.mxu0 0
    %4791 = vmatprep.subr.bf16.mxu0 0
    %4792 = vmatpush1.bf16.msra.mxu0 0
    %4793 = vmatprep.subr.bf16.mxu0 0
    %4794 = vmatpush1.bf16.msra.mxu0 0
    %4795 = vmatprep.subr.bf16.mxu0 0
    %4796 = vmatpush1.bf16.msra.mxu0 0
    %4797 = vmatprep.subr.bf16.mxu0 0
    %4798 = vmatpush1.bf16.msra.mxu0 0
    %4799 = vmatprep.subr.bf16.mxu0 0
    %4800 = vmatpush1.bf16.msra.mxu0 0
    %4801 = vmatprep.mubr.bf16.mxu0 0
    %4802 = vmatmul.mubr.bf16.gmra.mrb[0].mxu0 %v4212
    %v4803 = vpop.f32.mrb[0].mxu0
    %v4804 = vadd.f32 %v4707, %v4803
    %v4805 = vpop.f32.mrb[0].mxu0
    %v4806 = vpop.f32.mrb[0].mxu0
    %v4807 = vadd.f32 %v4710, %v4806
    %v4808 = vpop.f32.mrb[0].mxu0
    %4809 = vmatprep.mubr.bf16.mxu0 0
    %4810 = vmatmul.mubr.bf16.gmra.mrb[0].mxu0 %v4217
    %v4811 = vpop.f32.mrb[0].mxu0
    %v4812 = vadd.f32 %v4715, %v4811
    %v4813 = vpop.f32.mrb[0].mxu0
    %v4814 = vpop.f32.mrb[0].mxu0
    %v4815 = vadd.f32 %v4718, %v4814
    %v4816 = vpop.f32.mrb[0].mxu0
    %4817 = vmatprep.mubr.bf16.mxu0 0
    %4818 = vmatmul.mubr.bf16.gmra.mrb[0].mxu0 %v4222
    %v4819 = vpop.f32.mrb[0].mxu0
    %v4820 = vadd.f32 %v4723, %v4819
    %v4821 = vpop.f32.mrb[0].mxu0
    %v4822 = vpop.f32.mrb[0].mxu0
    %v4823 = vadd.f32 %v4726, %v4822
    %v4824 = vpop.f32.mrb[0].mxu0
    %4825 = vmatprep.mubr.bf16.mxu0 0
    %4826 = vmatmul.mubr.bf16.gmra.mrb[0].mxu0 %v4227
    %v4827 = vpop.f32.mrb[0].mxu0
    %v4828 = vadd.f32 %v4731, %v4827
    %v4829 = vpop.f32.mrb[0].mxu0
    %v4830 = vpop.f32.mrb[0].mxu0
    %v4831 = vadd.f32 %v4734, %v4830
    %v4832 = vpop.f32.mrb[0].mxu0
    %4833 = vmatprep.mubr.bf16.mxu0 0
    %4834 = vmatmul.mubr.bf16.gmra.mrb[0].mxu0 %v4232
    %v4835 = vpop.f32.mrb[0].mxu0
    %v4836 = vadd.f32 %v4739, %v4835
    %v4837 = vpop.f32.mrb[0].mxu0
    %v4838 = vpop.f32.mrb[0].mxu0
    %v4839 = vadd.f32 %v4742, %v4838
    %v4840 = vpop.f32.mrb[0].mxu0
    %4841 = vmatprep.mubr.bf16.mxu0 0
    %4842 = vmatmul.mubr.bf16.gmra.mrb[0].mxu0 %v4237
    %v4843 = vpop.f32.mrb[0].mxu0
    %v4844 = vadd.f32 %v4747, %v4843
    %v4845 = vpop.f32.mrb[0].mxu0
    %v4846 = vpop.f32.mrb[0].mxu0
    %v4847 = vadd.f32 %v4750, %v4846
    %v4848 = vpop.f32.mrb[0].mxu0
    %4849 = vmatprep.mubr.bf16.mxu0 0
    %4850 = vmatmul.mubr.bf16.gmra.mrb[0].mxu0 %v4242
    %v4851 = vpop.f32.mrb[0].mxu0
    %v4852 = vadd.f32 %v4755, %v4851
    %v4853 = vpop.f32.mrb[0].mxu0
    %v4854 = vpop.f32.mrb[0].mxu0
    %v4855 = vadd.f32 %v4758, %v4854
    %v4856 = vpop.f32.mrb[0].mxu0
    %4857 = vmatprep.mubr.bf16.mxu0 0
    %4858 = vmatmul.mubr.bf16.gmra.mrb[0].mxu0 %v4247
    %v4859 = vpop.f32.mrb[0].mxu0
    %v4860 = vadd.f32 %v4763, %v4859
    %v4861 = vpop.f32.mrb[0].mxu0
    %v4862 = vpop.f32.mrb[0].mxu0
    %v4863 = vadd.f32 %v4766, %v4862
    %v4864 = vpop.f32.mrb[0].mxu0
    %4865 = vdwg.mxu0
    %v4866 = vmax.f32 %v4804, 0.0
    %v4867 = vmax.f32 %v4807, 0.0
    %v4868 = vmax.f32 %v4812, 0.0
    %v4869 = vmax.f32 %v4815, 0.0
    %v4870 = vmax.f32 %v4820, 0.0
    %v4871 = vmax.f32 %v4823, 0.0
    %v4872 = vmax.f32 %v4828, 0.0
    %v4873 = vmax.f32 %v4831, 0.0
    %v4874 = vmax.f32 %v4836, 0.0
    %v4875 = vmax.f32 %v4839, 0.0
    %v4876 = vmax.f32 %v4844, 0.0
    %v4877 = vmax.f32 %v4847, 0.0
    %v4878 = vmax.f32 %v4852, 0.0
    %v4879 = vmax.f32 %v4855, 0.0
    %v4880 = vmax.f32 %v4860, 0.0
    %v4881 = vmax.f32 %v4863, 0.0
    %v4882 = vpack.c.bf16 %v4867, %v4866
    %v4883 = vpack.c.bf16 %v4869, %v4868
    %v4884 = vpack.c.bf16 %v4871, %v4870
    %v4885 = vpack.c.bf16 %v4873, %v4872
    %v4886 = vpack.c.bf16 %v4875, %v4874
    %v4887 = vpack.c.bf16 %v4877, %v4876
    %v4888 = vpack.c.bf16 %v4879, %v4878
    %v4889 = vpack.c.bf16 %v4881, %v4880
    %v4890 = vld [vmem:[#allocation5] sm:$0xf]
    %v4891 = vld [vmem:[#allocation5 + $0x10] sm:$0xf]
    %v4892 = vld [vmem:[#allocation5 + $0x20] sm:$0xf]
    %v4893 = vld [vmem:[#allocation5 + $0x30] sm:$0xf]
    %v4894 = vld [vmem:[#allocation5 + $0x40] sm:$0xf]
    %v4895 = vld [vmem:[#allocation5 + $0x50] sm:$0xf]
    %v4896 = vld [vmem:[#allocation5 + $0x60] sm:$0xf]
    %v4897 = vld [vmem:[#allocation5 + $0x70] sm:$0xf]
    %v4898 = vld [vmem:[#allocation5 + $0x80] sm:$0xf]
    %v4899 = vld [vmem:[#allocation5 + $0x90] sm:$0xf]
    %v4900 = vld [vmem:[#allocation5 + $0xa0] sm:$0xf]
    %v4901 = vld [vmem:[#allocation5 + $0xb0] sm:$0xf]
    %v4902 = vld [vmem:[#allocation5 + $0xc0] sm:$0xf]
    %v4903 = vld [vmem:[#allocation5 + $0xd0] sm:$0xf]
    %v4904 = vld [vmem:[#allocation5 + $0xe0] sm:$0xf]
    %v4905 = vld [vmem:[#allocation5 + $0xf0] sm:$0xf]
    %v4906 = vld [vmem:[#allocation7 + $0x48] sm:$0xf]
    %v4907 = vld [vmem:[#allocation7 + $0xa4] sm:$0xf]
    %v4908 = vld [vmem:[#allocation7 + $0x100] sm:$0xf]
    %v4909 = vld [vmem:[#allocation7 + $0x15c] sm:$0xf]
    %v4910 = vld [vmem:[#allocation7 + $0x1b8] sm:$0xf]
    %v4911 = vld [vmem:[#allocation7 + $0x214] sm:$0xf]
    %v4912 = vld [vmem:[#allocation7 + $0x270] sm:$0xf]
    %v4913 = vld [vmem:[#allocation7 + $0x2cc] sm:$0xf]
    %v4914 = vld [vmem:[#allocation7 + $0x328] sm:$0xf]
    %v4915 = vld [vmem:[#allocation7 + $0x384] sm:$0xf]
    %v4916 = vld [vmem:[#allocation7 + $0x3e0] sm:$0xf]
    %v4917 = vld [vmem:[#allocation7 + $0x43c] sm:$0xf]
    %v4918 = vld [vmem:[#allocation7 + $0x498] sm:$0xf]
    %v4919 = vld [vmem:[#allocation7 + $0x4f4] sm:$0xf]
    %v4920 = vld [vmem:[#allocation7 + $0x550] sm:$0xf]
    %v4921 = vld [vmem:[#allocation7 + $0x5ac] sm:$0xf]
    %v4922 = vld [vmem:[#allocation7 + $0x608] sm:$0xf]
    %v4923 = vld [vmem:[#allocation7 + $0x664] sm:$0xf]
    %v4924 = vld [vmem:[#allocation7 + $0x6c0] sm:$0xf]
    %v4925 = vld [vmem:[#allocation7 + $0x71c] sm:$0xf]
    %v4926 = vld [vmem:[#allocation7 + $0x778] sm:$0xf]
    %v4927 = vld [vmem:[#allocation7 + $0x7d4] sm:$0xf]
    %v4928 = vld [vmem:[#allocation7 + $0x830] sm:$0xf]
    %v4929 = vld [vmem:[#allocation7 + $0x88c] sm:$0xf]
    %v4930 = vld [vmem:[#allocation7 + $0x8e8] sm:$0xf]
    %v4931 = vld [vmem:[#allocation7 + $0x944] sm:$0xf]
    %v4932 = vld [vmem:[#allocation7 + $0x9a0] sm:$0xf]
    %v4933 = vld [vmem:[#allocation7 + $0x9fc] sm:$0xf]
    %v4934 = vld [vmem:[#allocation7 + $0xa58] sm:$0xf]
    %v4935 = vld [vmem:[#allocation7 + $0xab4] sm:$0xf]
    %v4936 = vld [vmem:[#allocation7 + $0xb10] sm:$0xf]
    %v4937 = vld [vmem:[#allocation7 + $0xb6c] sm:$0xf]
    %v4970 = vunpack.c.l.b16 %v4906
    %v4971 = vunpack.c.l.b16 %v4907
    %v4972 = vunpack.c.l.b16 %v4908
    %v4973 = vunpack.c.l.b16 %v4909
    %v4974 = vunpack.c.l.b16 %v4910
    %v4975 = vunpack.c.l.b16 %v4911
    %v4976 = vunpack.c.l.b16 %v4912
    %v4977 = vunpack.c.l.b16 %v4913
    %v4978 = vunpack.c.l.b16 %v4914
    %v4979 = vunpack.c.l.b16 %v4915
    %v4980 = vunpack.c.l.b16 %v4916
    %v4981 = vunpack.c.l.b16 %v4917
    %v4982 = vunpack.c.l.b16 %v4918
    %v4983 = vunpack.c.l.b16 %v4919
    %v4984 = vunpack.c.l.b16 %v4920
    %v4985 = vunpack.c.l.b16 %v4921
    %v4986 = vunpack.c.l.b16 %v4922
    %v4987 = vunpack.c.l.b16 %v4923
    %v4988 = vunpack.c.l.b16 %v4924
    %v4989 = vunpack.c.l.b16 %v4925
    %v4990 = vunpack.c.l.b16 %v4926
    %v4991 = vunpack.c.l.b16 %v4927
    %v4992 = vunpack.c.l.b16 %v4928
    %v4993 = vunpack.c.l.b16 %v4929
    %v4994 = vunpack.c.l.b16 %v4930
    %v4995 = vunpack.c.l.b16 %v4931
    %v4996 = vunpack.c.l.b16 %v4932
    %v4997 = vunpack.c.l.b16 %v4933
    %v4998 = vunpack.c.l.b16 %v4934
    %v4999 = vunpack.c.l.b16 %v4935
    %v5000 = vunpack.c.l.b16 %v4936
    %v5001 = vunpack.c.l.b16 %v4937
    %v5002 = vpack.c.b16 %v4971, %v4970
    %v5003 = vpack.c.b16 %v4973, %v4972
    %v5004 = vpack.c.b16 %v4975, %v4974
    %v5005 = vpack.c.b16 %v4977, %v4976
    %v5006 = vpack.c.b16 %v4979, %v4978
    %v5007 = vpack.c.b16 %v4981, %v4980
    %v5008 = vpack.c.b16 %v4983, %v4982
    %v5009 = vpack.c.b16 %v4985, %v4984
    %v5010 = vpack.c.b16 %v4987, %v4986
    %v5011 = vpack.c.b16 %v4989, %v4988
    %v5012 = vpack.c.b16 %v4991, %v4990
    %v5013 = vpack.c.b16 %v4993, %v4992
    %v5014 = vpack.c.b16 %v4995, %v4994
    %v5015 = vpack.c.b16 %v4997, %v4996
    %v5016 = vpack.c.b16 %v4999, %v4998
    %v5017 = vpack.c.b16 %v5001, %v5000
    %5034 = vmatprep.subr.bf16.mxu0 0
    %5035 = vmatpush1.bf16.msra.mxu0 %v5002
    %5036 = vmatprep.subr.bf16.mxu0 0
    %5037 = vmatpush1.bf16.msra.mxu0 %v5003
    %5038 = vmatprep.subr.bf16.mxu0 0
    %5039 = vmatpush1.bf16.msra.mxu0 %v5004
    %5040 = vmatprep.subr.bf16.mxu0 0
    %5041 = vmatpush1.bf16.msra.mxu0 %v5005
    %5042 = vmatprep.subr.bf16.mxu0 0
    %5043 = vmatpush1.bf16.msra.mxu0 %v5006
    %5044 = vmatprep.subr.bf16.mxu0 0
    %5045 = vmatpush1.bf16.msra.mxu0 %v5007
    %5046 = vmatprep.subr.bf16.mxu0 0
    %5047 = vmatpush1.bf16.msra.mxu0 %v5008
    %5048 = vmatprep.subr.bf16.mxu0 0
    %5049 = vmatpush1.bf16.msra.mxu0 %v5009
    %5050 = vmatprep.subr.bf16.mxu0 0
    %5051 = vmatpush1.bf16.msra.mxu0 %v5010
    %5052 = vmatprep.subr.bf16.mxu0 0
    %5053 = vmatpush1.bf16.msra.mxu0 %v5011
    %5054 = vmatprep.subr.bf16.mxu0 0
    %5055 = vmatpush1.bf16.msra.mxu0 %v5012
    %5056 = vmatprep.subr.bf16.mxu0 0
    %5057 = vmatpush1.bf16.msra.mxu0 %v5013
    %5058 = vmatprep.subr.bf16.mxu0 0
    %5059 = vmatpush1.bf16.msra.mxu0 %v5014
    %5060 = vmatprep.subr.bf16.mxu0 0
    %5061 = vmatpush1.bf16.msra.mxu0 %v5015
    %5062 = vmatprep.subr.bf16.mxu0 0
    %5063 = vmatpush1.bf16.msra.mxu0 %v5016
    %5064 = vmatprep.subr.bf16.mxu0 0
    %5065 = vmatpush1.bf16.msra.mxu0 %v5017
    %5066 = vmatprep.mubr.bf16.mxu0 %v239
    %5067 = vmatmul.mubr.bf16.gmra.mrb[0].mxu0 %v238
    %v5068 = vpop.f32.mrb[0].mxu0
    %v5069 = vadd.f32 0.0, %v5068
    %v5070 = vpop.f32.mrb[0].mxu0
    %v5071 = vpop.f32.mrb[0].mxu0
    %v5072 = vadd.f32 0.0, %v5071
    %v5073 = vpop.f32.mrb[0].mxu0
    %5074 = vmatprep.mubr.bf16.mxu0 %v241
    %5075 = vmatmul.mubr.bf16.gmra.mrb[0].mxu0 %v240
    %v5076 = vpop.f32.mrb[0].mxu0
    %v5077 = vadd.f32 0.0, %v5076
    %v5078 = vpop.f32.mrb[0].mxu0
    %v5079 = vpop.f32.mrb[0].mxu0
    %v5080 = vadd.f32 0.0, %v5079
    %v5081 = vpop.f32.mrb[0].mxu0
    %5082 = vmatprep.mubr.bf16.mxu0 %v243
    %5083 = vmatmul.mubr.bf16.gmra.mrb[0].mxu0 %v242
    %v5084 = vpop.f32.mrb[0].mxu0
    %v5085 = vadd.f32 0.0, %v5084
    %v5086 = vpop.f32.mrb[0].mxu0
    %v5087 = vpop.f32.mrb[0].mxu0
    %v5088 = vadd.f32 0.0, %v5087
    %v5089 = vpop.f32.mrb[0].mxu0
    %5090 = vmatprep.mubr.bf16.mxu0 %v245
    %5091 = vmatmul.mubr.bf16.gmra.mrb[0].mxu0 %v244
    %v5092 = vpop.f32.mrb[0].mxu0
    %v5093 = vadd.f32 0.0, %v5092
    %v5094 = vpop.f32.mrb[0].mxu0
    %v5095 = vpop.f32.mrb[0].mxu0
    %v5096 = vadd.f32 0.0, %v5095
    %v5097 = vpop.f32.mrb[0].mxu0
    %5098 = vmatprep.mubr.bf16.mxu0 %v247
    %5099 = vmatmul.mubr.bf16.gmra.mrb[0].mxu0 %v246
    %v5100 = vpop.f32.mrb[0].mxu0
    %v5101 = vadd.f32 0.0, %v5100
    %v5102 = vpop.f32.mrb[0].mxu0
    %v5103 = vpop.f32.mrb[0].mxu0
    %v5104 = vadd.f32 0.0, %v5103
    %v5105 = vpop.f32.mrb[0].mxu0
    %5106 = vmatprep.mubr.bf16.mxu0 %v249
    %5107 = vmatmul.mubr.bf16.gmra.mrb[0].mxu0 %v248
    %v5108 = vpop.f32.mrb[0].mxu0
    %v5109 = vadd.f32 0.0, %v5108
    %v5110 = vpop.f32.mrb[0].mxu0
    %v5111 = vpop.f32.mrb[0].mxu0
    %v5112 = vadd.f32 0.0, %v5111
    %v5113 = vpop.f32.mrb[0].mxu0
    %5114 = vmatprep.mubr.bf16.mxu0 %v251
    %5115 = vmatmul.mubr.bf16.gmra.mrb[0].mxu0 %v250
    %v5116 = vpop.f32.mrb[0].mxu0
    %v5117 = vadd.f32 0.0, %v5116
    %v5118 = vpop.f32.mrb[0].mxu0
    %v5119 = vpop.f32.mrb[0].mxu0
    %v5120 = vadd.f32 0.0, %v5119
    %v5121 = vpop.f32.mrb[0].mxu0
    %5122 = vmatprep.mubr.bf16.mxu0 %v253
    %5123 = vmatmul.mubr.bf16.gmra.mrb[0].mxu0 %v252
    %v5124 = vpop.f32.mrb[0].mxu0
    %v5125 = vadd.f32 0.0, %v5124
    %v5126 = vpop.f32.mrb[0].mxu0
    %v5127 = vpop.f32.mrb[0].mxu0
    %v5128 = vadd.f32 0.0, %v5127
    %v5129 = vpop.f32.mrb[0].mxu0
    %5130 = vdwg.mxu0
    %v5147 = vunpack.c.l.b16 %v4890
    %v5148 = vunpack.c.l.b16 %v4891
    %v5149 = vunpack.c.l.b16 %v4892
    %v5150 = vunpack.c.l.b16 %v4893
    %v5151 = vunpack.c.l.b16 %v4894
    %v5152 = vunpack.c.l.b16 %v4895
    %v5153 = vunpack.c.l.b16 %v4896
    %v5154 = vunpack.c.l.b16 %v4897
    %v5155 = vunpack.c.l.b16 %v4898
    %v5156 = vunpack.c.l.b16 %v4899
    %v5157 = vunpack.c.l.b16 %v4900
    %v5158 = vunpack.c.l.b16 %v4901
    %v5159 = vunpack.c.l.b16 %v4902
    %v5160 = vunpack.c.l.b16 %v4903
    %v5161 = vunpack.c.l.b16 %v4904
    %v5162 = vunpack.c.l.b16 %v4905
    %v5163 = vpack.c.b16 %v5148, %v5147
    %v5164 = vpack.c.b16 %v5150, %v5149
    %v5165 = vpack.c.b16 %v5152, %v5151
    %v5166 = vpack.c.b16 %v5154, %v5153
    %v5167 = vpack.c.b16 %v5156, %v5155
    %v5168 = vpack.c.b16 %v5158, %v5157
    %v5169 = vpack.c.b16 %v5160, %v5159
    %v5170 = vpack.c.b16 %v5162, %v5161
    %5179 = vmatprep.subr.bf16.mxu0 0
    %5180 = vmatpush1.bf16.msra.mxu0 %v5163
    %5181 = vmatprep.subr.bf16.mxu0 0
    %5182 = vmatpush1.bf16.msra.mxu0 %v5164
    %5183 = vmatprep.subr.bf16.mxu0 0
    %5184 = vmatpush1.bf16.msra.mxu0 %v5165
    %5185 = vmatprep.subr.bf16.mxu0 0
    %5186 = vmatpush1.bf16.msra.mxu0 %v5166
    %5187 = vmatprep.subr.bf16.mxu0 0
    %5188 = vmatpush1.bf16.msra.mxu0 %v5167
    %5189 = vmatprep.subr.bf16.mxu0 0
    %5190 = vmatpush1.bf16.msra.mxu0 %v5168
    %5191 = vmatprep.subr.bf16.mxu0 0
    %5192 = vmatpush1.bf16.msra.mxu0 %v5169
    %5193 = vmatprep.subr.bf16.mxu0 0
    %5194 = vmatpush1.bf16.msra.mxu0 %v5170
    %5195 = vmatprep.subr.bf16.mxu0 0
    %5196 = vmatpush1.bf16.msra.mxu0 0
    %5197 = vmatprep.subr.bf16.mxu0 0
    %5198 = vmatpush1.bf16.msra.mxu0 0
    %5199 = vmatprep.subr.bf16.mxu0 0
    %5200 = vmatpush1.bf16.msra.mxu0 0
    %5201 = vmatprep.subr.bf16.mxu0 0
    %5202 = vmatpush1.bf16.msra.mxu0 0
    %5203 = vmatprep.subr.bf16.mxu0 0
    %5204 = vmatpush1.bf16.msra.mxu0 0
    %5205 = vmatprep.subr.bf16.mxu0 0
    %5206 = vmatpush1.bf16.msra.mxu0 0
    %5207 = vmatprep.subr.bf16.mxu0 0
    %5208 = vmatpush1.bf16.msra.mxu0 0
    %5209 = vmatprep.subr.bf16.mxu0 0
    %5210 = vmatpush1.bf16.msra.mxu0 0
    %5211 = vmatprep.mubr.bf16.mxu0 0
    %5212 = vmatmul.mubr.bf16.gmra.mrb[0].mxu0 %v2893
    %v5213 = vpop.f32.mrb[0].mxu0
    %v5214 = vadd.f32 %v5069, %v5213
    %v5215 = vpop.f32.mrb[0].mxu0
    %v5216 = vpop.f32.mrb[0].mxu0
    %v5217 = vadd.f32 %v5072, %v5216
    %v5218 = vpop.f32.mrb[0].mxu0
    %5219 = vmatprep.mubr.bf16.mxu0 0
    %5220 = vmatmul.mubr.bf16.gmra.mrb[0].mxu0 %v2894
    %v5221 = vpop.f32.mrb[0].mxu0
    %v5222 = vadd.f32 %v5077, %v5221
    %v5223 = vpop.f32.mrb[0].mxu0
    %v5224 = vpop.f32.mrb[0].mxu0
    %v5225 = vadd.f32 %v5080, %v5224
    %v5226 = vpop.f32.mrb[0].mxu0
    %5227 = vmatprep.mubr.bf16.mxu0 0
    %5228 = vmatmul.mubr.bf16.gmra.mrb[0].mxu0 %v2895
    %v5229 = vpop.f32.mrb[0].mxu0
    %v5230 = vadd.f32 %v5085, %v5229
    %v5231 = vpop.f32.mrb[0].mxu0
    %v5232 = vpop.f32.mrb[0].mxu0
    %v5233 = vadd.f32 %v5088, %v5232
    %v5234 = vpop.f32.mrb[0].mxu0
    %5235 = vmatprep.mubr.bf16.mxu0 0
    %5236 = vmatmul.mubr.bf16.gmra.mrb[0].mxu0 %v2896
    %v5237 = vpop.f32.mrb[0].mxu0
    %v5238 = vadd.f32 %v5093, %v5237
    %v5239 = vpop.f32.mrb[0].mxu0
    %v5240 = vpop.f32.mrb[0].mxu0
    %v5241 = vadd.f32 %v5096, %v5240
    %v5242 = vpop.f32.mrb[0].mxu0
    %5243 = vmatprep.mubr.bf16.mxu0 0
    %5244 = vmatmul.mubr.bf16.gmra.mrb[0].mxu0 %v2897
    %v5245 = vpop.f32.mrb[0].mxu0
    %v5246 = vadd.f32 %v5101, %v5245
    %v5247 = vpop.f32.mrb[0].mxu0
    %v5248 = vpop.f32.mrb[0].mxu0
    %v5249 = vadd.f32 %v5104, %v5248
    %v5250 = vpop.f32.mrb[0].mxu0
    %5251 = vmatprep.mubr.bf16.mxu0 0
    %5252 = vmatmul.mubr.bf16.gmra.mrb[0].mxu0 %v2898
    %v5253 = vpop.f32.mrb[0].mxu0
    %v5254 = vadd.f32 %v5109, %v5253
    %v5255 = vpop.f32.mrb[0].mxu0
    %v5256 = vpop.f32.mrb[0].mxu0
    %v5257 = vadd.f32 %v5112, %v5256
    %v5258 = vpop.f32.mrb[0].mxu0
    %5259 = vmatprep.mubr.bf16.mxu0 0
    %5260 = vmatmul.mubr.bf16.gmra.mrb[0].mxu0 %v2899
    %v5261 = vpop.f32.mrb[0].mxu0
    %v5262 = vadd.f32 %v5117, %v5261
    %v5263 = vpop.f32.mrb[0].mxu0
    %v5264 = vpop.f32.mrb[0].mxu0
    %v5265 = vadd.f32 %v5120, %v5264
    %v5266 = vpop.f32.mrb[0].mxu0
    %5267 = vmatprep.mubr.bf16.mxu0 0
    %5268 = vmatmul.mubr.bf16.gmra.mrb[0].mxu0 %v2900
    %v5269 = vpop.f32.mrb[0].mxu0
    %v5270 = vadd.f32 %v5125, %v5269
    %v5271 = vpop.f32.mrb[0].mxu0
    %v5272 = vpop.f32.mrb[0].mxu0
    %v5273 = vadd.f32 %v5128, %v5272
    %v5274 = vpop.f32.mrb[0].mxu0
    %5275 = vdwg.mxu0
    %v5276 = vld [vmem:[#allocation10 + $0x14] sm:$0x1]
    %v5278 = vlaneseq
    %v5279 = vshrl.u32 %v5278, 7
    %v5280 = vsub.s32 0, %v5279
    %v5281 = vrot.slane %v5276, %v5280
    %v5283 = vadd.f32 %v5214, %v5281
    %v5284 = vadd.f32 %v5217, %v5281
    %v5285 = vadd.f32 %v5222, %v5281
    %v5286 = vadd.f32 %v5225, %v5281
    %v5287 = vadd.f32 %v5230, %v5281
    %v5288 = vadd.f32 %v5233, %v5281
    %v5289 = vadd.f32 %v5238, %v5281
    %v5290 = vadd.f32 %v5241, %v5281
    %v5291 = vadd.f32 %v5246, %v5281
    %v5292 = vadd.f32 %v5249, %v5281
    %v5293 = vadd.f32 %v5254, %v5281
    %v5294 = vadd.f32 %v5257, %v5281
    %v5295 = vadd.f32 %v5262, %v5281
    %v5296 = vadd.f32 %v5265, %v5281
    %v5297 = vadd.f32 %v5270, %v5281
    %v5298 = vadd.f32 %v5273, %v5281
    %v5299 = vmax.f32 %v5283, 0.0
    %v5300 = vmax.f32 %v5284, 0.0
    %v5301 = vmax.f32 %v5285, 0.0
    %v5302 = vmax.f32 %v5286, 0.0
    %v5303 = vmax.f32 %v5287, 0.0
    %v5304 = vmax.f32 %v5288, 0.0
    %v5305 = vmax.f32 %v5289, 0.0
    %v5306 = vmax.f32 %v5290, 0.0
    %v5307 = vmax.f32 %v5291, 0.0
    %v5308 = vmax.f32 %v5292, 0.0
    %v5309 = vmax.f32 %v5293, 0.0
    %v5310 = vmax.f32 %v5294, 0.0
    %v5311 = vmax.f32 %v5295, 0.0
    %v5312 = vmax.f32 %v5296, 0.0
    %v5313 = vmax.f32 %v5297, 0.0
    %v5314 = vmax.f32 %v5298, 0.0
    %v5315 = vpack.c.bf16 %v5300, %v5299
    %v5316 = vpack.c.bf16 %v5302, %v5301
    %v5317 = vpack.c.bf16 %v5304, %v5303
    %v5318 = vpack.c.bf16 %v5306, %v5305
    %v5319 = vpack.c.bf16 %v5308, %v5307
    %v5320 = vpack.c.bf16 %v5310, %v5309
    %v5321 = vpack.c.bf16 %v5312, %v5311
    %v5322 = vpack.c.bf16 %v5314, %v5313
    %v5323 = vld [vmem:[#allocation5 + $0x4] sm:$0xff]
    %v5324 = vld [vmem:[#allocation5 + $0x14] sm:$0xff]
    %v5325 = vld [vmem:[#allocation5 + $0x24] sm:$0xff]
    %v5326 = vld [vmem:[#allocation5 + $0x34] sm:$0xff]
    %v5327 = vld [vmem:[#allocation5 + $0x44] sm:$0xff]
    %v5328 = vld [vmem:[#allocation5 + $0x54] sm:$0xff]
    %v5329 = vld [vmem:[#allocation5 + $0x64] sm:$0xff]
    %v5330 = vld [vmem:[#allocation5 + $0x74] sm:$0xff]
    %v5331 = vld [vmem:[#allocation5 + $0x84] sm:$0xff]
    %v5332 = vld [vmem:[#allocation5 + $0x94] sm:$0xff]
    %v5333 = vld [vmem:[#allocation5 + $0xa4] sm:$0xff]
    %v5334 = vld [vmem:[#allocation5 + $0xb4] sm:$0xff]
    %v5335 = vld [vmem:[#allocation5 + $0xc4] sm:$0xff]
    %v5336 = vld [vmem:[#allocation5 + $0xd4] sm:$0xff]
    %v5337 = vld [vmem:[#allocation5 + $0xe4] sm:$0xff]
    %v5338 = vld [vmem:[#allocation5 + $0xf4] sm:$0xff]
    %v5339 = vld [vmem:[#allocation7 + $0x4c] sm:$0xff]
    %v5340 = vld [vmem:[#allocation7 + $0xa8] sm:$0xff]
    %v5341 = vld [vmem:[#allocation7 + $0x104] sm:$0xff]
    %v5342 = vld [vmem:[#allocation7 + $0x160] sm:$0xff]
    %v5343 = vld [vmem:[#allocation7 + $0x1bc] sm:$0xff]
    %v5344 = vld [vmem:[#allocation7 + $0x218] sm:$0xff]
    %v5345 = vld [vmem:[#allocation7 + $0x274] sm:$0xff]
    %v5346 = vld [vmem:[#allocation7 + $0x2d0] sm:$0xff]
    %v5347 = vld [vmem:[#allocation7 + $0x32c] sm:$0xff]
    %v5348 = vld [vmem:[#allocation7 + $0x388] sm:$0xff]
    %v5349 = vld [vmem:[#allocation7 + $0x3e4] sm:$0xff]
    %v5350 = vld [vmem:[#allocation7 + $0x440] sm:$0xff]
    %v5351 = vld [vmem:[#allocation7 + $0x49c] sm:$0xff]
    %v5352 = vld [vmem:[#allocation7 + $0x4f8] sm:$0xff]
    %v5353 = vld [vmem:[#allocation7 + $0x554] sm:$0xff]
    %v5354 = vld [vmem:[#allocation7 + $0x5b0] sm:$0xff]
    %v5355 = vld [vmem:[#allocation7 + $0x60c] sm:$0xff]
    %v5356 = vld [vmem:[#allocation7 + $0x668] sm:$0xff]
    %v5357 = vld [vmem:[#allocation7 + $0x6c4] sm:$0xff]
    %v5358 = vld [vmem:[#allocation7 + $0x720] sm:$0xff]
    %v5359 = vld [vmem:[#allocation7 + $0x77c] sm:$0xff]
    %v5360 = vld [vmem:[#allocation7 + $0x7d8] sm:$0xff]
    %v5361 = vld [vmem:[#allocation7 + $0x834] sm:$0xff]
    %v5362 = vld [vmem:[#allocation7 + $0x890] sm:$0xff]
    %v5363 = vld [vmem:[#allocation7 + $0x8ec] sm:$0xff]
    %v5364 = vld [vmem:[#allocation7 + $0x948] sm:$0xff]
    %v5365 = vld [vmem:[#allocation7 + $0x9a4] sm:$0xff]
    %v5366 = vld [vmem:[#allocation7 + $0xa00] sm:$0xff]
    %v5367 = vld [vmem:[#allocation7 + $0xa5c] sm:$0xff]
    %v5368 = vld [vmem:[#allocation7 + $0xab8] sm:$0xff]
    %v5369 = vld [vmem:[#allocation7 + $0xb14] sm:$0xff]
    %v5370 = vld [vmem:[#allocation7 + $0xb70] sm:$0xff]
    %v5403 = vunpack.c.l.b16 %v5339
    %v5404 = vunpack.c.h.b16 %v5339
    %v5405 = vunpack.c.l.b16 %v5340
    %v5406 = vunpack.c.h.b16 %v5340
    %v5407 = vunpack.c.l.b16 %v5341
    %v5408 = vunpack.c.h.b16 %v5341
    %v5409 = vunpack.c.l.b16 %v5342
    %v5410 = vunpack.c.h.b16 %v5342
    %v5411 = vunpack.c.l.b16 %v5343
    %v5412 = vunpack.c.h.b16 %v5343
    %v5413 = vunpack.c.l.b16 %v5344
    %v5414 = vunpack.c.h.b16 %v5344
    %v5415 = vunpack.c.l.b16 %v5345
    %v5416 = vunpack.c.h.b16 %v5345
    %v5417 = vunpack.c.l.b16 %v5346
    %v5418 = vunpack.c.h.b16 %v5346
    %v5419 = vunpack.c.l.b16 %v5347
    %v5420 = vunpack.c.h.b16 %v5347
    %v5421 = vunpack.c.l.b16 %v5348
    %v5422 = vunpack.c.h.b16 %v5348
    %v5423 = vunpack.c.l.b16 %v5349
    %v5424 = vunpack.c.h.b16 %v5349
    %v5425 = vunpack.c.l.b16 %v5350
    %v5426 = vunpack.c.h.b16 %v5350
    %v5427 = vunpack.c.l.b16 %v5351
    %v5428 = vunpack.c.h.b16 %v5351
    %v5429 = vunpack.c.l.b16 %v5352
    %v5430 = vunpack.c.h.b16 %v5352
    %v5431 = vunpack.c.l.b16 %v5353
    %v5432 = vunpack.c.h.b16 %v5353
    %v5433 = vunpack.c.l.b16 %v5354
    %v5434 = vunpack.c.h.b16 %v5354
    %v5435 = vunpack.c.l.b16 %v5355
    %v5436 = vunpack.c.h.b16 %v5355
    %v5437 = vunpack.c.l.b16 %v5356
    %v5438 = vunpack.c.h.b16 %v5356
    %v5439 = vunpack.c.l.b16 %v5357
    %v5440 = vunpack.c.h.b16 %v5357
    %v5441 = vunpack.c.l.b16 %v5358
    %v5442 = vunpack.c.h.b16 %v5358
    %v5443 = vunpack.c.l.b16 %v5359
    %v5444 = vunpack.c.h.b16 %v5359
    %v5445 = vunpack.c.l.b16 %v5360
    %v5446 = vunpack.c.h.b16 %v5360
    %v5447 = vunpack.c.l.b16 %v5361
    %v5448 = vunpack.c.h.b16 %v5361
    %v5449 = vunpack.c.l.b16 %v5362
    %v5450 = vunpack.c.h.b16 %v5362
    %v5451 = vunpack.c.l.b16 %v5363
    %v5452 = vunpack.c.h.b16 %v5363
    %v5453 = vunpack.c.l.b16 %v5364
    %v5454 = vunpack.c.h.b16 %v5364
    %v5455 = vunpack.c.l.b16 %v5365
    %v5456 = vunpack.c.h.b16 %v5365
    %v5457 = vunpack.c.l.b16 %v5366
    %v5458 = vunpack.c.h.b16 %v5366
    %v5459 = vunpack.c.l.b16 %v5367
    %v5460 = vunpack.c.h.b16 %v5367
    %v5461 = vunpack.c.l.b16 %v5368
    %v5462 = vunpack.c.h.b16 %v5368
    %v5463 = vunpack.c.l.b16 %v5369
    %v5464 = vunpack.c.h.b16 %v5369
    %v5465 = vunpack.c.l.b16 %v5370
    %v5466 = vunpack.c.h.b16 %v5370
    %v5467 = vpack.c.b16 %v5405, %v5403
    %v5468 = vpack.c.b16 %v5406, %v5404
    %v5469 = vpack.c.b16 %v5409, %v5407
    %v5470 = vpack.c.b16 %v5410, %v5408
    %v5471 = vpack.c.b16 %v5413, %v5411
    %v5472 = vpack.c.b16 %v5414, %v5412
    %v5473 = vpack.c.b16 %v5417, %v5415
    %v5474 = vpack.c.b16 %v5418, %v5416
    %v5475 = vpack.c.b16 %v5421, %v5419
    %v5476 = vpack.c.b16 %v5422, %v5420
    %v5477 = vpack.c.b16 %v5425, %v5423
    %v5478 = vpack.c.b16 %v5426, %v5424
    %v5479 = vpack.c.b16 %v5429, %v5427
    %v5480 = vpack.c.b16 %v5430, %v5428
    %v5481 = vpack.c.b16 %v5433, %v5431
    %v5482 = vpack.c.b16 %v5434, %v5432
    %v5483 = vpack.c.b16 %v5437, %v5435
    %v5484 = vpack.c.b16 %v5438, %v5436
    %v5485 = vpack.c.b16 %v5441, %v5439
    %v5486 = vpack.c.b16 %v5442, %v5440
    %v5487 = vpack.c.b16 %v5445, %v5443
    %v5488 = vpack.c.b16 %v5446, %v5444
    %v5489 = vpack.c.b16 %v5449, %v5447
    %v5490 = vpack.c.b16 %v5450, %v5448
    %v5491 = vpack.c.b16 %v5453, %v5451
    %v5492 = vpack.c.b16 %v5454, %v5452
    %v5493 = vpack.c.b16 %v5457, %v5455
    %v5494 = vpack.c.b16 %v5458, %v5456
    %v5495 = vpack.c.b16 %v5461, %v5459
    %v5496 = vpack.c.b16 %v5462, %v5460
    %v5497 = vpack.c.b16 %v5465, %v5463
    %v5498 = vpack.c.b16 %v5466, %v5464
    %5531 = vmatprep.subr.bf16.mxu0 %v5468
    %5532 = vmatpush1.bf16.msra.mxu0 %v5467
    %5533 = vmatprep.subr.bf16.mxu0 %v5470
    %5534 = vmatpush1.bf16.msra.mxu0 %v5469
    %5535 = vmatprep.subr.bf16.mxu0 %v5472
    %5536 = vmatpush1.bf16.msra.mxu0 %v5471
    %5537 = vmatprep.subr.bf16.mxu0 %v5474
    %5538 = vmatpush1.bf16.msra.mxu0 %v5473
    %5539 = vmatprep.subr.bf16.mxu0 %v5476
    %5540 = vmatpush1.bf16.msra.mxu0 %v5475
    %5541 = vmatprep.subr.bf16.mxu0 %v5478
    %5542 = vmatpush1.bf16.msra.mxu0 %v5477
    %5543 = vmatprep.subr.bf16.mxu0 %v5480
    %5544 = vmatpush1.bf16.msra.mxu0 %v5479
    %5545 = vmatprep.subr.bf16.mxu0 %v5482
    %5546 = vmatpush1.bf16.msra.mxu0 %v5481
    %5547 = vmatprep.subr.bf16.mxu0 %v5484
    %5548 = vmatpush1.bf16.msra.mxu0 %v5483
    %5549 = vmatprep.subr.bf16.mxu0 %v5486
    %5550 = vmatpush1.bf16.msra.mxu0 %v5485
    %5551 = vmatprep.subr.bf16.mxu0 %v5488
    %5552 = vmatpush1.bf16.msra.mxu0 %v5487
    %5553 = vmatprep.subr.bf16.mxu0 %v5490
    %5554 = vmatpush1.bf16.msra.mxu0 %v5489
    %5555 = vmatprep.subr.bf16.mxu0 %v5492
    %5556 = vmatpush1.bf16.msra.mxu0 %v5491
    %5557 = vmatprep.subr.bf16.mxu0 %v5494
    %5558 = vmatpush1.bf16.msra.mxu0 %v5493
    %5559 = vmatprep.subr.bf16.mxu0 %v5496
    %5560 = vmatpush1.bf16.msra.mxu0 %v5495
    %5561 = vmatprep.subr.bf16.mxu0 %v5498
    %5562 = vmatpush1.bf16.msra.mxu0 %v5497
    %5563 = vmatprep.mubr.bf16.mxu0 %v239
    %5564 = vmatmul.mubr.bf16.gmra.mrb[0].mxu0 %v238
    %v5565 = vpop.f32.mrb[0].mxu0
    %v5566 = vadd.f32 0.0, %v5565
    %v5567 = vpop.f32.mrb[0].mxu0
    %v5568 = vadd.f32 0.0, %v5567
    %v5569 = vpop.f32.mrb[0].mxu0
    %v5570 = vadd.f32 0.0, %v5569
    %v5571 = vpop.f32.mrb[0].mxu0
    %v5572 = vadd.f32 0.0, %v5571
    %5573 = vmatprep.mubr.bf16.mxu0 %v241
    %5574 = vmatmul.mubr.bf16.gmra.mrb[0].mxu0 %v240
    %v5575 = vpop.f32.mrb[0].mxu0
    %v5576 = vadd.f32 0.0, %v5575
    %v5577 = vpop.f32.mrb[0].mxu0
    %v5578 = vadd.f32 0.0, %v5577
    %v5579 = vpop.f32.mrb[0].mxu0
    %v5580 = vadd.f32 0.0, %v5579
    %v5581 = vpop.f32.mrb[0].mxu0
    %v5582 = vadd.f32 0.0, %v5581
    %5583 = vmatprep.mubr.bf16.mxu0 %v243
    %5584 = vmatmul.mubr.bf16.gmra.mrb[0].mxu0 %v242
    %v5585 = vpop.f32.mrb[0].mxu0
    %v5586 = vadd.f32 0.0, %v5585
    %v5587 = vpop.f32.mrb[0].mxu0
    %v5588 = vadd.f32 0.0, %v5587
    %v5589 = vpop.f32.mrb[0].mxu0
    %v5590 = vadd.f32 0.0, %v5589
    %v5591 = vpop.f32.mrb[0].mxu0
    %v5592 = vadd.f32 0.0, %v5591
    %5593 = vmatprep.mubr.bf16.mxu0 %v245
    %5594 = vmatmul.mubr.bf16.gmra.mrb[0].mxu0 %v244
    %v5595 = vpop.f32.mrb[0].mxu0
    %v5596 = vadd.f32 0.0, %v5595
    %v5597 = vpop.f32.mrb[0].mxu0
    %v5598 = vadd.f32 0.0, %v5597
    %v5599 = vpop.f32.mrb[0].mxu0
    %v5600 = vadd.f32 0.0, %v5599
    %v5601 = vpop.f32.mrb[0].mxu0
    %v5602 = vadd.f32 0.0, %v5601
    %5603 = vmatprep.mubr.bf16.mxu0 %v247
    %5604 = vmatmul.mubr.bf16.gmra.mrb[0].mxu0 %v246
    %v5605 = vpop.f32.mrb[0].mxu0
    %v5606 = vadd.f32 0.0, %v5605
    %v5607 = vpop.f32.mrb[0].mxu0
    %v5608 = vadd.f32 0.0, %v5607
    %v5609 = vpop.f32.mrb[0].mxu0
    %v5610 = vadd.f32 0.0, %v5609
    %v5611 = vpop.f32.mrb[0].mxu0
    %v5612 = vadd.f32 0.0, %v5611
    %5613 = vmatprep.mubr.bf16.mxu0 %v249
    %5614 = vmatmul.mubr.bf16.gmra.mrb[0].mxu0 %v248
    %v5615 = vpop.f32.mrb[0].mxu0
    %v5616 = vadd.f32 0.0, %v5615
    %v5617 = vpop.f32.mrb[0].mxu0
    %v5618 = vadd.f32 0.0, %v5617
    %v5619 = vpop.f32.mrb[0].mxu0
    %v5620 = vadd.f32 0.0, %v5619
    %v5621 = vpop.f32.mrb[0].mxu0
    %v5622 = vadd.f32 0.0, %v5621
    %5623 = vmatprep.mubr.bf16.mxu0 %v251
    %5624 = vmatmul.mubr.bf16.gmra.mrb[0].mxu0 %v250
    %v5625 = vpop.f32.mrb[0].mxu0
    %v5626 = vadd.f32 0.0, %v5625
    %v5627 = vpop.f32.mrb[0].mxu0
    %v5628 = vadd.f32 0.0, %v5627
    %v5629 = vpop.f32.mrb[0].mxu0
    %v5630 = vadd.f32 0.0, %v5629
    %v5631 = vpop.f32.mrb[0].mxu0
    %v5632 = vadd.f32 0.0, %v5631
    %5633 = vmatprep.mubr.bf16.mxu0 %v253
    %5634 = vmatmul.mubr.bf16.gmra.mrb[0].mxu0 %v252
    %v5635 = vpop.f32.mrb[0].mxu0
    %v5636 = vadd.f32 0.0, %v5635
    %v5637 = vpop.f32.mrb[0].mxu0
    %v5638 = vadd.f32 0.0, %v5637
    %v5639 = vpop.f32.mrb[0].mxu0
    %v5640 = vadd.f32 0.0, %v5639
    %v5641 = vpop.f32.mrb[0].mxu0
    %v5642 = vadd.f32 0.0, %v5641
    %5643 = vdwg.mxu0
    %v5660 = vunpack.c.l.b16 %v5323
    %v5661 = vunpack.c.h.b16 %v5323
    %v5662 = vunpack.c.l.b16 %v5324
    %v5663 = vunpack.c.h.b16 %v5324
    %v5664 = vunpack.c.l.b16 %v5325
    %v5665 = vunpack.c.h.b16 %v5325
    %v5666 = vunpack.c.l.b16 %v5326
    %v5667 = vunpack.c.h.b16 %v5326
    %v5668 = vunpack.c.l.b16 %v5327
    %v5669 = vunpack.c.h.b16 %v5327
    %v5670 = vunpack.c.l.b16 %v5328
    %v5671 = vunpack.c.h.b16 %v5328
    %v5672 = vunpack.c.l.b16 %v5329
    %v5673 = vunpack.c.h.b16 %v5329
    %v5674 = vunpack.c.l.b16 %v5330
    %v5675 = vunpack.c.h.b16 %v5330
    %v5676 = vunpack.c.l.b16 %v5331
    %v5677 = vunpack.c.h.b16 %v5331
    %v5678 = vunpack.c.l.b16 %v5332
    %v5679 = vunpack.c.h.b16 %v5332
    %v5680 = vunpack.c.l.b16 %v5333
    %v5681 = vunpack.c.h.b16 %v5333
    %v5682 = vunpack.c.l.b16 %v5334
    %v5683 = vunpack.c.h.b16 %v5334
    %v5684 = vunpack.c.l.b16 %v5335
    %v5685 = vunpack.c.h.b16 %v5335
    %v5686 = vunpack.c.l.b16 %v5336
    %v5687 = vunpack.c.h.b16 %v5336
    %v5688 = vunpack.c.l.b16 %v5337
    %v5689 = vunpack.c.h.b16 %v5337
    %v5690 = vunpack.c.l.b16 %v5338
    %v5691 = vunpack.c.h.b16 %v5338
    %v5692 = vpack.c.b16 %v5662, %v5660
    %v5693 = vpack.c.b16 %v5663, %v5661
    %v5694 = vpack.c.b16 %v5666, %v5664
    %v5695 = vpack.c.b16 %v5667, %v5665
    %v5696 = vpack.c.b16 %v5670, %v5668
    %v5697 = vpack.c.b16 %v5671, %v5669
    %v5698 = vpack.c.b16 %v5674, %v5672
    %v5699 = vpack.c.b16 %v5675, %v5673
    %v5700 = vpack.c.b16 %v5678, %v5676
    %v5701 = vpack.c.b16 %v5679, %v5677
    %v5702 = vpack.c.b16 %v5682, %v5680
    %v5703 = vpack.c.b16 %v5683, %v5681
    %v5704 = vpack.c.b16 %v5686, %v5684
    %v5705 = vpack.c.b16 %v5687, %v5685
    %v5706 = vpack.c.b16 %v5690, %v5688
    %v5707 = vpack.c.b16 %v5691, %v5689
    %5724 = vmatprep.subr.bf16.mxu0 %v5693
    %5725 = vmatpush1.bf16.msra.mxu0 %v5692
    %5726 = vmatprep.subr.bf16.mxu0 %v5695
    %5727 = vmatpush1.bf16.msra.mxu0 %v5694
    %5728 = vmatprep.subr.bf16.mxu0 %v5697
    %5729 = vmatpush1.bf16.msra.mxu0 %v5696
    %5730 = vmatprep.subr.bf16.mxu0 %v5699
    %5731 = vmatpush1.bf16.msra.mxu0 %v5698
    %5732 = vmatprep.subr.bf16.mxu0 %v5701
    %5733 = vmatpush1.bf16.msra.mxu0 %v5700
    %5734 = vmatprep.subr.bf16.mxu0 %v5703
    %5735 = vmatpush1.bf16.msra.mxu0 %v5702
    %5736 = vmatprep.subr.bf16.mxu0 %v5705
    %5737 = vmatpush1.bf16.msra.mxu0 %v5704
    %5738 = vmatprep.subr.bf16.mxu0 %v5707
    %5739 = vmatpush1.bf16.msra.mxu0 %v5706
    %5740 = vmatprep.subr.bf16.mxu0 0
    %5741 = vmatpush1.bf16.msra.mxu0 0
    %5742 = vmatprep.subr.bf16.mxu0 0
    %5743 = vmatpush1.bf16.msra.mxu0 0
    %5744 = vmatprep.subr.bf16.mxu0 0
    %5745 = vmatpush1.bf16.msra.mxu0 0
    %5746 = vmatprep.subr.bf16.mxu0 0
    %5747 = vmatpush1.bf16.msra.mxu0 0
    %5748 = vmatprep.subr.bf16.mxu0 0
    %5749 = vmatpush1.bf16.msra.mxu0 0
    %5750 = vmatprep.subr.bf16.mxu0 0
    %5751 = vmatpush1.bf16.msra.mxu0 0
    %5752 = vmatprep.subr.bf16.mxu0 0
    %5753 = vmatpush1.bf16.msra.mxu0 0
    %5754 = vmatprep.subr.bf16.mxu0 0
    %5755 = vmatpush1.bf16.msra.mxu0 0
    %5756 = vmatprep.mubr.bf16.mxu0 0
    %5757 = vmatmul.mubr.bf16.gmra.mrb[0].mxu0 %v4882
    %v5758 = vpop.f32.mrb[0].mxu0
    %v5759 = vadd.f32 %v5566, %v5758
    %v5760 = vpop.f32.mrb[0].mxu0
    %v5761 = vadd.f32 %v5568, %v5760
    %v5762 = vpop.f32.mrb[0].mxu0
    %v5763 = vadd.f32 %v5570, %v5762
    %v5764 = vpop.f32.mrb[0].mxu0
    %v5765 = vadd.f32 %v5572, %v5764
    %5766 = vmatprep.mubr.bf16.mxu0 0
    %5767 = vmatmul.mubr.bf16.gmra.mrb[0].mxu0 %v4883
    %v5768 = vpop.f32.mrb[0].mxu0
    %v5769 = vadd.f32 %v5576, %v5768
    %v5770 = vpop.f32.mrb[0].mxu0
    %v5771 = vadd.f32 %v5578, %v5770
    %v5772 = vpop.f32.mrb[0].mxu0
    %v5773 = vadd.f32 %v5580, %v5772
    %v5774 = vpop.f32.mrb[0].mxu0
    %v5775 = vadd.f32 %v5582, %v5774
    %5776 = vmatprep.mubr.bf16.mxu0 0
    %5777 = vmatmul.mubr.bf16.gmra.mrb[0].mxu0 %v4884
    %v5778 = vpop.f32.mrb[0].mxu0
    %v5779 = vadd.f32 %v5586, %v5778
    %v5780 = vpop.f32.mrb[0].mxu0
    %v5781 = vadd.f32 %v5588, %v5780
    %v5782 = vpop.f32.mrb[0].mxu0
    %v5783 = vadd.f32 %v5590, %v5782
    %v5784 = vpop.f32.mrb[0].mxu0
    %v5785 = vadd.f32 %v5592, %v5784
    %5786 = vmatprep.mubr.bf16.mxu0 0
    %5787 = vmatmul.mubr.bf16.gmra.mrb[0].mxu0 %v4885
    %v5788 = vpop.f32.mrb[0].mxu0
    %v5789 = vadd.f32 %v5596, %v5788
    %v5790 = vpop.f32.mrb[0].mxu0
    %v5791 = vadd.f32 %v5598, %v5790
    %v5792 = vpop.f32.mrb[0].mxu0
    %v5793 = vadd.f32 %v5600, %v5792
    %v5794 = vpop.f32.mrb[0].mxu0
    %v5795 = vadd.f32 %v5602, %v5794
    %5796 = vmatprep.mubr.bf16.mxu0 0
    %5797 = vmatmul.mubr.bf16.gmra.mrb[0].mxu0 %v4886
    %v5798 = vpop.f32.mrb[0].mxu0
    %v5799 = vadd.f32 %v5606, %v5798
    %v5800 = vpop.f32.mrb[0].mxu0
    %v5801 = vadd.f32 %v5608, %v5800
    %v5802 = vpop.f32.mrb[0].mxu0
    %v5803 = vadd.f32 %v5610, %v5802
    %v5804 = vpop.f32.mrb[0].mxu0
    %v5805 = vadd.f32 %v5612, %v5804
    %5806 = vmatprep.mubr.bf16.mxu0 0
    %5807 = vmatmul.mubr.bf16.gmra.mrb[0].mxu0 %v4887
    %v5808 = vpop.f32.mrb[0].mxu0
    %v5809 = vadd.f32 %v5616, %v5808
    %v5810 = vpop.f32.mrb[0].mxu0
    %v5811 = vadd.f32 %v5618, %v5810
    %v5812 = vpop.f32.mrb[0].mxu0
    %v5813 = vadd.f32 %v5620, %v5812
    %v5814 = vpop.f32.mrb[0].mxu0
    %v5815 = vadd.f32 %v5622, %v5814
    %5816 = vmatprep.mubr.bf16.mxu0 0
    %5817 = vmatmul.mubr.bf16.gmra.mrb[0].mxu0 %v4888
    %v5818 = vpop.f32.mrb[0].mxu0
    %v5819 = vadd.f32 %v5626, %v5818
    %v5820 = vpop.f32.mrb[0].mxu0
    %v5821 = vadd.f32 %v5628, %v5820
    %v5822 = vpop.f32.mrb[0].mxu0
    %v5823 = vadd.f32 %v5630, %v5822
    %v5824 = vpop.f32.mrb[0].mxu0
    %v5825 = vadd.f32 %v5632, %v5824
    %5826 = vmatprep.mubr.bf16.mxu0 0
    %5827 = vmatmul.mubr.bf16.gmra.mrb[0].mxu0 %v4889
    %v5828 = vpop.f32.mrb[0].mxu0
    %v5829 = vadd.f32 %v5636, %v5828
    %v5830 = vpop.f32.mrb[0].mxu0
    %v5831 = vadd.f32 %v5638, %v5830
    %v5832 = vpop.f32.mrb[0].mxu0
    %v5833 = vadd.f32 %v5640, %v5832
    %v5834 = vpop.f32.mrb[0].mxu0
    %v5835 = vadd.f32 %v5642, %v5834
    %5836 = vdwg.mxu0
    %v5837 = vld [vmem:[#allocation10 + $0x15] sm:$0x3]
    %v5839 = vlaneseq
    %v5840 = vshrl.u32 %v5839, 7
    %v5841 = vsub.s32 0, %v5840
    %v5842 = vrot.slane %v5837, %v5841
    %v5843 = vlaneseq
    %v5844 = vshrl.u32 %v5843, 7
    %v5845 = vsub.s32 1, %v5844
    %v5846 = vrot.slane %v5837, %v5845
    %v5849 = vadd.f32 %v5759, %v5842
    %v5850 = vadd.f32 %v5761, %v5846
    %v5851 = vadd.f32 %v5763, %v5842
    %v5852 = vadd.f32 %v5765, %v5846
    %v5853 = vadd.f32 %v5769, %v5842
    %v5854 = vadd.f32 %v5771, %v5846
    %v5855 = vadd.f32 %v5773, %v5842
    %v5856 = vadd.f32 %v5775, %v5846
    %v5857 = vadd.f32 %v5779, %v5842
    %v5858 = vadd.f32 %v5781, %v5846
    %v5859 = vadd.f32 %v5783, %v5842
    %v5860 = vadd.f32 %v5785, %v5846
    %v5861 = vadd.f32 %v5789, %v5842
    %v5862 = vadd.f32 %v5791, %v5846
    %v5863 = vadd.f32 %v5793, %v5842
    %v5864 = vadd.f32 %v5795, %v5846
    %v5865 = vadd.f32 %v5799, %v5842
    %v5866 = vadd.f32 %v5801, %v5846
    %v5867 = vadd.f32 %v5803, %v5842
    %v5868 = vadd.f32 %v5805, %v5846
    %v5869 = vadd.f32 %v5809, %v5842
    %v5870 = vadd.f32 %v5811, %v5846
    %v5871 = vadd.f32 %v5813, %v5842
    %v5872 = vadd.f32 %v5815, %v5846
    %v5873 = vadd.f32 %v5819, %v5842
    %v5874 = vadd.f32 %v5821, %v5846
    %v5875 = vadd.f32 %v5823, %v5842
    %v5876 = vadd.f32 %v5825, %v5846
    %v5877 = vadd.f32 %v5829, %v5842
    %v5878 = vadd.f32 %v5831, %v5846
    %v5879 = vadd.f32 %v5833, %v5842
    %v5880 = vadd.f32 %v5835, %v5846
    %v5881 = vmax.f32 %v5849, 0.0
    %v5882 = vmax.f32 %v5850, 0.0
    %v5883 = vmax.f32 %v5851, 0.0
    %v5884 = vmax.f32 %v5852, 0.0
    %v5885 = vmax.f32 %v5853, 0.0
    %v5886 = vmax.f32 %v5854, 0.0
    %v5887 = vmax.f32 %v5855, 0.0
    %v5888 = vmax.f32 %v5856, 0.0
    %v5889 = vmax.f32 %v5857, 0.0
    %v5890 = vmax.f32 %v5858, 0.0
    %v5891 = vmax.f32 %v5859, 0.0
    %v5892 = vmax.f32 %v5860, 0.0
    %v5893 = vmax.f32 %v5861, 0.0
    %v5894 = vmax.f32 %v5862, 0.0
    %v5895 = vmax.f32 %v5863, 0.0
    %v5896 = vmax.f32 %v5864, 0.0
    %v5897 = vmax.f32 %v5865, 0.0
    %v5898 = vmax.f32 %v5866, 0.0
    %v5899 = vmax.f32 %v5867, 0.0
    %v5900 = vmax.f32 %v5868, 0.0
    %v5901 = vmax.f32 %v5869, 0.0
    %v5902 = vmax.f32 %v5870, 0.0
    %v5903 = vmax.f32 %v5871, 0.0
    %v5904 = vmax.f32 %v5872, 0.0
    %v5905 = vmax.f32 %v5873, 0.0
    %v5906 = vmax.f32 %v5874, 0.0
    %v5907 = vmax.f32 %v5875, 0.0
    %v5908 = vmax.f32 %v5876, 0.0
    %v5909 = vmax.f32 %v5877, 0.0
    %v5910 = vmax.f32 %v5878, 0.0
    %v5911 = vmax.f32 %v5879, 0.0
    %v5912 = vmax.f32 %v5880, 0.0
    %v5913 = vpack.c.bf16 %v5883, %v5881
    %v5914 = vpack.c.bf16 %v5884, %v5882
    %v5915 = vpack.c.bf16 %v5887, %v5885
    %v5916 = vpack.c.bf16 %v5888, %v5886
    %v5917 = vpack.c.bf16 %v5891, %v5889
    %v5918 = vpack.c.bf16 %v5892, %v5890
    %v5919 = vpack.c.bf16 %v5895, %v5893
    %v5920 = vpack.c.bf16 %v5896, %v5894
    %v5921 = vpack.c.bf16 %v5899, %v5897
    %v5922 = vpack.c.bf16 %v5900, %v5898
    %v5923 = vpack.c.bf16 %v5903, %v5901
    %v5924 = vpack.c.bf16 %v5904, %v5902
    %v5925 = vpack.c.bf16 %v5907, %v5905
    %v5926 = vpack.c.bf16 %v5908, %v5906
    %v5927 = vpack.c.bf16 %v5911, %v5909
    %v5928 = vpack.c.bf16 %v5912, %v5910
    %v5929 = vld [vmem:[#allocation7 + $0x54] sm:$0xf]
    %v5930 = vld [vmem:[#allocation7 + $0xb0] sm:$0xf]
    %v5931 = vld [vmem:[#allocation7 + $0x10c] sm:$0xf]
    %v5932 = vld [vmem:[#allocation7 + $0x168] sm:$0xf]
    %v5933 = vld [vmem:[#allocation7 + $0x1c4] sm:$0xf]
    %v5934 = vld [vmem:[#allocation7 + $0x220] sm:$0xf]
    %v5935 = vld [vmem:[#allocation7 + $0x27c] sm:$0xf]
    %v5936 = vld [vmem:[#allocation7 + $0x2d8] sm:$0xf]
    %v5937 = vld [vmem:[#allocation7 + $0x334] sm:$0xf]
    %v5938 = vld [vmem:[#allocation7 + $0x390] sm:$0xf]
    %v5939 = vld [vmem:[#allocation7 + $0x3ec] sm:$0xf]
    %v5940 = vld [vmem:[#allocation7 + $0x448] sm:$0xf]
    %v5941 = vld [vmem:[#allocation7 + $0x4a4] sm:$0xf]
    %v5942 = vld [vmem:[#allocation7 + $0x500] sm:$0xf]
    %v5943 = vld [vmem:[#allocation7 + $0x55c] sm:$0xf]
    %v5944 = vld [vmem:[#allocation7 + $0x5b8] sm:$0xf]
    %v5945 = vld [vmem:[#allocation7 + $0x614] sm:$0xf]
    %v5946 = vld [vmem:[#allocation7 + $0x670] sm:$0xf]
    %v5947 = vld [vmem:[#allocation7 + $0x6cc] sm:$0xf]
    %v5948 = vld [vmem:[#allocation7 + $0x728] sm:$0xf]
    %v5949 = vld [vmem:[#allocation7 + $0x784] sm:$0xf]
    %v5950 = vld [vmem:[#allocation7 + $0x7e0] sm:$0xf]
    %v5951 = vld [vmem:[#allocation7 + $0x83c] sm:$0xf]
    %v5952 = vld [vmem:[#allocation7 + $0x898] sm:$0xf]
    %v5953 = vld [vmem:[#allocation7 + $0x8f4] sm:$0xf]
    %v5954 = vld [vmem:[#allocation7 + $0x950] sm:$0xf]
    %v5955 = vld [vmem:[#allocation7 + $0x9ac] sm:$0xf]
    %v5956 = vld [vmem:[#allocation7 + $0xa08] sm:$0xf]
    %v5957 = vld [vmem:[#allocation7 + $0xa64] sm:$0xf]
    %v5958 = vld [vmem:[#allocation7 + $0xac0] sm:$0xf]
    %v5959 = vld [vmem:[#allocation7 + $0xb1c] sm:$0xf]
    %v5960 = vld [vmem:[#allocation7 + $0xb78] sm:$0xf]
    %v5961 = vld [vmem:[#allocation10 + $0x17] sm:$0x1]
    %v5963 = vlaneseq
    %v5964 = vshrl.u32 %v5963, 7
    %v5965 = vsub.s32 0, %v5964
    %v5966 = vrot.slane %v5961, %v5965
    %v6000 = vunpack.c.l.b16 %v5929
    %v6001 = vunpack.c.l.b16 %v5930
    %v6002 = vunpack.c.l.b16 %v5931
    %v6003 = vunpack.c.l.b16 %v5932
    %v6004 = vunpack.c.l.b16 %v5933
    %v6005 = vunpack.c.l.b16 %v5934
    %v6006 = vunpack.c.l.b16 %v5935
    %v6007 = vunpack.c.l.b16 %v5936
    %v6008 = vunpack.c.l.b16 %v5937
    %v6009 = vunpack.c.l.b16 %v5938
    %v6010 = vunpack.c.l.b16 %v5939
    %v6011 = vunpack.c.l.b16 %v5940
    %v6012 = vunpack.c.l.b16 %v5941
    %v6013 = vunpack.c.l.b16 %v5942
    %v6014 = vunpack.c.l.b16 %v5943
    %v6015 = vunpack.c.l.b16 %v5944
    %v6016 = vunpack.c.l.b16 %v5945
    %v6017 = vunpack.c.l.b16 %v5946
    %v6018 = vunpack.c.l.b16 %v5947
    %v6019 = vunpack.c.l.b16 %v5948
    %v6020 = vunpack.c.l.b16 %v5949
    %v6021 = vunpack.c.l.b16 %v5950
    %v6022 = vunpack.c.l.b16 %v5951
    %v6023 = vunpack.c.l.b16 %v5952
    %v6024 = vunpack.c.l.b16 %v5953
    %v6025 = vunpack.c.l.b16 %v5954
    %v6026 = vunpack.c.l.b16 %v5955
    %v6027 = vunpack.c.l.b16 %v5956
    %v6028 = vunpack.c.l.b16 %v5957
    %v6029 = vunpack.c.l.b16 %v5958
    %v6030 = vunpack.c.l.b16 %v5959
    %v6031 = vunpack.c.l.b16 %v5960
    %v6032 = vpack.c.b16 %v6001, %v6000
    %v6033 = vpack.c.b16 %v6003, %v6002
    %v6034 = vpack.c.b16 %v6005, %v6004
    %v6035 = vpack.c.b16 %v6007, %v6006
    %v6036 = vpack.c.b16 %v6009, %v6008
    %v6037 = vpack.c.b16 %v6011, %v6010
    %v6038 = vpack.c.b16 %v6013, %v6012
    %v6039 = vpack.c.b16 %v6015, %v6014
    %v6040 = vpack.c.b16 %v6017, %v6016
    %v6041 = vpack.c.b16 %v6019, %v6018
    %v6042 = vpack.c.b16 %v6021, %v6020
    %v6043 = vpack.c.b16 %v6023, %v6022
    %v6044 = vpack.c.b16 %v6025, %v6024
    %v6045 = vpack.c.b16 %v6027, %v6026
    %v6046 = vpack.c.b16 %v6029, %v6028
    %v6047 = vpack.c.b16 %v6031, %v6030
    %6064 = vmatprep.subr.bf16.mxu0 0
    %6065 = vmatpush1.bf16.msra.mxu0 %v6032
    %6066 = vmatprep.subr.bf16.mxu0 0
    %6067 = vmatpush1.bf16.msra.mxu0 %v6033
    %6068 = vmatprep.subr.bf16.mxu0 0
    %6069 = vmatpush1.bf16.msra.mxu0 %v6034
    %6070 = vmatprep.subr.bf16.mxu0 0
    %6071 = vmatpush1.bf16.msra.mxu0 %v6035
    %6072 = vmatprep.subr.bf16.mxu0 0
    %6073 = vmatpush1.bf16.msra.mxu0 %v6036
    %6074 = vmatprep.subr.bf16.mxu0 0
    %6075 = vmatpush1.bf16.msra.mxu0 %v6037
    %6076 = vmatprep.subr.bf16.mxu0 0
    %6077 = vmatpush1.bf16.msra.mxu0 %v6038
    %6078 = vmatprep.subr.bf16.mxu0 0
    %6079 = vmatpush1.bf16.msra.mxu0 %v6039
    %6080 = vmatprep.subr.bf16.mxu0 0
    %6081 = vmatpush1.bf16.msra.mxu0 %v6040
    %6082 = vmatprep.subr.bf16.mxu0 0
    %6083 = vmatpush1.bf16.msra.mxu0 %v6041
    %6084 = vmatprep.subr.bf16.mxu0 0
    %6085 = vmatpush1.bf16.msra.mxu0 %v6042
    %6086 = vmatprep.subr.bf16.mxu0 0
    %6087 = vmatpush1.bf16.msra.mxu0 %v6043
    %6088 = vmatprep.subr.bf16.mxu0 0
    %6089 = vmatpush1.bf16.msra.mxu0 %v6044
    %6090 = vmatprep.subr.bf16.mxu0 0
    %6091 = vmatpush1.bf16.msra.mxu0 %v6045
    %6092 = vmatprep.subr.bf16.mxu0 0
    %6093 = vmatpush1.bf16.msra.mxu0 %v6046
    %6094 = vmatprep.subr.bf16.mxu0 0
    %6095 = vmatpush1.bf16.msra.mxu0 %v6047
    %6096 = vmatprep.mubr.bf16.mxu0 %v5914
    %6097 = vmatmul.mubr.bf16.gmra.mrb[0].mxu0 %v5913
    %v6098 = vpop.f32.mrb[0].mxu0
    %v6099 = vadd.f32 %v5966, %v6098
    %v6100 = vpop.f32.mrb[0].mxu0
    %v6101 = vpop.f32.mrb[0].mxu0
    %v6102 = vadd.f32 %v5966, %v6101
    %v6103 = vpop.f32.mrb[0].mxu0
    %6104 = vmatprep.mubr.bf16.mxu0 %v5916
    %6105 = vmatmul.mubr.bf16.gmra.mrb[0].mxu0 %v5915
    %v6106 = vpop.f32.mrb[0].mxu0
    %v6107 = vadd.f32 %v5966, %v6106
    %v6108 = vpop.f32.mrb[0].mxu0
    %v6109 = vpop.f32.mrb[0].mxu0
    %v6110 = vadd.f32 %v5966, %v6109
    %v6111 = vpop.f32.mrb[0].mxu0
    %6112 = vmatprep.mubr.bf16.mxu0 %v5918
    %6113 = vmatmul.mubr.bf16.gmra.mrb[0].mxu0 %v5917
    %v6114 = vpop.f32.mrb[0].mxu0
    %v6115 = vadd.f32 %v5966, %v6114
    %v6116 = vpop.f32.mrb[0].mxu0
    %v6117 = vpop.f32.mrb[0].mxu0
    %v6118 = vadd.f32 %v5966, %v6117
    %v6119 = vpop.f32.mrb[0].mxu0
    %6120 = vmatprep.mubr.bf16.mxu0 %v5920
    %6121 = vmatmul.mubr.bf16.gmra.mrb[0].mxu0 %v5919
    %v6122 = vpop.f32.mrb[0].mxu0
    %v6123 = vadd.f32 %v5966, %v6122
    %v6124 = vpop.f32.mrb[0].mxu0
    %v6125 = vpop.f32.mrb[0].mxu0
    %v6126 = vadd.f32 %v5966, %v6125
    %v6127 = vpop.f32.mrb[0].mxu0
    %6128 = vmatprep.mubr.bf16.mxu0 %v5922
    %6129 = vmatmul.mubr.bf16.gmra.mrb[0].mxu0 %v5921
    %v6130 = vpop.f32.mrb[0].mxu0
    %v6131 = vadd.f32 %v5966, %v6130
    %v6132 = vpop.f32.mrb[0].mxu0
    %v6133 = vpop.f32.mrb[0].mxu0
    %v6134 = vadd.f32 %v5966, %v6133
    %v6135 = vpop.f32.mrb[0].mxu0
    %6136 = vmatprep.mubr.bf16.mxu0 %v5924
    %6137 = vmatmul.mubr.bf16.gmra.mrb[0].mxu0 %v5923
    %v6138 = vpop.f32.mrb[0].mxu0
    %v6139 = vadd.f32 %v5966, %v6138
    %v6140 = vpop.f32.mrb[0].mxu0
    %v6141 = vpop.f32.mrb[0].mxu0
    %v6142 = vadd.f32 %v5966, %v6141
    %v6143 = vpop.f32.mrb[0].mxu0
    %6144 = vmatprep.mubr.bf16.mxu0 %v5926
    %6145 = vmatmul.mubr.bf16.gmra.mrb[0].mxu0 %v5925
    %v6146 = vpop.f32.mrb[0].mxu0
    %v6147 = vadd.f32 %v5966, %v6146
    %v6148 = vpop.f32.mrb[0].mxu0
    %v6149 = vpop.f32.mrb[0].mxu0
    %v6150 = vadd.f32 %v5966, %v6149
    %v6151 = vpop.f32.mrb[0].mxu0
    %6152 = vmatprep.mubr.bf16.mxu0 %v5928
    %6153 = vmatmul.mubr.bf16.gmra.mrb[0].mxu0 %v5927
    %v6154 = vpop.f32.mrb[0].mxu0
    %v6155 = vadd.f32 %v5966, %v6154
    %v6156 = vpop.f32.mrb[0].mxu0
    %v6157 = vpop.f32.mrb[0].mxu0
    %v6158 = vadd.f32 %v5966, %v6157
    %v6159 = vpop.f32.mrb[0].mxu0
    %6160 = vdwg.mxu0
    %v6161 = vmax.f32 %v6099, 0.0
    %v6162 = vmax.f32 %v6102, 0.0
    %v6163 = vmax.f32 %v6107, 0.0
    %v6164 = vmax.f32 %v6110, 0.0
    %v6165 = vmax.f32 %v6115, 0.0
    %v6166 = vmax.f32 %v6118, 0.0
    %v6167 = vmax.f32 %v6123, 0.0
    %v6168 = vmax.f32 %v6126, 0.0
    %v6169 = vmax.f32 %v6131, 0.0
    %v6170 = vmax.f32 %v6134, 0.0
    %v6171 = vmax.f32 %v6139, 0.0
    %v6172 = vmax.f32 %v6142, 0.0
    %v6173 = vmax.f32 %v6147, 0.0
    %v6174 = vmax.f32 %v6150, 0.0
    %v6175 = vmax.f32 %v6155, 0.0
    %v6176 = vmax.f32 %v6158, 0.0
    %v6177 = vpack.c.bf16 %v6162, %v6161
    %v6178 = vpack.c.bf16 %v6164, %v6163
    %v6179 = vpack.c.bf16 %v6166, %v6165
    %v6180 = vpack.c.bf16 %v6168, %v6167
    %v6181 = vpack.c.bf16 %v6170, %v6169
    %v6182 = vpack.c.bf16 %v6172, %v6171
    %v6183 = vpack.c.bf16 %v6174, %v6173
    %v6184 = vpack.c.bf16 %v6176, %v6175
    %v6185 = vld [vmem:[#allocation7 + $0x58] sm:$0xf]
    %v6186 = vld [vmem:[#allocation7 + $0xb4] sm:$0xf]
    %v6187 = vld [vmem:[#allocation7 + $0x110] sm:$0xf]
    %v6188 = vld [vmem:[#allocation7 + $0x16c] sm:$0xf]
    %v6189 = vld [vmem:[#allocation7 + $0x1c8] sm:$0xf]
    %v6190 = vld [vmem:[#allocation7 + $0x224] sm:$0xf]
    %v6191 = vld [vmem:[#allocation7 + $0x280] sm:$0xf]
    %v6192 = vld [vmem:[#allocation7 + $0x2dc] sm:$0xf]
    %v6193 = vld [vmem:[#allocation7 + $0x338] sm:$0xf]
    %v6194 = vld [vmem:[#allocation7 + $0x394] sm:$0xf]
    %v6195 = vld [vmem:[#allocation7 + $0x3f0] sm:$0xf]
    %v6196 = vld [vmem:[#allocation7 + $0x44c] sm:$0xf]
    %v6197 = vld [vmem:[#allocation7 + $0x4a8] sm:$0xf]
    %v6198 = vld [vmem:[#allocation7 + $0x504] sm:$0xf]
    %v6199 = vld [vmem:[#allocation7 + $0x560] sm:$0xf]
    %v6200 = vld [vmem:[#allocation7 + $0x5bc] sm:$0xf]
    %v6201 = vld [vmem:[#allocation7 + $0x618] sm:$0xf]
    %v6202 = vld [vmem:[#allocation7 + $0x674] sm:$0xf]
    %v6203 = vld [vmem:[#allocation7 + $0x6d0] sm:$0xf]
    %v6204 = vld [vmem:[#allocation7 + $0x72c] sm:$0xf]
    %v6205 = vld [vmem:[#allocation7 + $0x788] sm:$0xf]
    %v6206 = vld [vmem:[#allocation7 + $0x7e4] sm:$0xf]
    %v6207 = vld [vmem:[#allocation7 + $0x840] sm:$0xf]
    %v6208 = vld [vmem:[#allocation7 + $0x89c] sm:$0xf]
    %v6209 = vld [vmem:[#allocation7 + $0x8f8] sm:$0xf]
    %v6210 = vld [vmem:[#allocation7 + $0x954] sm:$0xf]
    %v6211 = vld [vmem:[#allocation7 + $0x9b0] sm:$0xf]
    %v6212 = vld [vmem:[#allocation7 + $0xa0c] sm:$0xf]
    %v6213 = vld [vmem:[#allocation7 + $0xa68] sm:$0xf]
    %v6214 = vld [vmem:[#allocation7 + $0xac4] sm:$0xf]
    %v6215 = vld [vmem:[#allocation7 + $0xb20] sm:$0xf]
    %v6216 = vld [vmem:[#allocation7 + $0xb7c] sm:$0xf]
    %v6217 = vld [vmem:[#allocation10 + $0x18] sm:$0x1]
    %v6219 = vlaneseq
    %v6220 = vshrl.u32 %v6219, 7
    %v6221 = vsub.s32 0, %v6220
    %v6222 = vrot.slane %v6217, %v6221
    %v6256 = vunpack.c.l.b16 %v6185
    %v6257 = vunpack.c.l.b16 %v6186
    %v6258 = vunpack.c.l.b16 %v6187
    %v6259 = vunpack.c.l.b16 %v6188
    %v6260 = vunpack.c.l.b16 %v6189
    %v6261 = vunpack.c.l.b16 %v6190
    %v6262 = vunpack.c.l.b16 %v6191
    %v6263 = vunpack.c.l.b16 %v6192
    %v6264 = vunpack.c.l.b16 %v6193
    %v6265 = vunpack.c.l.b16 %v6194
    %v6266 = vunpack.c.l.b16 %v6195
    %v6267 = vunpack.c.l.b16 %v6196
    %v6268 = vunpack.c.l.b16 %v6197
    %v6269 = vunpack.c.l.b16 %v6198
    %v6270 = vunpack.c.l.b16 %v6199
    %v6271 = vunpack.c.l.b16 %v6200
    %v6272 = vunpack.c.l.b16 %v6201
    %v6273 = vunpack.c.l.b16 %v6202
    %v6274 = vunpack.c.l.b16 %v6203
    %v6275 = vunpack.c.l.b16 %v6204
    %v6276 = vunpack.c.l.b16 %v6205
    %v6277 = vunpack.c.l.b16 %v6206
    %v6278 = vunpack.c.l.b16 %v6207
    %v6279 = vunpack.c.l.b16 %v6208
    %v6280 = vunpack.c.l.b16 %v6209
    %v6281 = vunpack.c.l.b16 %v6210
    %v6282 = vunpack.c.l.b16 %v6211
    %v6283 = vunpack.c.l.b16 %v6212
    %v6284 = vunpack.c.l.b16 %v6213
    %v6285 = vunpack.c.l.b16 %v6214
    %v6286 = vunpack.c.l.b16 %v6215
    %v6287 = vunpack.c.l.b16 %v6216
    %v6288 = vpack.c.b16 %v6257, %v6256
    %v6289 = vpack.c.b16 %v6259, %v6258
    %v6290 = vpack.c.b16 %v6261, %v6260
    %v6291 = vpack.c.b16 %v6263, %v6262
    %v6292 = vpack.c.b16 %v6265, %v6264
    %v6293 = vpack.c.b16 %v6267, %v6266
    %v6294 = vpack.c.b16 %v6269, %v6268
    %v6295 = vpack.c.b16 %v6271, %v6270
    %v6296 = vpack.c.b16 %v6273, %v6272
    %v6297 = vpack.c.b16 %v6275, %v6274
    %v6298 = vpack.c.b16 %v6277, %v6276
    %v6299 = vpack.c.b16 %v6279, %v6278
    %v6300 = vpack.c.b16 %v6281, %v6280
    %v6301 = vpack.c.b16 %v6283, %v6282
    %v6302 = vpack.c.b16 %v6285, %v6284
    %v6303 = vpack.c.b16 %v6287, %v6286
    %6320 = vmatprep.subr.bf16.mxu0 0
    %6321 = vmatpush1.bf16.msra.mxu0 %v6288
    %6322 = vmatprep.subr.bf16.mxu0 0
    %6323 = vmatpush1.bf16.msra.mxu0 %v6289
    %6324 = vmatprep.subr.bf16.mxu0 0
    %6325 = vmatpush1.bf16.msra.mxu0 %v6290
    %6326 = vmatprep.subr.bf16.mxu0 0
    %6327 = vmatpush1.bf16.msra.mxu0 %v6291
    %6328 = vmatprep.subr.bf16.mxu0 0
    %6329 = vmatpush1.bf16.msra.mxu0 %v6292
    %6330 = vmatprep.subr.bf16.mxu0 0
    %6331 = vmatpush1.bf16.msra.mxu0 %v6293
    %6332 = vmatprep.subr.bf16.mxu0 0
    %6333 = vmatpush1.bf16.msra.mxu0 %v6294
    %6334 = vmatprep.subr.bf16.mxu0 0
    %6335 = vmatpush1.bf16.msra.mxu0 %v6295
    %6336 = vmatprep.subr.bf16.mxu0 0
    %6337 = vmatpush1.bf16.msra.mxu0 %v6296
    %6338 = vmatprep.subr.bf16.mxu0 0
    %6339 = vmatpush1.bf16.msra.mxu0 %v6297
    %6340 = vmatprep.subr.bf16.mxu0 0
    %6341 = vmatpush1.bf16.msra.mxu0 %v6298
    %6342 = vmatprep.subr.bf16.mxu0 0
    %6343 = vmatpush1.bf16.msra.mxu0 %v6299
    %6344 = vmatprep.subr.bf16.mxu0 0
    %6345 = vmatpush1.bf16.msra.mxu0 %v6300
    %6346 = vmatprep.subr.bf16.mxu0 0
    %6347 = vmatpush1.bf16.msra.mxu0 %v6301
    %6348 = vmatprep.subr.bf16.mxu0 0
    %6349 = vmatpush1.bf16.msra.mxu0 %v6302
    %6350 = vmatprep.subr.bf16.mxu0 0
    %6351 = vmatpush1.bf16.msra.mxu0 %v6303
    %6352 = vmatprep.mubr.bf16.mxu0 %v6177
    %6353 = vmatmul.mubr.bf16.gmra.mrb[0].mxu0 %v5315
    %v6354 = vpop.f32.mrb[0].mxu0
    %v6355 = vadd.f32 %v6222, %v6354
    %v6356 = vpop.f32.mrb[0].mxu0
    %v6357 = vpop.f32.mrb[0].mxu0
    %v6358 = vadd.f32 %v6222, %v6357
    %v6359 = vpop.f32.mrb[0].mxu0
    %6360 = vmatprep.mubr.bf16.mxu0 %v6178
    %6361 = vmatmul.mubr.bf16.gmra.mrb[0].mxu0 %v5316
    %v6362 = vpop.f32.mrb[0].mxu0
    %v6363 = vadd.f32 %v6222, %v6362
    %v6364 = vpop.f32.mrb[0].mxu0
    %v6365 = vpop.f32.mrb[0].mxu0
    %v6366 = vadd.f32 %v6222, %v6365
    %v6367 = vpop.f32.mrb[0].mxu0
    %6368 = vmatprep.mubr.bf16.mxu0 %v6179
    %6369 = vmatmul.mubr.bf16.gmra.mrb[0].mxu0 %v5317
    %v6370 = vpop.f32.mrb[0].mxu0
    %v6371 = vadd.f32 %v6222, %v6370
    %v6372 = vpop.f32.mrb[0].mxu0
    %v6373 = vpop.f32.mrb[0].mxu0
    %v6374 = vadd.f32 %v6222, %v6373
    %v6375 = vpop.f32.mrb[0].mxu0
    %6376 = vmatprep.mubr.bf16.mxu0 %v6180
    %6377 = vmatmul.mubr.bf16.gmra.mrb[0].mxu0 %v5318
    %v6378 = vpop.f32.mrb[0].mxu0
    %v6379 = vadd.f32 %v6222, %v6378
    %v6380 = vpop.f32.mrb[0].mxu0
    %v6381 = vpop.f32.mrb[0].mxu0
    %v6382 = vadd.f32 %v6222, %v6381
    %v6383 = vpop.f32.mrb[0].mxu0
    %6384 = vmatprep.mubr.bf16.mxu0 %v6181
    %6385 = vmatmul.mubr.bf16.gmra.mrb[0].mxu0 %v5319
    %v6386 = vpop.f32.mrb[0].mxu0
    %v6387 = vadd.f32 %v6222, %v6386
    %v6388 = vpop.f32.mrb[0].mxu0
    %v6389 = vpop.f32.mrb[0].mxu0
    %v6390 = vadd.f32 %v6222, %v6389
    %v6391 = vpop.f32.mrb[0].mxu0
    %6392 = vmatprep.mubr.bf16.mxu0 %v6182
    %6393 = vmatmul.mubr.bf16.gmra.mrb[0].mxu0 %v5320
    %v6394 = vpop.f32.mrb[0].mxu0
    %v6395 = vadd.f32 %v6222, %v6394
    %v6396 = vpop.f32.mrb[0].mxu0
    %v6397 = vpop.f32.mrb[0].mxu0
    %v6398 = vadd.f32 %v6222, %v6397
    %v6399 = vpop.f32.mrb[0].mxu0
    %6400 = vmatprep.mubr.bf16.mxu0 %v6183
    %6401 = vmatmul.mubr.bf16.gmra.mrb[0].mxu0 %v5321
    %v6402 = vpop.f32.mrb[0].mxu0
    %v6403 = vadd.f32 %v6222, %v6402
    %v6404 = vpop.f32.mrb[0].mxu0
    %v6405 = vpop.f32.mrb[0].mxu0
    %v6406 = vadd.f32 %v6222, %v6405
    %v6407 = vpop.f32.mrb[0].mxu0
    %6408 = vmatprep.mubr.bf16.mxu0 %v6184
    %6409 = vmatmul.mubr.bf16.gmra.mrb[0].mxu0 %v5322
    %v6410 = vpop.f32.mrb[0].mxu0
    %v6411 = vadd.f32 %v6222, %v6410
    %v6412 = vpop.f32.mrb[0].mxu0
    %v6413 = vpop.f32.mrb[0].mxu0
    %v6414 = vadd.f32 %v6222, %v6413
    %v6415 = vpop.f32.mrb[0].mxu0
    %6416 = vdwg.mxu0
    %v6417 = vmax.f32 %v6355, 0.0
    %v6418 = vmax.f32 %v6358, 0.0
    %v6419 = vmax.f32 %v6363, 0.0
    %v6420 = vmax.f32 %v6366, 0.0
    %v6421 = vmax.f32 %v6371, 0.0
    %v6422 = vmax.f32 %v6374, 0.0
    %v6423 = vmax.f32 %v6379, 0.0
    %v6424 = vmax.f32 %v6382, 0.0
    %v6425 = vmax.f32 %v6387, 0.0
    %v6426 = vmax.f32 %v6390, 0.0
    %v6427 = vmax.f32 %v6395, 0.0
    %v6428 = vmax.f32 %v6398, 0.0
    %v6429 = vmax.f32 %v6403, 0.0
    %v6430 = vmax.f32 %v6406, 0.0
    %v6431 = vmax.f32 %v6411, 0.0
    %v6432 = vmax.f32 %v6414, 0.0
    %v6433 = vpack.c.bf16 %v6418, %v6417
    %v6434 = vpack.c.bf16 %v6420, %v6419
    %v6435 = vpack.c.bf16 %v6422, %v6421
    %v6436 = vpack.c.bf16 %v6424, %v6423
    %v6437 = vpack.c.bf16 %v6426, %v6425
    %v6438 = vpack.c.bf16 %v6428, %v6427
    %v6439 = vpack.c.bf16 %v6430, %v6429
    %v6440 = vpack.c.bf16 %v6432, %v6431
    %v6441 = vld [vmem:[#allocation5 + $0xc] sm:$0xf]
    %v6442 = vld [vmem:[#allocation5 + $0x1c] sm:$0xf]
    %v6443 = vld [vmem:[#allocation5 + $0x2c] sm:$0xf]
    %v6444 = vld [vmem:[#allocation5 + $0x3c] sm:$0xf]
    %v6445 = vld [vmem:[#allocation5 + $0x4c] sm:$0xf]
    %v6446 = vld [vmem:[#allocation5 + $0x5c] sm:$0xf]
    %v6447 = vld [vmem:[#allocation5 + $0x6c] sm:$0xf]
    %v6448 = vld [vmem:[#allocation5 + $0x7c] sm:$0xf]
    %v6449 = vld [vmem:[#allocation5 + $0x8c] sm:$0xf]
    %v6450 = vld [vmem:[#allocation5 + $0x9c] sm:$0xf]
    %v6451 = vld [vmem:[#allocation5 + $0xac] sm:$0xf]
    %v6452 = vld [vmem:[#allocation5 + $0xbc] sm:$0xf]
    %v6453 = vld [vmem:[#allocation5 + $0xcc] sm:$0xf]
    %v6454 = vld [vmem:[#allocation5 + $0xdc] sm:$0xf]
    %v6455 = vld [vmem:[#allocation5 + $0xec] sm:$0xf]
    %v6456 = vld [vmem:[#allocation5 + $0xfc] sm:$0xf]
    %v6457 = vld [vmem:[#allocation10 + $0x19] sm:$0x1]
    %v6459 = vlaneseq
    %v6460 = vshrl.u32 %v6459, 7
    %v6461 = vsub.s32 0, %v6460
    %v6462 = vrot.slane %v6457, %v6461
    %v6480 = vunpack.c.l.b16 %v6441
    %v6481 = vunpack.c.l.b16 %v6442
    %v6482 = vunpack.c.l.b16 %v6443
    %v6483 = vunpack.c.l.b16 %v6444
    %v6484 = vunpack.c.l.b16 %v6445
    %v6485 = vunpack.c.l.b16 %v6446
    %v6486 = vunpack.c.l.b16 %v6447
    %v6487 = vunpack.c.l.b16 %v6448
    %v6488 = vunpack.c.l.b16 %v6449
    %v6489 = vunpack.c.l.b16 %v6450
    %v6490 = vunpack.c.l.b16 %v6451
    %v6491 = vunpack.c.l.b16 %v6452
    %v6492 = vunpack.c.l.b16 %v6453
    %v6493 = vunpack.c.l.b16 %v6454
    %v6494 = vunpack.c.l.b16 %v6455
    %v6495 = vunpack.c.l.b16 %v6456
    %v6496 = vpack.c.b16 %v6481, %v6480
    %v6497 = vpack.c.b16 %v6483, %v6482
    %v6498 = vpack.c.b16 %v6485, %v6484
    %v6499 = vpack.c.b16 %v6487, %v6486
    %v6500 = vpack.c.b16 %v6489, %v6488
    %v6501 = vpack.c.b16 %v6491, %v6490
    %v6502 = vpack.c.b16 %v6493, %v6492
    %v6503 = vpack.c.b16 %v6495, %v6494
    %6512 = vmatprep.subr.bf16.mxu0 0
    %6513 = vmatpush1.bf16.msra.mxu0 %v6496
    %6514 = vmatprep.subr.bf16.mxu0 0
    %6515 = vmatpush1.bf16.msra.mxu0 %v6497
    %6516 = vmatprep.subr.bf16.mxu0 0
    %6517 = vmatpush1.bf16.msra.mxu0 %v6498
    %6518 = vmatprep.subr.bf16.mxu0 0
    %6519 = vmatpush1.bf16.msra.mxu0 %v6499
    %6520 = vmatprep.subr.bf16.mxu0 0
    %6521 = vmatpush1.bf16.msra.mxu0 %v6500
    %6522 = vmatprep.subr.bf16.mxu0 0
    %6523 = vmatpush1.bf16.msra.mxu0 %v6501
    %6524 = vmatprep.subr.bf16.mxu0 0
    %6525 = vmatpush1.bf16.msra.mxu0 %v6502
    %6526 = vmatprep.subr.bf16.mxu0 0
    %6527 = vmatpush1.bf16.msra.mxu0 %v6503
    %6528 = vmatprep.subr.bf16.mxu0 0
    %6529 = vmatpush1.bf16.msra.mxu0 0
    %6530 = vmatprep.subr.bf16.mxu0 0
    %6531 = vmatpush1.bf16.msra.mxu0 0
    %6532 = vmatprep.subr.bf16.mxu0 0
    %6533 = vmatpush1.bf16.msra.mxu0 0
    %6534 = vmatprep.subr.bf16.mxu0 0
    %6535 = vmatpush1.bf16.msra.mxu0 0
    %6536 = vmatprep.subr.bf16.mxu0 0
    %6537 = vmatpush1.bf16.msra.mxu0 0
    %6538 = vmatprep.subr.bf16.mxu0 0
    %6539 = vmatpush1.bf16.msra.mxu0 0
    %6540 = vmatprep.subr.bf16.mxu0 0
    %6541 = vmatpush1.bf16.msra.mxu0 0
    %6542 = vmatprep.subr.bf16.mxu0 0
    %6543 = vmatpush1.bf16.msra.mxu0 0
    %6544 = vmatprep.mubr.bf16.mxu0 0
    %6545 = vmatmul.mubr.bf16.gmra.mrb[0].mxu0 %v6433
    %v6546 = vpop.f32.mrb[0].mxu0
    %v6547 = vadd.f32 %v6462, %v6546
    %v6548 = vpop.f32.mrb[0].mxu0
    %v6549 = vpop.f32.mrb[0].mxu0
    %v6550 = vadd.f32 %v6462, %v6549
    %v6551 = vpop.f32.mrb[0].mxu0
    %6552 = vmatprep.mubr.bf16.mxu0 0
    %6553 = vmatmul.mubr.bf16.gmra.mrb[0].mxu0 %v6434
    %v6554 = vpop.f32.mrb[0].mxu0
    %v6555 = vadd.f32 %v6462, %v6554
    %v6556 = vpop.f32.mrb[0].mxu0
    %v6557 = vpop.f32.mrb[0].mxu0
    %v6558 = vadd.f32 %v6462, %v6557
    %v6559 = vpop.f32.mrb[0].mxu0
    %6560 = vmatprep.mubr.bf16.mxu0 0
    %6561 = vmatmul.mubr.bf16.gmra.mrb[0].mxu0 %v6435
    %v6562 = vpop.f32.mrb[0].mxu0
    %v6563 = vadd.f32 %v6462, %v6562
    %v6564 = vpop.f32.mrb[0].mxu0
    %v6565 = vpop.f32.mrb[0].mxu0
    %v6566 = vadd.f32 %v6462, %v6565
    %v6567 = vpop.f32.mrb[0].mxu0
    %6568 = vmatprep.mubr.bf16.mxu0 0
    %6569 = vmatmul.mubr.bf16.gmra.mrb[0].mxu0 %v6436
    %v6570 = vpop.f32.mrb[0].mxu0
    %v6571 = vadd.f32 %v6462, %v6570
    %v6572 = vpop.f32.mrb[0].mxu0
    %v6573 = vpop.f32.mrb[0].mxu0
    %v6574 = vadd.f32 %v6462, %v6573
    %v6575 = vpop.f32.mrb[0].mxu0
    %6576 = vmatprep.mubr.bf16.mxu0 0
    %6577 = vmatmul.mubr.bf16.gmra.mrb[0].mxu0 %v6437
    %v6578 = vpop.f32.mrb[0].mxu0
    %v6579 = vadd.f32 %v6462, %v6578
    %v6580 = vpop.f32.mrb[0].mxu0
    %v6581 = vpop.f32.mrb[0].mxu0
    %v6582 = vadd.f32 %v6462, %v6581
    %v6583 = vpop.f32.mrb[0].mxu0
    %6584 = vmatprep.mubr.bf16.mxu0 0
    %6585 = vmatmul.mubr.bf16.gmra.mrb[0].mxu0 %v6438
    %v6586 = vpop.f32.mrb[0].mxu0
    %v6587 = vadd.f32 %v6462, %v6586
    %v6588 = vpop.f32.mrb[0].mxu0
    %v6589 = vpop.f32.mrb[0].mxu0
    %v6590 = vadd.f32 %v6462, %v6589
    %v6591 = vpop.f32.mrb[0].mxu0
    %6592 = vmatprep.mubr.bf16.mxu0 0
    %6593 = vmatmul.mubr.bf16.gmra.mrb[0].mxu0 %v6439
    %v6594 = vpop.f32.mrb[0].mxu0
    %v6595 = vadd.f32 %v6462, %v6594
    %v6596 = vpop.f32.mrb[0].mxu0
    %v6597 = vpop.f32.mrb[0].mxu0
    %v6598 = vadd.f32 %v6462, %v6597
    %v6599 = vpop.f32.mrb[0].mxu0
    %6600 = vmatprep.mubr.bf16.mxu0 0
    %6601 = vmatmul.mubr.bf16.gmra.mrb[0].mxu0 %v6440
    %v6602 = vpop.f32.mrb[0].mxu0
    %v6603 = vadd.f32 %v6462, %v6602
    %v6604 = vpop.f32.mrb[0].mxu0
    %v6605 = vpop.f32.mrb[0].mxu0
    %v6606 = vadd.f32 %v6462, %v6605
    %v6607 = vpop.f32.mrb[0].mxu0
    %6608 = vdwg.mxu0
    %v6609 = vmax.f32 %v6547, 0.0
    %v6610 = vmax.f32 %v6550, 0.0
    %v6611 = vmax.f32 %v6555, 0.0
    %v6612 = vmax.f32 %v6558, 0.0
    %v6613 = vmax.f32 %v6563, 0.0
    %v6614 = vmax.f32 %v6566, 0.0
    %v6615 = vmax.f32 %v6571, 0.0
    %v6616 = vmax.f32 %v6574, 0.0
    %v6617 = vmax.f32 %v6579, 0.0
    %v6618 = vmax.f32 %v6582, 0.0
    %v6619 = vmax.f32 %v6587, 0.0
    %v6620 = vmax.f32 %v6590, 0.0
    %v6621 = vmax.f32 %v6595, 0.0
    %v6622 = vmax.f32 %v6598, 0.0
    %v6623 = vmax.f32 %v6603, 0.0
    %v6624 = vmax.f32 %v6606, 0.0
    %6625 = vst [vmem:[#allocation11] sm:$0xff] %v6609
    %6626 = vst [vmem:[#allocation11 + $0x8] sm:$0xff] %v6610
    %6627 = vst [vmem:[#allocation11 + $0x10] sm:$0xff] %v6611
    %6628 = vst [vmem:[#allocation11 + $0x18] sm:$0xff] %v6612
    %6629 = vst [vmem:[#allocation11 + $0x20] sm:$0xff] %v6613
    %6630 = vst [vmem:[#allocation11 + $0x28] sm:$0xff] %v6614
    %6631 = vst [vmem:[#allocation11 + $0x30] sm:$0xff] %v6615
    %6632 = vst [vmem:[#allocation11 + $0x38] sm:$0xff] %v6616
    %6633 = vst [vmem:[#allocation11 + $0x40] sm:$0xff] %v6617
    %6634 = vst [vmem:[#allocation11 + $0x48] sm:$0xff] %v6618
    %6635 = vst [vmem:[#allocation11 + $0x50] sm:$0xff] %v6619
    %6636 = vst [vmem:[#allocation11 + $0x58] sm:$0xff] %v6620
    %6637 = vst [vmem:[#allocation11 + $0x60] sm:$0xff] %v6621
    %6638 = vst [vmem:[#allocation11 + $0x68] sm:$0xff] %v6622
    %6639 = vst [vmem:[#allocation11 + $0x70] sm:$0xff] %v6623
    %6640 = vst [vmem:[#allocation11 + $0x78] sm:$0xff] %v6624
    // Predicated region
    $region42: #{tpu_custom_call.1} parent=1 // pred_check
      _
    $region43: #{tpu_custom_call.1} parent=1 // pred_check_branch
      %6642 = sbr.rel (0) target = $region45
    $region44: #{tpu_custom_call.1} parent=1 // pred_region
      %s6644 = ssub.s32 2048, 2048
      %6645 = vsyncadd [#allocation4], %s6644
      %s6646 = sshll.u32 [#allocation11], 4
      %s6647 = int_to_ptr.vmem [resolvable:$true] %s6646
      %6652 = dma.vmem_to_hbm [thread:$0]  %s6647, 2048, %s5, [#allocation4], 128, 128, 8
    $region45: #{tpu_custom_call.1} parent=1 // pred_fallthru
      _
    // Predicated region
    $region46: #{tpu_custom_call.1} parent=1 // pred_check
      _
    $region47: #{tpu_custom_call.1} parent=1 // pred_check_branch
      %6654 = sbr.rel (0) target = $region49
    $region48: #{tpu_custom_call.1} parent=1 // pred_region
      %6655 = dma.done [#allocation4], 2048
    $region49: #{tpu_custom_call.1} parent=1 // pred_fallthru
      _
    %6656 = vsyncpa [#allocation3], 1
    %6657 = vsyncpa [#allocation6], 1
    %6658 = vsyncpa [#allocation9], 1
    %6659 = vsyncpa [#allocation4], 1

</llo_original>
